<compile_context>
chip_gen: v7x
topology: tpu7x:2x2x1
jax: 0.10.0
libtpu: 0.0.40
codegen_flags: <defaults>
</compile_context>

<pallas_src>
import jax
import jax.numpy as jnp
import numpy as np
from jax import lax
from jax.experimental import pallas as pl
from jax.experimental.pallas import tpu as pltpu


# ---------------------------------------------------------------------------
# Fused kernel: per-chunk input projection -> serial recurrence (in-VMEM
# carry) -> per-chunk decoder.  Grid iterates over time chunks ("arbitrary").
# ---------------------------------------------------------------------------
def _make_recurrent_kernel(H, B, chunk, seq, needs_mask):
    def kernel(emb_ref, wx_ref, bx_ref, wha_ref, whh_ref, waoT_ref, bao_ref,
               bhh_ref, wdec_ref, bdec_ref,
               dec_ref, h1_ref,
               h_s, xp_s, hs_s):
        c = pl.program_id(0)
        ninp = emb_ref.shape[-1]
        ntoken = dec_ref.shape[-1]

        @pl.when(c == 0)
        def _():
            # PyTorch passes hidden=None on the first step -> zero init.
            h_s[...] = jnp.zeros_like(h_s)

        # ---- per-chunk prologue: fused input projection (one MXU pass) ----
        emb2d = emb_ref[...].reshape(chunk * B, ninp)
        xp = (jnp.dot(emb2d, wx_ref[...], preferred_element_type=jnp.float32)
              + bx_ref[...])
        xp_s[...] = xp.reshape(chunk, B, 2 * H)

        # ---- hoist loop-invariant loads / broadcasts off the serial chain ----
        wha = wha_ref[...]
        whh = whh_ref[...]
        waoT = waoT_ref[...]
        bao_b = jnp.broadcast_to(bao_ref[...], (B, 2 * H))
        bhh_b = jnp.broadcast_to(bhh_ref[...], (B, H))

        h0_i = h_s[:, :H]
        h1_i = h_s[:, H:]

        def step(t, carry):
            h0, h1 = carry
            xp_t = xp_s[t]                      # (B, 2H): [x@Wxa+ba | x@Wxh+bxh]
            xa_t = xp_t[:, :H]
            xh_t = xp_t[:, H:]

            # Two independent 128-wide recurrent matmuls (v5e-friendly,
            # neutral on v6e/v7x); rec_h is off the critical path.
            rec_a = jnp.dot(h0, wha, preferred_element_type=jnp.float32)
            rec_h = jnp.dot(h1, whh, preferred_element_type=jnp.float32)

            # adapt_module: new adapter state + lane-replicated gains.
            h0_new = jnp.tanh(xa_t + rec_a)
            gains = jax.nn.sigmoid(
                jnp.dot(h0_new, waoT, preferred_element_type=jnp.float32)
                + bao_b)                         # (B, 2H), already lane-broadcast

            # gamma_rnn
            h1_new = jnp.tanh(gains[:, :H] * xh_t
                              + gains[:, H:] * (rec_h + bhh_b))

            if needs_mask:
                valid = (c * chunk + t) < seq
                h0_new = jnp.where(valid, h0_new, h0)
                h1_new = jnp.where(valid, h1_new, h1)

            hs_s[t] = h1_new
            return (h0_new, h1_new)

        unroll = True if chunk <= 16 else 8
        h0_f, h1_f = lax.fori_loop(0, chunk, step, (h0_i, h1_i), unroll=unroll)

        # Carry the hidden state across time chunks (single VMEM buffer).
        h_s[:, :H] = h0_f
        h_s[:, H:] = h1_f

        # ---- per-chunk epilogue: fused decoder (one MXU pass) ----
        hs2d = hs_s[...].reshape(chunk * B, H)
        dec = (jnp.dot(hs2d, wdec_ref[...], preferred_element_type=jnp.float32)
               + bdec_ref[...])
        dec_ref[...] = dec.reshape(chunk, B, ntoken)

        # Final hidden state: written exactly once, on the last chunk.
        @pl.when(c == pl.num_programs(0) - 1)
        def _():
            h1_ref[...] = h1_f

    return kernel


def _pick_time_chunk(seq, max_chunk=128):
    """Largest divisor of seq <= max_chunk; if only tiny divisors exist,
    pad the time axis instead of degrading to chunk=1."""
    best = 1
    for c in range(min(seq, max_chunk), 0, -1):
        if seq % c == 0:
            best = c
            break
    if best == seq or best >= 16:
        return best, seq
    chunk = min(seq, max_chunk)
    padded = ((seq + chunk - 1) // chunk) * chunk
    return chunk, padded


# ---------------------------------------------------------------------------
# Full forward pass.
# ---------------------------------------------------------------------------
def rnn_forward(token_ids, params):
    """Returns (decoded [seq, B, ntoken], h1 [B, H])."""
    seq, B = token_ids.shape
    # Embedding gather kept as plain-JAX glue.
    # TODO(synk): could be fused via scalar-prefetched token_ids + pl.Element
    # row-gather BlockSpec to save one HBM round trip of `emb`.
    emb = params["embedding"][token_ids].astype(jnp.float32)   # (seq, B, ninp)
    ninp = emb.shape[-1]
    H = params["wxh"].shape[1]
    ntoken = params["wdec"].shape[1]

    chunk, padded_seq = _pick_time_chunk(seq)
    needs_mask = padded_seq != seq
    if needs_mask:
        emb = jnp.pad(emb, ((0, padded_seq - seq), (0, 0), (0, 0)))

    # Fused input-projection weights: [Wxa | Wxh], [ba | bxh].
    wx = jnp.concatenate([params["wxa"], params["wxh"]], axis=1)   # (ninp, 2H)
    bx = jnp.concatenate([params["ba"], params["bxh"]], axis=1)    # (1, 2H)

    # Lane-REPLICATED gain weights: gains come out pre-broadcast over H lanes.
    waoT = jnp.concatenate(
        [jnp.broadcast_to(params["wao"][0][:, None], (H, H)),
         jnp.broadcast_to(params["wao"][1][:, None], (H, H))], axis=1)  # (H, 2H)
    bao = jnp.concatenate(
        [jnp.broadcast_to(params["bao"][:, 0:1], (1, H)),
         jnp.broadcast_to(params["bao"][:, 1:2], (1, H))], axis=1)      # (1, 2H)

    grid = (padded_seq // chunk,)
    kernel = _make_recurrent_kernel(H=H, B=B, chunk=chunk, seq=seq,
                                    needs_mask=needs_mask)

    dec, h1 = pl.pallas_call(
        kernel,
        out_shape=(jax.ShapeDtypeStruct((padded_seq, B, ntoken), jnp.float32),
                   jax.ShapeDtypeStruct((B, H), jnp.float32)),
        grid_spec=pltpu.PrefetchScalarGridSpec(
            num_scalar_prefetch=0,
            grid=grid,
            in_specs=[
                pl.BlockSpec((chunk, B, ninp), lambda c: (c, 0, 0)),   # emb chunk
                pl.BlockSpec((ninp, 2 * H), lambda c: (0, 0)),         # wx
                pl.BlockSpec((1, 2 * H), lambda c: (0, 0)),            # bx
                pl.BlockSpec((H, H), lambda c: (0, 0)),                # wha
                pl.BlockSpec((H, H), lambda c: (0, 0)),                # whh
                pl.BlockSpec((H, 2 * H), lambda c: (0, 0)),            # waoT (replicated)
                pl.BlockSpec((1, 2 * H), lambda c: (0, 0)),            # bao  (replicated)
                pl.BlockSpec((1, H), lambda c: (0, 0)),                # bhh
                pl.BlockSpec((H, ntoken), lambda c: (0, 0)),           # wdec
                pl.BlockSpec((1, ntoken), lambda c: (0, 0)),           # bdec
            ],
            out_specs=[
                pl.BlockSpec((chunk, B, ntoken), lambda c: (c, 0, 0)),
                pl.BlockSpec((B, H), lambda c: (0, 0)),
            ],
            scratch_shapes=[
                pltpu.VMEM((B, 2 * H), jnp.float32),          # hidden carry [h0|h1]
                pltpu.VMEM((chunk, B, 2 * H), jnp.float32),   # per-chunk xproj
                pltpu.VMEM((chunk, B, H), jnp.float32),       # per-chunk hs
            ]),
        compiler_params=pltpu.CompilerParams(
            dimension_semantics=("arbitrary",)),   # true serial recurrence
    )(emb, wx, bx, params["wha"], params["whh"], waoT, bao, params["bhh"],
      params["wdec"], params["bdec"])

    if needs_mask:
        dec = dec[:seq]
    return dec, h1


# ---------------------------------------------------------------------------
# Pure-JAX reference mirroring RNNModel.forward (original formulation).
# ---------------------------------------------------------------------------
def rnn_reference(token_ids, params):
    emb = params["embedding"][token_ids]
    seq, B, _ = emb.shape
    H = params["wxh"].shape[1]
    h0 = jnp.zeros((B, H), jnp.float32)
    h1 = jnp.zeros((B, H), jnp.float32)
    hs = []
    for i in range(seq):
        x = emb[i]
        h0 = jnp.tanh(x @ params["wxa"] + h0 @ params["wha"] + params["ba"])
        a0 = jax.nn.sigmoid(
            jnp.sum(h0 * params["wao"][0:1, :], axis=-1, keepdims=True)
            + params["bao"][:, 0:1])
        a1 = jax.nn.sigmoid(
            jnp.sum(h0 * params["wao"][1:2, :], axis=-1, keepdims=True)
            + params["bao"][:, 1:2])
        h1 = jnp.tanh(a0 * (x @ params["wxh"] + params["bxh"])
                      + a1 * (h1 @ params["whh"] + params["bhh"]))
        hs.append(h1)
    out = jnp.stack(hs)
    dec = out.reshape(seq * B, H) @ params["wdec"] + params["bdec"]
    return dec.reshape(seq, B, -1), h1


def init_params(key, ntoken, ninp, nhid):
    ks = jax.random.split(key, 8)
    initrange = 0.1
    scale = 1.0 / np.sqrt(nhid)
    u = lambda k, s, r: jax.random.uniform(k, s, jnp.float32, -r, r)
    return {
        # nn.Embedding + nn.Linear init per RNNModel.init_weights()
        "embedding": u(ks[0], (ntoken, ninp), initrange),
        "wdec": u(ks[1], (nhid, ntoken), initrange),
        "bdec": jnp.zeros((1, ntoken), jnp.float32),
        # adapt_module params
        "wxa": u(ks[2], (ninp, nhid), scale),
        "wha": u(ks[3], (nhid, nhid), scale),
        "ba": jnp.zeros((1, nhid), jnp.float32),
        "wao": u(ks[4], (2, nhid), scale),
        "bao": jnp.zeros((1, 2), jnp.float32),
        # gamma_rnn params
        "wxh": u(ks[5], (ninp, nhid), scale),
        "whh": u(ks[6], (nhid, nhid), scale),
        "bxh": jnp.zeros((1, nhid), jnp.float32),
        "bhh": jnp.zeros((1, nhid), jnp.float32),
    }


if __name__ == "__main__":
    # Small but lane/sublane-aligned shapes (H = ninp = 128, ntoken = 256, B = 8).
    ntoken, ninp, nhid = 256, 128, 128
    seq, batch = 8, 8

    key = jax.random.PRNGKey(0)
    kp, kx = jax.random.split(key)
    params = init_params(kp, ntoken, ninp, nhid)
    token_ids = jax.random.randint(kx, (seq, batch), 0, ntoken, dtype=jnp.int32)

    fwd = jax.jit(rnn_forward)
    decoded, h1 = jax.block_until_ready(fwd(token_ids, params))
    dec_ref, h1_ref = jax.block_until_ready(rnn_reference(token_ids, params))

    assert decoded.shape == (seq, batch, ntoken)
    assert h1.shape == (batch, nhid)
    np.testing.assert_allclose(np.asarray(decoded), np.asarray(dec_ref),
                               rtol=1e-4, atol=1e-4)
    np.testing.assert_allclose(np.asarray(h1), np.asarray(h1_ref),
                               rtol=1e-4, atol=1e-5)
    print("KERNEL_OK")
</pallas_src>

<mosaic_0001>
module attributes {stable_mosaic.version = 11 : i64} {
  func.func @kernel(%arg0: i32, %arg1: memref<8x8x128xf32, #tpu.memory_space<vmem>>, %arg2: memref<128x256xf32, #tpu.memory_space<vmem>>, %arg3: memref<1x256xf32, #tpu.memory_space<vmem>>, %arg4: memref<128x128xf32, #tpu.memory_space<vmem>>, %arg5: memref<128x128xf32, #tpu.memory_space<vmem>>, %arg6: memref<128x256xf32, #tpu.memory_space<vmem>>, %arg7: memref<1x256xf32, #tpu.memory_space<vmem>>, %arg8: memref<1x128xf32, #tpu.memory_space<vmem>>, %arg9: memref<128x256xf32, #tpu.memory_space<vmem>>, %arg10: memref<1x256xf32, #tpu.memory_space<vmem>>, %arg11: memref<8x8x256xf32, #tpu.memory_space<vmem>>, %arg12: memref<8x128xf32, #tpu.memory_space<vmem>>, %arg13: memref<8x256xf32, #tpu.memory_space<vmem>>, %arg14: memref<8x8x256xf32, #tpu.memory_space<vmem>>, %arg15: memref<8x8x128xf32, #tpu.memory_space<vmem>>) attributes {dimension_semantics = [#tpu.dimension_semantics<arbitrary>], iteration_bounds = array<i64: 1>, scalar_prefetch = 0 : i64, scratch_operands = 3 : i64, tpu.core_type = #tpu.core_type<tc>, window_params = [{transform_indices = @transform_0, window_bounds = array<i64: 8, 8, 128>}, {pipeline_mode = #tpu.pipeline_mode<synchronous>, transform_indices = @transform_1, window_bounds = array<i64: 128, 256>}, {pipeline_mode = #tpu.pipeline_mode<synchronous>, transform_indices = @transform_2, window_bounds = array<i64: 1, 256>}, {pipeline_mode = #tpu.pipeline_mode<synchronous>, transform_indices = @transform_3, window_bounds = array<i64: 128, 128>}, {pipeline_mode = #tpu.pipeline_mode<synchronous>, transform_indices = @transform_4, window_bounds = array<i64: 128, 128>}, {pipeline_mode = #tpu.pipeline_mode<synchronous>, transform_indices = @transform_5, window_bounds = array<i64: 128, 256>}, {pipeline_mode = #tpu.pipeline_mode<synchronous>, transform_indices = @transform_6, window_bounds = array<i64: 1, 256>}, {pipeline_mode = #tpu.pipeline_mode<synchronous>, transform_indices = @transform_7, window_bounds = array<i64: 1, 128>}, {pipeline_mode = #tpu.pipeline_mode<synchronous>, transform_indices = @transform_8, window_bounds = array<i64: 128, 256>}, {pipeline_mode = #tpu.pipeline_mode<synchronous>, transform_indices = @transform_9, window_bounds = array<i64: 1, 256>}, {transform_indices = @transform_10, window_bounds = array<i64: 8, 8, 256>}, {pipeline_mode = #tpu.pipeline_mode<synchronous>, transform_indices = @transform_11, window_bounds = array<i64: 8, 128>}]} {
    %c0_i32 = arith.constant 0 : i32
    %0 = arith.cmpi eq, %arg0, %c0_i32 : i32
    %1 = arith.extui %0 : i1 to i32
    %c0_i32_0 = arith.constant 0 : i32
    %2 = arith.cmpi ne, %1, %c0_i32_0 : i32
    scf.if %2 {
      %cst_105 = arith.constant 0.000000e+00 : f32
      %253 = vector.broadcast %cst_105 : f32 to vector<8x256xf32>
      %c0_106 = arith.constant 0 : index
      %c0_107 = arith.constant 0 : index
      %254 = vector.load %arg13[%c0_106, %c0_107] : memref<8x256xf32, #tpu.memory_space<vmem>>, vector<8x256xf32>
      tpu.vector_store %arg13[%c0_106, %c0_107], %253 {strides = array<i32>} : memref<8x256xf32, #tpu.memory_space<vmem>>, vector<8x256xf32>,
    } else {
    }
    %c0 = arith.constant 0 : index
    %c0_1 = arith.constant 0 : index
    %c0_2 = arith.constant 0 : index
    %3 = vector.load %arg1[%c0, %c0_1, %c0_2] : memref<8x8x128xf32, #tpu.memory_space<vmem>>, vector<8x8x128xf32>
    %4 = vector.shape_cast %3 : vector<8x8x128xf32> to vector<64x128xf32>
    %c0_3 = arith.constant 0 : index
    %c0_4 = arith.constant 0 : index
    %5 = vector.load %arg2[%c0_3, %c0_4] : memref<128x256xf32, #tpu.memory_space<vmem>>, vector<128x256xf32>
    %cst = arith.constant dense<0.000000e+00> : vector<64x256xf32>
    %6 = tpu.matmul %4, %5, %cst {dimension_numbers = #tpu.dot_dimension_numbers<[1], [0], [0], [1], [0, 0, 1, 1], [], []>} : vector<64x128xf32>, vector<128x256xf32>, vector<64x256xf32> -> vector<64x256xf32>
    %c0_5 = arith.constant 0 : index
    %c0_6 = arith.constant 0 : index
    %7 = vector.load %arg3[%c0_5, %c0_6] : memref<1x256xf32, #tpu.memory_space<vmem>>, vector<1x256xf32>
    %8 = vector.broadcast %7 : vector<1x256xf32> to vector<64x256xf32>
    %9 = arith.addf %6, %8 : vector<64x256xf32>
    %10 = vector.shape_cast %9 : vector<64x256xf32> to vector<8x8x256xf32>
    %c0_7 = arith.constant 0 : index
    %c0_8 = arith.constant 0 : index
    %c0_9 = arith.constant 0 : index
    %11 = vector.load %arg14[%c0_7, %c0_8, %c0_9] : memref<8x8x256xf32, #tpu.memory_space<vmem>>, vector<8x8x256xf32>
    tpu.vector_store %arg14[%c0_7, %c0_8, %c0_9], %10 {strides = array<i32>} : memref<8x8x256xf32, #tpu.memory_space<vmem>>, vector<8x8x256xf32>,
    %c0_10 = arith.constant 0 : index
    %c0_11 = arith.constant 0 : index
    %12 = vector.load %arg4[%c0_10, %c0_11] : memref<128x128xf32, #tpu.memory_space<vmem>>, vector<128x128xf32>
    %c0_12 = arith.constant 0 : index
    %c0_13 = arith.constant 0 : index
    %13 = vector.load %arg5[%c0_12, %c0_13] : memref<128x128xf32, #tpu.memory_space<vmem>>, vector<128x128xf32>
    %c0_14 = arith.constant 0 : index
    %c0_15 = arith.constant 0 : index
    %14 = vector.load %arg6[%c0_14, %c0_15] : memref<128x256xf32, #tpu.memory_space<vmem>>, vector<128x256xf32>
    %c0_16 = arith.constant 0 : index
    %c0_17 = arith.constant 0 : index
    %15 = vector.load %arg7[%c0_16, %c0_17] : memref<1x256xf32, #tpu.memory_space<vmem>>, vector<1x256xf32>
    %16 = vector.shape_cast %15 : vector<1x256xf32> to vector<1x256xf32>
    %17 = vector.broadcast %16 : vector<1x256xf32> to vector<8x256xf32>
    %c0_18 = arith.constant 0 : index
    %c0_19 = arith.constant 0 : index
    %18 = vector.load %arg8[%c0_18, %c0_19] : memref<1x128xf32, #tpu.memory_space<vmem>>, vector<1x128xf32>
    %19 = vector.shape_cast %18 : vector<1x128xf32> to vector<1x128xf32>
    %20 = vector.broadcast %19 : vector<1x128xf32> to vector<8x128xf32>
    %c0_20 = arith.constant 0 : index
    %c0_21 = arith.constant 0 : index
    %21 = vector.load %arg13[%c0_20, %c0_21] : memref<8x256xf32, #tpu.memory_space<vmem>>, vector<8x128xf32>
    %c0_22 = arith.constant 0 : index
    %c128 = arith.constant 128 : index
    %22 = vector.load %arg13[%c0_22, %c128] : memref<8x256xf32, #tpu.memory_space<vmem>>, vector<8x128xf32>
    %c0_i32_23 = arith.constant 0 : i32
    %23 = arith.index_cast %c0_i32_23 : i32 to index
    %c0_24 = arith.constant 0 : index
    %c0_25 = arith.constant 0 : index
    %24 = vector.load %arg14[%23, %c0_24, %c0_25] : memref<8x8x256xf32, #tpu.memory_space<vmem>>, vector<1x8x256xf32>
    %25 = vector.shape_cast %24 : vector<1x8x256xf32> to vector<8x256xf32>
    %26 = vector.extract_strided_slice %25 {offsets = [0, 0], sizes = [8, 128], strides = [1, 1]} : vector<8x256xf32> to vector<8x128xf32>
    %27 = vector.extract_strided_slice %25 {offsets = [0, 128], sizes = [8, 128], strides = [1, 1]} : vector<8x256xf32> to vector<8x128xf32>
    %cst_26 = arith.constant dense<0.000000e+00> : vector<8x128xf32>
    %28 = tpu.matmul %21, %12, %cst_26 {dimension_numbers = #tpu.dot_dimension_numbers<[1], [0], [0], [1], [0, 0, 1, 1], [], []>} : vector<8x128xf32>, vector<128x128xf32>, vector<8x128xf32> -> vector<8x128xf32>
    %cst_27 = arith.constant dense<0.000000e+00> : vector<8x128xf32>
    %29 = tpu.matmul %22, %13, %cst_27 {dimension_numbers = #tpu.dot_dimension_numbers<[1], [0], [0], [1], [0, 0, 1, 1], [], []>} : vector<8x128xf32>, vector<128x128xf32>, vector<8x128xf32> -> vector<8x128xf32>
    %30 = arith.addf %26, %28 : vector<8x128xf32>
    %31 = math.tanh %30 : vector<8x128xf32>
    %cst_28 = arith.constant dense<0.000000e+00> : vector<8x256xf32>
    %32 = tpu.matmul %31, %14, %cst_28 {dimension_numbers = #tpu.dot_dimension_numbers<[1], [0], [0], [1], [0, 0, 1, 1], [], []>} : vector<8x128xf32>, vector<128x256xf32>, vector<8x256xf32> -> vector<8x256xf32>
    %33 = arith.addf %32, %17 : vector<8x256xf32>
    %34 = arith.negf %33 : vector<8x256xf32>
    %35 = math.exp %34 : vector<8x256xf32>
    %cst_29 = arith.constant 1.000000e+00 : f32
    %36 = vector.broadcast %cst_29 : f32 to vector<8x256xf32>
    %37 = arith.addf %36, %35 : vector<8x256xf32>
    %38 = arith.divf %36, %37 : vector<8x256xf32>
    %39 = vector.extract_strided_slice %38 {offsets = [0, 0], sizes = [8, 128], strides = [1, 1]} : vector<8x256xf32> to vector<8x128xf32>
    %40 = arith.mulf %39, %27 : vector<8x128xf32>
    %41 = vector.extract_strided_slice %38 {offsets = [0, 128], sizes = [8, 128], strides = [1, 1]} : vector<8x256xf32> to vector<8x128xf32>
    %42 = arith.addf %29, %20 : vector<8x128xf32>
    %43 = arith.mulf %41, %42 : vector<8x128xf32>
    %44 = arith.addf %40, %43 : vector<8x128xf32>
    %45 = math.tanh %44 : vector<8x128xf32>
    %46 = arith.index_cast %c0_i32_23 : i32 to index
    %c0_30 = arith.constant 0 : index
    %c0_31 = arith.constant 0 : index
    %47 = vector.load %arg15[%46, %c0_30, %c0_31] : memref<8x8x128xf32, #tpu.memory_space<vmem>>, vector<1x8x128xf32>
    %48 = vector.shape_cast %47 : vector<1x8x128xf32> to vector<8x128xf32>
    %49 = vector.shape_cast %45 : vector<8x128xf32> to vector<1x8x128xf32>
    tpu.vector_store %arg15[%46, %c0_30, %c0_31], %49 {strides = array<i32>} : memref<8x8x128xf32, #tpu.memory_space<vmem>>, vector<1x8x128xf32>,
    %c1_i32 = arith.constant 1 : i32
    %50 = arith.index_cast %c1_i32 : i32 to index
    %c0_32 = arith.constant 0 : index
    %c0_33 = arith.constant 0 : index
    %51 = vector.load %arg14[%50, %c0_32, %c0_33] : memref<8x8x256xf32, #tpu.memory_space<vmem>>, vector<1x8x256xf32>
    %52 = vector.shape_cast %51 : vector<1x8x256xf32> to vector<8x256xf32>
    %53 = vector.extract_strided_slice %52 {offsets = [0, 0], sizes = [8, 128], strides = [1, 1]} : vector<8x256xf32> to vector<8x128xf32>
    %54 = vector.extract_strided_slice %52 {offsets = [0, 128], sizes = [8, 128], strides = [1, 1]} : vector<8x256xf32> to vector<8x128xf32>
    %cst_34 = arith.constant dense<0.000000e+00> : vector<8x128xf32>
    %55 = tpu.matmul %31, %12, %cst_34 {dimension_numbers = #tpu.dot_dimension_numbers<[1], [0], [0], [1], [0, 0, 1, 1], [], []>} : vector<8x128xf32>, vector<128x128xf32>, vector<8x128xf32> -> vector<8x128xf32>
    %cst_35 = arith.constant dense<0.000000e+00> : vector<8x128xf32>
    %56 = tpu.matmul %45, %13, %cst_35 {dimension_numbers = #tpu.dot_dimension_numbers<[1], [0], [0], [1], [0, 0, 1, 1], [], []>} : vector<8x128xf32>, vector<128x128xf32>, vector<8x128xf32> -> vector<8x128xf32>
    %57 = arith.addf %53, %55 : vector<8x128xf32>
    %58 = math.tanh %57 : vector<8x128xf32>
    %cst_36 = arith.constant dense<0.000000e+00> : vector<8x256xf32>
    %59 = tpu.matmul %58, %14, %cst_36 {dimension_numbers = #tpu.dot_dimension_numbers<[1], [0], [0], [1], [0, 0, 1, 1], [], []>} : vector<8x128xf32>, vector<128x256xf32>, vector<8x256xf32> -> vector<8x256xf32>
    %60 = arith.addf %59, %17 : vector<8x256xf32>
    %61 = arith.negf %60 : vector<8x256xf32>
    %62 = math.exp %61 : vector<8x256xf32>
    %cst_37 = arith.constant 1.000000e+00 : f32
    %63 = vector.broadcast %cst_37 : f32 to vector<8x256xf32>
    %64 = arith.addf %63, %62 : vector<8x256xf32>
    %65 = arith.divf %63, %64 : vector<8x256xf32>
    %66 = vector.extract_strided_slice %65 {offsets = [0, 0], sizes = [8, 128], strides = [1, 1]} : vector<8x256xf32> to vector<8x128xf32>
    %67 = arith.mulf %66, %54 : vector<8x128xf32>
    %68 = vector.extract_strided_slice %65 {offsets = [0, 128], sizes = [8, 128], strides = [1, 1]} : vector<8x256xf32> to vector<8x128xf32>
    %69 = arith.addf %56, %20 : vector<8x128xf32>
    %70 = arith.mulf %68, %69 : vector<8x128xf32>
    %71 = arith.addf %67, %70 : vector<8x128xf32>
    %72 = math.tanh %71 : vector<8x128xf32>
    %73 = arith.index_cast %c1_i32 : i32 to index
    %c0_38 = arith.constant 0 : index
    %c0_39 = arith.constant 0 : index
    %74 = vector.load %arg15[%73, %c0_38, %c0_39] : memref<8x8x128xf32, #tpu.memory_space<vmem>>, vector<1x8x128xf32>
    %75 = vector.shape_cast %74 : vector<1x8x128xf32> to vector<8x128xf32>
    %76 = vector.shape_cast %72 : vector<8x128xf32> to vector<1x8x128xf32>
    tpu.vector_store %arg15[%73, %c0_38, %c0_39], %76 {strides = array<i32>} : memref<8x8x128xf32, #tpu.memory_space<vmem>>, vector<1x8x128xf32>,
    %c2_i32 = arith.constant 2 : i32
    %77 = arith.index_cast %c2_i32 : i32 to index
    %c0_40 = arith.constant 0 : index
    %c0_41 = arith.constant 0 : index
    %78 = vector.load %arg14[%77, %c0_40, %c0_41] : memref<8x8x256xf32, #tpu.memory_space<vmem>>, vector<1x8x256xf32>
    %79 = vector.shape_cast %78 : vector<1x8x256xf32> to vector<8x256xf32>
    %80 = vector.extract_strided_slice %79 {offsets = [0, 0], sizes = [8, 128], strides = [1, 1]} : vector<8x256xf32> to vector<8x128xf32>
    %81 = vector.extract_strided_slice %79 {offsets = [0, 128], sizes = [8, 128], strides = [1, 1]} : vector<8x256xf32> to vector<8x128xf32>
    %cst_42 = arith.constant dense<0.000000e+00> : vector<8x128xf32>
    %82 = tpu.matmul %58, %12, %cst_42 {dimension_numbers = #tpu.dot_dimension_numbers<[1], [0], [0], [1], [0, 0, 1, 1], [], []>} : vector<8x128xf32>, vector<128x128xf32>, vector<8x128xf32> -> vector<8x128xf32>
    %cst_43 = arith.constant dense<0.000000e+00> : vector<8x128xf32>
    %83 = tpu.matmul %72, %13, %cst_43 {dimension_numbers = #tpu.dot_dimension_numbers<[1], [0], [0], [1], [0, 0, 1, 1], [], []>} : vector<8x128xf32>, vector<128x128xf32>, vector<8x128xf32> -> vector<8x128xf32>
    %84 = arith.addf %80, %82 : vector<8x128xf32>
    %85 = math.tanh %84 : vector<8x128xf32>
    %cst_44 = arith.constant dense<0.000000e+00> : vector<8x256xf32>
    %86 = tpu.matmul %85, %14, %cst_44 {dimension_numbers = #tpu.dot_dimension_numbers<[1], [0], [0], [1], [0, 0, 1, 1], [], []>} : vector<8x128xf32>, vector<128x256xf32>, vector<8x256xf32> -> vector<8x256xf32>
    %87 = arith.addf %86, %17 : vector<8x256xf32>
    %88 = arith.negf %87 : vector<8x256xf32>
    %89 = math.exp %88 : vector<8x256xf32>
    %cst_45 = arith.constant 1.000000e+00 : f32
    %90 = vector.broadcast %cst_45 : f32 to vector<8x256xf32>
    %91 = arith.addf %90, %89 : vector<8x256xf32>
    %92 = arith.divf %90, %91 : vector<8x256xf32>
    %93 = vector.extract_strided_slice %92 {offsets = [0, 0], sizes = [8, 128], strides = [1, 1]} : vector<8x256xf32> to vector<8x128xf32>
    %94 = arith.mulf %93, %81 : vector<8x128xf32>
    %95 = vector.extract_strided_slice %92 {offsets = [0, 128], sizes = [8, 128], strides = [1, 1]} : vector<8x256xf32> to vector<8x128xf32>
    %96 = arith.addf %83, %20 : vector<8x128xf32>
    %97 = arith.mulf %95, %96 : vector<8x128xf32>
    %98 = arith.addf %94, %97 : vector<8x128xf32>
    %99 = math.tanh %98 : vector<8x128xf32>
    %100 = arith.index_cast %c2_i32 : i32 to index
    %c0_46 = arith.constant 0 : index
    %c0_47 = arith.constant 0 : index
    %101 = vector.load %arg15[%100, %c0_46, %c0_47] : memref<8x8x128xf32, #tpu.memory_space<vmem>>, vector<1x8x128xf32>
    %102 = vector.shape_cast %101 : vector<1x8x128xf32> to vector<8x128xf32>
    %103 = vector.shape_cast %99 : vector<8x128xf32> to vector<1x8x128xf32>
    tpu.vector_store %arg15[%100, %c0_46, %c0_47], %103 {strides = array<i32>} : memref<8x8x128xf32, #tpu.memory_space<vmem>>, vector<1x8x128xf32>,
    %c3_i32 = arith.constant 3 : i32
    %104 = arith.index_cast %c3_i32 : i32 to index
    %c0_48 = arith.constant 0 : index
    %c0_49 = arith.constant 0 : index
    %105 = vector.load %arg14[%104, %c0_48, %c0_49] : memref<8x8x256xf32, #tpu.memory_space<vmem>>, vector<1x8x256xf32>
    %106 = vector.shape_cast %105 : vector<1x8x256xf32> to vector<8x256xf32>
    %107 = vector.extract_strided_slice %106 {offsets = [0, 0], sizes = [8, 128], strides = [1, 1]} : vector<8x256xf32> to vector<8x128xf32>
    %108 = vector.extract_strided_slice %106 {offsets = [0, 128], sizes = [8, 128], strides = [1, 1]} : vector<8x256xf32> to vector<8x128xf32>
    %cst_50 = arith.constant dense<0.000000e+00> : vector<8x128xf32>
    %109 = tpu.matmul %85, %12, %cst_50 {dimension_numbers = #tpu.dot_dimension_numbers<[1], [0], [0], [1], [0, 0, 1, 1], [], []>} : vector<8x128xf32>, vector<128x128xf32>, vector<8x128xf32> -> vector<8x128xf32>
    %cst_51 = arith.constant dense<0.000000e+00> : vector<8x128xf32>
    %110 = tpu.matmul %99, %13, %cst_51 {dimension_numbers = #tpu.dot_dimension_numbers<[1], [0], [0], [1], [0, 0, 1, 1], [], []>} : vector<8x128xf32>, vector<128x128xf32>, vector<8x128xf32> -> vector<8x128xf32>
    %111 = arith.addf %107, %109 : vector<8x128xf32>
    %112 = math.tanh %111 : vector<8x128xf32>
    %cst_52 = arith.constant dense<0.000000e+00> : vector<8x256xf32>
    %113 = tpu.matmul %112, %14, %cst_52 {dimension_numbers = #tpu.dot_dimension_numbers<[1], [0], [0], [1], [0, 0, 1, 1], [], []>} : vector<8x128xf32>, vector<128x256xf32>, vector<8x256xf32> -> vector<8x256xf32>
    %114 = arith.addf %113, %17 : vector<8x256xf32>
    %115 = arith.negf %114 : vector<8x256xf32>
    %116 = math.exp %115 : vector<8x256xf32>
    %cst_53 = arith.constant 1.000000e+00 : f32
    %117 = vector.broadcast %cst_53 : f32 to vector<8x256xf32>
    %118 = arith.addf %117, %116 : vector<8x256xf32>
    %119 = arith.divf %117, %118 : vector<8x256xf32>
    %120 = vector.extract_strided_slice %119 {offsets = [0, 0], sizes = [8, 128], strides = [1, 1]} : vector<8x256xf32> to vector<8x128xf32>
    %121 = arith.mulf %120, %108 : vector<8x128xf32>
    %122 = vector.extract_strided_slice %119 {offsets = [0, 128], sizes = [8, 128], strides = [1, 1]} : vector<8x256xf32> to vector<8x128xf32>
    %123 = arith.addf %110, %20 : vector<8x128xf32>
    %124 = arith.mulf %122, %123 : vector<8x128xf32>
    %125 = arith.addf %121, %124 : vector<8x128xf32>
    %126 = math.tanh %125 : vector<8x128xf32>
    %127 = arith.index_cast %c3_i32 : i32 to index
    %c0_54 = arith.constant 0 : index
    %c0_55 = arith.constant 0 : index
    %128 = vector.load %arg15[%127, %c0_54, %c0_55] : memref<8x8x128xf32, #tpu.memory_space<vmem>>, vector<1x8x128xf32>
    %129 = vector.shape_cast %128 : vector<1x8x128xf32> to vector<8x128xf32>
    %130 = vector.shape_cast %126 : vector<8x128xf32> to vector<1x8x128xf32>
    tpu.vector_store %arg15[%127, %c0_54, %c0_55], %130 {strides = array<i32>} : memref<8x8x128xf32, #tpu.memory_space<vmem>>, vector<1x8x128xf32>,
    %c4_i32 = arith.constant 4 : i32
    %131 = arith.index_cast %c4_i32 : i32 to index
    %c0_56 = arith.constant 0 : index
    %c0_57 = arith.constant 0 : index
    %132 = vector.load %arg14[%131, %c0_56, %c0_57] : memref<8x8x256xf32, #tpu.memory_space<vmem>>, vector<1x8x256xf32>
    %133 = vector.shape_cast %132 : vector<1x8x256xf32> to vector<8x256xf32>
    %134 = vector.extract_strided_slice %133 {offsets = [0, 0], sizes = [8, 128], strides = [1, 1]} : vector<8x256xf32> to vector<8x128xf32>
    %135 = vector.extract_strided_slice %133 {offsets = [0, 128], sizes = [8, 128], strides = [1, 1]} : vector<8x256xf32> to vector<8x128xf32>
    %cst_58 = arith.constant dense<0.000000e+00> : vector<8x128xf32>
    %136 = tpu.matmul %112, %12, %cst_58 {dimension_numbers = #tpu.dot_dimension_numbers<[1], [0], [0], [1], [0, 0, 1, 1], [], []>} : vector<8x128xf32>, vector<128x128xf32>, vector<8x128xf32> -> vector<8x128xf32>
    %cst_59 = arith.constant dense<0.000000e+00> : vector<8x128xf32>
    %137 = tpu.matmul %126, %13, %cst_59 {dimension_numbers = #tpu.dot_dimension_numbers<[1], [0], [0], [1], [0, 0, 1, 1], [], []>} : vector<8x128xf32>, vector<128x128xf32>, vector<8x128xf32> -> vector<8x128xf32>
    %138 = arith.addf %134, %136 : vector<8x128xf32>
    %139 = math.tanh %138 : vector<8x128xf32>
    %cst_60 = arith.constant dense<0.000000e+00> : vector<8x256xf32>
    %140 = tpu.matmul %139, %14, %cst_60 {dimension_numbers = #tpu.dot_dimension_numbers<[1], [0], [0], [1], [0, 0, 1, 1], [], []>} : vector<8x128xf32>, vector<128x256xf32>, vector<8x256xf32> -> vector<8x256xf32>
    %141 = arith.addf %140, %17 : vector<8x256xf32>
    %142 = arith.negf %141 : vector<8x256xf32>
    %143 = math.exp %142 : vector<8x256xf32>
    %cst_61 = arith.constant 1.000000e+00 : f32
    %144 = vector.broadcast %cst_61 : f32 to vector<8x256xf32>
    %145 = arith.addf %144, %143 : vector<8x256xf32>
    %146 = arith.divf %144, %145 : vector<8x256xf32>
    %147 = vector.extract_strided_slice %146 {offsets = [0, 0], sizes = [8, 128], strides = [1, 1]} : vector<8x256xf32> to vector<8x128xf32>
    %148 = arith.mulf %147, %135 : vector<8x128xf32>
    %149 = vector.extract_strided_slice %146 {offsets = [0, 128], sizes = [8, 128], strides = [1, 1]} : vector<8x256xf32> to vector<8x128xf32>
    %150 = arith.addf %137, %20 : vector<8x128xf32>
    %151 = arith.mulf %149, %150 : vector<8x128xf32>
    %152 = arith.addf %148, %151 : vector<8x128xf32>
    %153 = math.tanh %152 : vector<8x128xf32>
    %154 = arith.index_cast %c4_i32 : i32 to index
    %c0_62 = arith.constant 0 : index
    %c0_63 = arith.constant 0 : index
    %155 = vector.load %arg15[%154, %c0_62, %c0_63] : memref<8x8x128xf32, #tpu.memory_space<vmem>>, vector<1x8x128xf32>
    %156 = vector.shape_cast %155 : vector<1x8x128xf32> to vector<8x128xf32>
    %157 = vector.shape_cast %153 : vector<8x128xf32> to vector<1x8x128xf32>
    tpu.vector_store %arg15[%154, %c0_62, %c0_63], %157 {strides = array<i32>} : memref<8x8x128xf32, #tpu.memory_space<vmem>>, vector<1x8x128xf32>,
    %c5_i32 = arith.constant 5 : i32
    %158 = arith.index_cast %c5_i32 : i32 to index
    %c0_64 = arith.constant 0 : index
    %c0_65 = arith.constant 0 : index
    %159 = vector.load %arg14[%158, %c0_64, %c0_65] : memref<8x8x256xf32, #tpu.memory_space<vmem>>, vector<1x8x256xf32>
    %160 = vector.shape_cast %159 : vector<1x8x256xf32> to vector<8x256xf32>
    %161 = vector.extract_strided_slice %160 {offsets = [0, 0], sizes = [8, 128], strides = [1, 1]} : vector<8x256xf32> to vector<8x128xf32>
    %162 = vector.extract_strided_slice %160 {offsets = [0, 128], sizes = [8, 128], strides = [1, 1]} : vector<8x256xf32> to vector<8x128xf32>
    %cst_66 = arith.constant dense<0.000000e+00> : vector<8x128xf32>
    %163 = tpu.matmul %139, %12, %cst_66 {dimension_numbers = #tpu.dot_dimension_numbers<[1], [0], [0], [1], [0, 0, 1, 1], [], []>} : vector<8x128xf32>, vector<128x128xf32>, vector<8x128xf32> -> vector<8x128xf32>
    %cst_67 = arith.constant dense<0.000000e+00> : vector<8x128xf32>
    %164 = tpu.matmul %153, %13, %cst_67 {dimension_numbers = #tpu.dot_dimension_numbers<[1], [0], [0], [1], [0, 0, 1, 1], [], []>} : vector<8x128xf32>, vector<128x128xf32>, vector<8x128xf32> -> vector<8x128xf32>
    %165 = arith.addf %161, %163 : vector<8x128xf32>
    %166 = math.tanh %165 : vector<8x128xf32>
    %cst_68 = arith.constant dense<0.000000e+00> : vector<8x256xf32>
    %167 = tpu.matmul %166, %14, %cst_68 {dimension_numbers = #tpu.dot_dimension_numbers<[1], [0], [0], [1], [0, 0, 1, 1], [], []>} : vector<8x128xf32>, vector<128x256xf32>, vector<8x256xf32> -> vector<8x256xf32>
    %168 = arith.addf %167, %17 : vector<8x256xf32>
    %169 = arith.negf %168 : vector<8x256xf32>
    %170 = math.exp %169 : vector<8x256xf32>
    %cst_69 = arith.constant 1.000000e+00 : f32
    %171 = vector.broadcast %cst_69 : f32 to vector<8x256xf32>
    %172 = arith.addf %171, %170 : vector<8x256xf32>
    %173 = arith.divf %171, %172 : vector<8x256xf32>
    %174 = vector.extract_strided_slice %173 {offsets = [0, 0], sizes = [8, 128], strides = [1, 1]} : vector<8x256xf32> to vector<8x128xf32>
    %175 = arith.mulf %174, %162 : vector<8x128xf32>
    %176 = vector.extract_strided_slice %173 {offsets = [0, 128], sizes = [8, 128], strides = [1, 1]} : vector<8x256xf32> to vector<8x128xf32>
    %177 = arith.addf %164, %20 : vector<8x128xf32>
    %178 = arith.mulf %176, %177 : vector<8x128xf32>
    %179 = arith.addf %175, %178 : vector<8x128xf32>
    %180 = math.tanh %179 : vector<8x128xf32>
    %181 = arith.index_cast %c5_i32 : i32 to index
    %c0_70 = arith.constant 0 : index
    %c0_71 = arith.constant 0 : index
    %182 = vector.load %arg15[%181, %c0_70, %c0_71] : memref<8x8x128xf32, #tpu.memory_space<vmem>>, vector<1x8x128xf32>
    %183 = vector.shape_cast %182 : vector<1x8x128xf32> to vector<8x128xf32>
    %184 = vector.shape_cast %180 : vector<8x128xf32> to vector<1x8x128xf32>
    tpu.vector_store %arg15[%181, %c0_70, %c0_71], %184 {strides = array<i32>} : memref<8x8x128xf32, #tpu.memory_space<vmem>>, vector<1x8x128xf32>,
    %c6_i32 = arith.constant 6 : i32
    %185 = arith.index_cast %c6_i32 : i32 to index
    %c0_72 = arith.constant 0 : index
    %c0_73 = arith.constant 0 : index
    %186 = vector.load %arg14[%185, %c0_72, %c0_73] : memref<8x8x256xf32, #tpu.memory_space<vmem>>, vector<1x8x256xf32>
    %187 = vector.shape_cast %186 : vector<1x8x256xf32> to vector<8x256xf32>
    %188 = vector.extract_strided_slice %187 {offsets = [0, 0], sizes = [8, 128], strides = [1, 1]} : vector<8x256xf32> to vector<8x128xf32>
    %189 = vector.extract_strided_slice %187 {offsets = [0, 128], sizes = [8, 128], strides = [1, 1]} : vector<8x256xf32> to vector<8x128xf32>
    %cst_74 = arith.constant dense<0.000000e+00> : vector<8x128xf32>
    %190 = tpu.matmul %166, %12, %cst_74 {dimension_numbers = #tpu.dot_dimension_numbers<[1], [0], [0], [1], [0, 0, 1, 1], [], []>} : vector<8x128xf32>, vector<128x128xf32>, vector<8x128xf32> -> vector<8x128xf32>
    %cst_75 = arith.constant dense<0.000000e+00> : vector<8x128xf32>
    %191 = tpu.matmul %180, %13, %cst_75 {dimension_numbers = #tpu.dot_dimension_numbers<[1], [0], [0], [1], [0, 0, 1, 1], [], []>} : vector<8x128xf32>, vector<128x128xf32>, vector<8x128xf32> -> vector<8x128xf32>
    %192 = arith.addf %188, %190 : vector<8x128xf32>
    %193 = math.tanh %192 : vector<8x128xf32>
    %cst_76 = arith.constant dense<0.000000e+00> : vector<8x256xf32>
    %194 = tpu.matmul %193, %14, %cst_76 {dimension_numbers = #tpu.dot_dimension_numbers<[1], [0], [0], [1], [0, 0, 1, 1], [], []>} : vector<8x128xf32>, vector<128x256xf32>, vector<8x256xf32> -> vector<8x256xf32>
    %195 = arith.addf %194, %17 : vector<8x256xf32>
    %196 = arith.negf %195 : vector<8x256xf32>
    %197 = math.exp %196 : vector<8x256xf32>
    %cst_77 = arith.constant 1.000000e+00 : f32
    %198 = vector.broadcast %cst_77 : f32 to vector<8x256xf32>
    %199 = arith.addf %198, %197 : vector<8x256xf32>
    %200 = arith.divf %198, %199 : vector<8x256xf32>
    %201 = vector.extract_strided_slice %200 {offsets = [0, 0], sizes = [8, 128], strides = [1, 1]} : vector<8x256xf32> to vector<8x128xf32>
    %202 = arith.mulf %201, %189 : vector<8x128xf32>
    %203 = vector.extract_strided_slice %200 {offsets = [0, 128], sizes = [8, 128], strides = [1, 1]} : vector<8x256xf32> to vector<8x128xf32>
    %204 = arith.addf %191, %20 : vector<8x128xf32>
    %205 = arith.mulf %203, %204 : vector<8x128xf32>
    %206 = arith.addf %202, %205 : vector<8x128xf32>
    %207 = math.tanh %206 : vector<8x128xf32>
    %208 = arith.index_cast %c6_i32 : i32 to index
    %c0_78 = arith.constant 0 : index
    %c0_79 = arith.constant 0 : index
    %209 = vector.load %arg15[%208, %c0_78, %c0_79] : memref<8x8x128xf32, #tpu.memory_space<vmem>>, vector<1x8x128xf32>
    %210 = vector.shape_cast %209 : vector<1x8x128xf32> to vector<8x128xf32>
    %211 = vector.shape_cast %207 : vector<8x128xf32> to vector<1x8x128xf32>
    tpu.vector_store %arg15[%208, %c0_78, %c0_79], %211 {strides = array<i32>} : memref<8x8x128xf32, #tpu.memory_space<vmem>>, vector<1x8x128xf32>,
    %c7_i32 = arith.constant 7 : i32
    %212 = arith.index_cast %c7_i32 : i32 to index
    %c0_80 = arith.constant 0 : index
    %c0_81 = arith.constant 0 : index
    %213 = vector.load %arg14[%212, %c0_80, %c0_81] : memref<8x8x256xf32, #tpu.memory_space<vmem>>, vector<1x8x256xf32>
    %214 = vector.shape_cast %213 : vector<1x8x256xf32> to vector<8x256xf32>
    %215 = vector.extract_strided_slice %214 {offsets = [0, 0], sizes = [8, 128], strides = [1, 1]} : vector<8x256xf32> to vector<8x128xf32>
    %216 = vector.extract_strided_slice %214 {offsets = [0, 128], sizes = [8, 128], strides = [1, 1]} : vector<8x256xf32> to vector<8x128xf32>
    %cst_82 = arith.constant dense<0.000000e+00> : vector<8x128xf32>
    %217 = tpu.matmul %193, %12, %cst_82 {dimension_numbers = #tpu.dot_dimension_numbers<[1], [0], [0], [1], [0, 0, 1, 1], [], []>} : vector<8x128xf32>, vector<128x128xf32>, vector<8x128xf32> -> vector<8x128xf32>
    %cst_83 = arith.constant dense<0.000000e+00> : vector<8x128xf32>
    %218 = tpu.matmul %207, %13, %cst_83 {dimension_numbers = #tpu.dot_dimension_numbers<[1], [0], [0], [1], [0, 0, 1, 1], [], []>} : vector<8x128xf32>, vector<128x128xf32>, vector<8x128xf32> -> vector<8x128xf32>
    %219 = arith.addf %215, %217 : vector<8x128xf32>
    %220 = math.tanh %219 : vector<8x128xf32>
    %cst_84 = arith.constant dense<0.000000e+00> : vector<8x256xf32>
    %221 = tpu.matmul %220, %14, %cst_84 {dimension_numbers = #tpu.dot_dimension_numbers<[1], [0], [0], [1], [0, 0, 1, 1], [], []>} : vector<8x128xf32>, vector<128x256xf32>, vector<8x256xf32> -> vector<8x256xf32>
    %222 = arith.addf %221, %17 : vector<8x256xf32>
    %223 = arith.negf %222 : vector<8x256xf32>
    %224 = math.exp %223 : vector<8x256xf32>
    %cst_85 = arith.constant 1.000000e+00 : f32
    %225 = vector.broadcast %cst_85 : f32 to vector<8x256xf32>
    %226 = arith.addf %225, %224 : vector<8x256xf32>
    %227 = arith.divf %225, %226 : vector<8x256xf32>
    %228 = vector.extract_strided_slice %227 {offsets = [0, 0], sizes = [8, 128], strides = [1, 1]} : vector<8x256xf32> to vector<8x128xf32>
    %229 = arith.mulf %228, %216 : vector<8x128xf32>
    %230 = vector.extract_strided_slice %227 {offsets = [0, 128], sizes = [8, 128], strides = [1, 1]} : vector<8x256xf32> to vector<8x128xf32>
    %231 = arith.addf %218, %20 : vector<8x128xf32>
    %232 = arith.mulf %230, %231 : vector<8x128xf32>
    %233 = arith.addf %229, %232 : vector<8x128xf32>
    %234 = math.tanh %233 : vector<8x128xf32>
    %235 = arith.index_cast %c7_i32 : i32 to index
    %c0_86 = arith.constant 0 : index
    %c0_87 = arith.constant 0 : index
    %236 = vector.load %arg15[%235, %c0_86, %c0_87] : memref<8x8x128xf32, #tpu.memory_space<vmem>>, vector<1x8x128xf32>
    %237 = vector.shape_cast %236 : vector<1x8x128xf32> to vector<8x128xf32>
    %238 = vector.shape_cast %234 : vector<8x128xf32> to vector<1x8x128xf32>
    tpu.vector_store %arg15[%235, %c0_86, %c0_87], %238 {strides = array<i32>} : memref<8x8x128xf32, #tpu.memory_space<vmem>>, vector<1x8x128xf32>,
    %c8_i32 = arith.constant 8 : i32
    %c0_88 = arith.constant 0 : index
    %c0_89 = arith.constant 0 : index
    %239 = vector.load %arg13[%c0_88, %c0_89] : memref<8x256xf32, #tpu.memory_space<vmem>>, vector<8x128xf32>
    tpu.vector_store %arg13[%c0_88, %c0_89], %220 {strides = array<i32>} : memref<8x256xf32, #tpu.memory_space<vmem>>, vector<8x128xf32>,
    %c0_90 = arith.constant 0 : index
    %c128_91 = arith.constant 128 : index
    %240 = vector.load %arg13[%c0_90, %c128_91] : memref<8x256xf32, #tpu.memory_space<vmem>>, vector<8x128xf32>
    tpu.vector_store %arg13[%c0_90, %c128_91], %234 {strides = array<i32>} : memref<8x256xf32, #tpu.memory_space<vmem>>, vector<8x128xf32>,
    %c0_92 = arith.constant 0 : index
    %c0_93 = arith.constant 0 : index
    %c0_94 = arith.constant 0 : index
    %241 = vector.load %arg15[%c0_92, %c0_93, %c0_94] : memref<8x8x128xf32, #tpu.memory_space<vmem>>, vector<8x8x128xf32>
    %242 = vector.shape_cast %241 : vector<8x8x128xf32> to vector<64x128xf32>
    %c0_95 = arith.constant 0 : index
    %c0_96 = arith.constant 0 : index
    %243 = vector.load %arg9[%c0_95, %c0_96] : memref<128x256xf32, #tpu.memory_space<vmem>>, vector<128x256xf32>
    %cst_97 = arith.constant dense<0.000000e+00> : vector<64x256xf32>
    %244 = tpu.matmul %242, %243, %cst_97 {dimension_numbers = #tpu.dot_dimension_numbers<[1], [0], [0], [1], [0, 0, 1, 1], [], []>} : vector<64x128xf32>, vector<128x256xf32>, vector<64x256xf32> -> vector<64x256xf32>
    %c0_98 = arith.constant 0 : index
    %c0_99 = arith.constant 0 : index
    %245 = vector.load %arg10[%c0_98, %c0_99] : memref<1x256xf32, #tpu.memory_space<vmem>>, vector<1x256xf32>
    %246 = vector.broadcast %245 : vector<1x256xf32> to vector<64x256xf32>
    %247 = arith.addf %244, %246 : vector<64x256xf32>
    %248 = vector.shape_cast %247 : vector<64x256xf32> to vector<8x8x256xf32>
    %c0_100 = arith.constant 0 : index
    %c0_101 = arith.constant 0 : index
    %c0_102 = arith.constant 0 : index
    %249 = vector.load %arg11[%c0_100, %c0_101, %c0_102] : memref<8x8x256xf32, #tpu.memory_space<vmem>>, vector<8x8x256xf32>
    tpu.vector_store %arg11[%c0_100, %c0_101, %c0_102], %248 {strides = array<i32>} : memref<8x8x256xf32, #tpu.memory_space<vmem>>, vector<8x8x256xf32>,
    %c0_i32_103 = arith.constant 0 : i32
    %250 = arith.cmpi eq, %arg0, %c0_i32_103 : i32
    %251 = arith.extui %250 : i1 to i32
    %c0_i32_104 = arith.constant 0 : i32
    %252 = arith.cmpi ne, %251, %c0_i32_104 : i32
    scf.if %252 {
      %c0_105 = arith.constant 0 : index
      %c0_106 = arith.constant 0 : index
      %253 = vector.load %arg12[%c0_105, %c0_106] : memref<8x128xf32, #tpu.memory_space<vmem>>, vector<8x128xf32>
      tpu.vector_store %arg12[%c0_105, %c0_106], %234 {strides = array<i32>} : memref<8x128xf32, #tpu.memory_space<vmem>>, vector<8x128xf32>,
    } else {
    }
    return
  }
  func.func @transform_0(%arg0: i32) -> (i32, i32, i32) {
    %c0_i32 = arith.constant 0 : i32
    %c0_i32_0 = arith.constant 0 : i32
    %c0_i32_1 = arith.constant 0 : i32
    return %arg0, %c0_i32, %c0_i32_0 : i32, i32, i32
  }
  func.func @transform_1(%arg0: i32) -> (i32, i32) {
    %c0_i32 = arith.constant 0 : i32
    %c0_i32_0 = arith.constant 0 : i32
    %c0_i32_1 = arith.constant 0 : i32
    return %c0_i32, %c0_i32_0 : i32, i32
  }
  func.func @transform_2(%arg0: i32) -> (i32, i32) {
    %c0_i32 = arith.constant 0 : i32
    %c0_i32_0 = arith.constant 0 : i32
    %c0_i32_1 = arith.constant 0 : i32
    return %c0_i32, %c0_i32_0 : i32, i32
  }
  func.func @transform_3(%arg0: i32) -> (i32, i32) {
    %c0_i32 = arith.constant 0 : i32
    %c0_i32_0 = arith.constant 0 : i32
    %c0_i32_1 = arith.constant 0 : i32
    return %c0_i32, %c0_i32_0 : i32, i32
  }
  func.func @transform_4(%arg0: i32) -> (i32, i32) {
    %c0_i32 = arith.constant 0 : i32
    %c0_i32_0 = arith.constant 0 : i32
    %c0_i32_1 = arith.constant 0 : i32
    return %c0_i32, %c0_i32_0 : i32, i32
  }
  func.func @transform_5(%arg0: i32) -> (i32, i32) {
    %c0_i32 = arith.constant 0 : i32
    %c0_i32_0 = arith.constant 0 : i32
    %c0_i32_1 = arith.constant 0 : i32
    return %c0_i32, %c0_i32_0 : i32, i32
  }
  func.func @transform_6(%arg0: i32) -> (i32, i32) {
    %c0_i32 = arith.constant 0 : i32
    %c0_i32_0 = arith.constant 0 : i32
    %c0_i32_1 = arith.constant 0 : i32
    return %c0_i32, %c0_i32_0 : i32, i32
  }
  func.func @transform_7(%arg0: i32) -> (i32, i32) {
    %c0_i32 = arith.constant 0 : i32
    %c0_i32_0 = arith.constant 0 : i32
    %c0_i32_1 = arith.constant 0 : i32
    return %c0_i32, %c0_i32_0 : i32, i32
  }
  func.func @transform_8(%arg0: i32) -> (i32, i32) {
    %c0_i32 = arith.constant 0 : i32
    %c0_i32_0 = arith.constant 0 : i32
    %c0_i32_1 = arith.constant 0 : i32
    return %c0_i32, %c0_i32_0 : i32, i32
  }
  func.func @transform_9(%arg0: i32) -> (i32, i32) {
    %c0_i32 = arith.constant 0 : i32
    %c0_i32_0 = arith.constant 0 : i32
    %c0_i32_1 = arith.constant 0 : i32
    return %c0_i32, %c0_i32_0 : i32, i32
  }
  func.func @transform_10(%arg0: i32) -> (i32, i32, i32) {
    %c0_i32 = arith.constant 0 : i32
    %c0_i32_0 = arith.constant 0 : i32
    %c0_i32_1 = arith.constant 0 : i32
    return %arg0, %c0_i32, %c0_i32_0 : i32, i32, i32
  }
  func.func @transform_11(%arg0: i32) -> (i32, i32) {
    %c0_i32 = arith.constant 0 : i32
    %c0_i32_0 = arith.constant 0 : i32
    %c0_i32_1 = arith.constant 0 : i32
    return %c0_i32, %c0_i32_0 : i32, i32
  }
}

</mosaic_0001>

<llo_original>
// kernel: rnn_forward.1
$region0: #{rnn_forward.1}
  #allocation0 [shape = 'u32[]', space=smem, size = 0x4, offset = 0x4, fixed_abs, tag = 'smem constant byte address 0x4 - core index']
  #allocation1 [shape = 'u32[144,128]{1,0:T(1,128)}', space=vmem, size = 0x12000, scoped, tag = 'internal scratch']
  #allocation2 [shape = 'f32[8,256]{1,0:T(8,128)}', space=vmem, size = 0x2000, scoped, tag = 'scratch operand']
  #allocation3 [shape = 'f32[8,8,256]{2,1,0:T(8,128)}', space=vmem, size = 0x10000, scoped, tag = 'scratch operand']
  #allocation4 [shape = 'f32[8,8,128]{2,1,0:T(8,128)}', space=vmem, size = 0x8000, scoped, tag = 'scratch operand']
  %s0 = inlined_call_operand.vmem [shape: f32[8,8,128], index: 0, kind: input, shape index: {}]
  %s1 = inlined_call_operand.vmem [shape: f32[128,256], index: 1, kind: input, shape index: {}]
  %s2 = inlined_call_operand.vmem [shape: f32[1,256], index: 2, kind: input, shape index: {}]
  %s3 = inlined_call_operand.vmem [shape: f32[128,128], index: 3, kind: input, shape index: {}]
  %s4 = inlined_call_operand.vmem [shape: f32[128,128], index: 4, kind: input, shape index: {}]
  %s5 = inlined_call_operand.vmem [shape: f32[128,256], index: 5, kind: input, shape index: {}]
  %s6 = inlined_call_operand.vmem [shape: f32[1,256], index: 6, kind: input, shape index: {}]
  %s7 = inlined_call_operand.vmem [shape: f32[1,128], index: 7, kind: input, shape index: {}]
  %s8 = inlined_call_operand.vmem [shape: f32[128,256], index: 8, kind: input, shape index: {}]
  %s9 = inlined_call_operand.vmem [shape: f32[1,256], index: 9, kind: input, shape index: {}]
  %s10 = inlined_call_operand.hbm [shape: f32[8,8,256], index: 10, kind: output, shape index: {0}]
  %s11 = inlined_call_operand.hbm [shape: f32[8,128], index: 11, kind: output, shape index: {1}]
  %12 = xla_tuple %s10, %s11
  %s13 = sld [smem:[#allocation0]]
  $region66: #{rnn_forward.1} parent=0
    _
  %s15 = ssub.s32 1, %s13
  %s16 = scalar_select 0, %s15, %s13
  $region1: #{rnn_forward.1} parent=0
    #allocation5 [shape = 'u8[65536]{0}', space=vmem, size = 0x10000, scoped, tag = 'output window, operand 0, single buffered']
    #allocation6 [shape = 's32[1]{0}', space=sflag, size = 0x4, scoped, tag = 'scoped memory for rnn_forward.1']
    #allocation7 [shape = 'u8[4096]{0}', space=vmem, size = 0x1000, scoped, tag = 'output window, operand 1, single buffered']
    #allocation8 [shape = 's32[1]{0}', space=sflag, size = 0x4, scoped, tag = 'scoped memory for rnn_forward.1']
    %17 = vsyncpa [#allocation6], 0
    %18 = vsyncpa [#allocation8], 0
    // Predicated region
    $region2: #{rnn_forward.1} parent=1 // pred_check
      _
    $region3: #{rnn_forward.1} parent=1 // pred_check_branch
      %20 = sbr.rel (0) target = $region5
    $region4: #{rnn_forward.1} parent=1 // pred_region
      _
    $region5: #{rnn_forward.1} parent=1 // pred_fallthru
      _
    // Predicated region
    $region6: #{rnn_forward.1} parent=1 // pred_check
      _
    $region7: #{rnn_forward.1} parent=1 // pred_check_branch
      %22 = sbr.rel (0) target = $region9
    $region8: #{rnn_forward.1} parent=1 // pred_region
      _
    $region9: #{rnn_forward.1} parent=1 // pred_fallthru
      _
    // Predicated region
    $region10: #{rnn_forward.1} parent=1 // pred_check
      _
    $region11: #{rnn_forward.1} parent=1 // pred_check_branch
      %24 = sbr.rel (0) target = $region13
    $region12: #{rnn_forward.1} parent=1 // pred_region
      _
    $region13: #{rnn_forward.1} parent=1 // pred_fallthru
      _
    // Predicated region
    $region14: #{rnn_forward.1} parent=1 // pred_check
      _
    $region15: #{rnn_forward.1} parent=1 // pred_check_branch
      %26 = sbr.rel (0) target = $region17
    $region16: #{rnn_forward.1} parent=1 // pred_region
      _
    $region17: #{rnn_forward.1} parent=1 // pred_fallthru
      _
    // Predicated region
    $region18: #{rnn_forward.1} parent=1 // pred_check
      _
    $region19: #{rnn_forward.1} parent=1 // pred_check_branch
      %28 = sbr.rel (0) target = $region21
    $region20: #{rnn_forward.1} parent=1 // pred_region
      _
    $region21: #{rnn_forward.1} parent=1 // pred_fallthru
      _
    // Predicated region
    $region22: #{rnn_forward.1} parent=1 // pred_check
      _
    $region23: #{rnn_forward.1} parent=1 // pred_check_branch
      %30 = sbr.rel (0) target = $region25
    $region24: #{rnn_forward.1} parent=1 // pred_region
      _
    $region25: #{rnn_forward.1} parent=1 // pred_fallthru
      _
    // Predicated region
    $region26: #{rnn_forward.1} parent=1 // pred_check
      _
    $region27: #{rnn_forward.1} parent=1 // pred_check_branch
      %32 = sbr.rel (0) target = $region29
    $region28: #{rnn_forward.1} parent=1 // pred_region
      _
    $region29: #{rnn_forward.1} parent=1 // pred_fallthru
      _
    // Predicated region
    $region30: #{rnn_forward.1} parent=1 // pred_check
      _
    $region31: #{rnn_forward.1} parent=1 // pred_check_branch
      %34 = sbr.rel (0) target = $region33
    $region32: #{rnn_forward.1} parent=1 // pred_region
      _
    $region33: #{rnn_forward.1} parent=1 // pred_fallthru
      _
    // Predicated region
    $region34: #{rnn_forward.1} parent=1 // pred_check
      _
    $region35: #{rnn_forward.1} parent=1 // pred_check_branch
      %36 = sbr.rel (0) target = $region37
    $region36: #{rnn_forward.1} parent=1 // pred_region
      _
    $region37: #{rnn_forward.1} parent=1 // pred_fallthru
      _
    // Predicated region
    $region38: #{rnn_forward.1} parent=1 // pred_check
      _
    $region39: #{rnn_forward.1} parent=1 // pred_check_branch
      %38 = sbr.rel (0) target = $region41
    $region40: #{rnn_forward.1} parent=1 // pred_region
      _
    $region41: #{rnn_forward.1} parent=1 // pred_fallthru
      _
    %p39 = scmp.eq.s32.totalorder 0, 0
    // Predicated region
    $region42: #{rnn_forward.1} parent=1 // pred_check
      %p40 = pneg %p39
    $region43: #{rnn_forward.1} parent=1 // pred_check_branch
      %42 = sbr.rel (%p40) target = $region45
    $region44: #{rnn_forward.1} parent=1 // pred_region
      %43 = vst [vmem:[#allocation2] sm:$0xff] 0.0
      %44 = vst [vmem:[#allocation2 + $0x8] sm:$0xff] 0.0
    $region45: #{rnn_forward.1} parent=1 // pred_fallthru
      _
    %v45 = vld [vmem:[%s0] sm:$0xff]
    %v46 = vld [vmem:[%s0 + $0x8] sm:$0xff]
    %v47 = vld [vmem:[%s0 + $0x10] sm:$0xff]
    %v48 = vld [vmem:[%s0 + $0x18] sm:$0xff]
    %v49 = vld [vmem:[%s0 + $0x20] sm:$0xff]
    %v50 = vld [vmem:[%s0 + $0x28] sm:$0xff]
    %v51 = vld [vmem:[%s0 + $0x30] sm:$0xff]
    %v52 = vld [vmem:[%s0 + $0x38] sm:$0xff]
    %v53 = vld [vmem:[%s1] sm:$0xff]
    %v54 = vld [vmem:[%s1 + $0x8] sm:$0xff]
    %v55 = vld [vmem:[%s1 + $0x10] sm:$0xff]
    %v56 = vld [vmem:[%s1 + $0x18] sm:$0xff]
    %v57 = vld [vmem:[%s1 + $0x20] sm:$0xff]
    %v58 = vld [vmem:[%s1 + $0x28] sm:$0xff]
    %v59 = vld [vmem:[%s1 + $0x30] sm:$0xff]
    %v60 = vld [vmem:[%s1 + $0x38] sm:$0xff]
    %v61 = vld [vmem:[%s1 + $0x40] sm:$0xff]
    %v62 = vld [vmem:[%s1 + $0x48] sm:$0xff]
    %v63 = vld [vmem:[%s1 + $0x50] sm:$0xff]
    %v64 = vld [vmem:[%s1 + $0x58] sm:$0xff]
    %v65 = vld [vmem:[%s1 + $0x60] sm:$0xff]
    %v66 = vld [vmem:[%s1 + $0x68] sm:$0xff]
    %v67 = vld [vmem:[%s1 + $0x70] sm:$0xff]
    %v68 = vld [vmem:[%s1 + $0x78] sm:$0xff]
    %v69 = vld [vmem:[%s1 + $0x80] sm:$0xff]
    %v70 = vld [vmem:[%s1 + $0x88] sm:$0xff]
    %v71 = vld [vmem:[%s1 + $0x90] sm:$0xff]
    %v72 = vld [vmem:[%s1 + $0x98] sm:$0xff]
    %v73 = vld [vmem:[%s1 + $0xa0] sm:$0xff]
    %v74 = vld [vmem:[%s1 + $0xa8] sm:$0xff]
    %v75 = vld [vmem:[%s1 + $0xb0] sm:$0xff]
    %v76 = vld [vmem:[%s1 + $0xb8] sm:$0xff]
    %v77 = vld [vmem:[%s1 + $0xc0] sm:$0xff]
    %v78 = vld [vmem:[%s1 + $0xc8] sm:$0xff]
    %v79 = vld [vmem:[%s1 + $0xd0] sm:$0xff]
    %v80 = vld [vmem:[%s1 + $0xd8] sm:$0xff]
    %v81 = vld [vmem:[%s1 + $0xe0] sm:$0xff]
    %v82 = vld [vmem:[%s1 + $0xe8] sm:$0xff]
    %v83 = vld [vmem:[%s1 + $0xf0] sm:$0xff]
    %v84 = vld [vmem:[%s1 + $0xf8] sm:$0xff]
    %v85 = vld [vmem:[%s2] sm:$0x3]
    %v87 = vlaneseq
    %v88 = vshrl.u32 %v87, 7
    %v89 = vsub.s32 0, %v88
    %v90 = vrot.slane %v85, %v89
    %v91 = vlaneseq
    %v92 = vshrl.u32 %v91, 7
    %v93 = vsub.s32 1, %v92
    %v94 = vrot.slane %v85, %v93
    %97 = vmatprep.subr.mxu0 %v54
    %98 = vmatpush1.msra.mxu0 %v53
    %99 = vmatprep.subr.mxu0 %v56
    %100 = vmatpush1.msra.mxu0 %v55
    %101 = vmatprep.subr.mxu0 %v58
    %102 = vmatpush1.msra.mxu0 %v57
    %103 = vmatprep.subr.mxu0 %v60
    %104 = vmatpush1.msra.mxu0 %v59
    %105 = vmatprep.subr.mxu0 %v62
    %106 = vmatpush1.msra.mxu0 %v61
    %107 = vmatprep.subr.mxu0 %v64
    %108 = vmatpush1.msra.mxu0 %v63
    %109 = vmatprep.subr.mxu0 %v66
    %110 = vmatpush1.msra.mxu0 %v65
    %111 = vmatprep.subr.mxu0 %v68
    %112 = vmatpush1.msra.mxu0 %v67
    %113 = vmatprep.subr.mxu0 %v70
    %114 = vmatpush1.msra.mxu0 %v69
    %115 = vmatprep.subr.mxu0 %v72
    %116 = vmatpush1.msra.mxu0 %v71
    %117 = vmatprep.subr.mxu0 %v74
    %118 = vmatpush1.msra.mxu0 %v73
    %119 = vmatprep.subr.mxu0 %v76
    %120 = vmatpush1.msra.mxu0 %v75
    %121 = vmatprep.subr.mxu0 %v78
    %122 = vmatpush1.msra.mxu0 %v77
    %123 = vmatprep.subr.mxu0 %v80
    %124 = vmatpush1.msra.mxu0 %v79
    %125 = vmatprep.subr.mxu0 %v82
    %126 = vmatpush1.msra.mxu0 %v81
    %127 = vmatprep.subr.mxu0 %v84
    %128 = vmatpush1.msra.mxu0 %v83
    %129 = vmatprep.subr.mxu0 0.0
    %130 = vmatpush1.msra.mxu0 0.0
    %131 = vmatprep.subr.mxu0 0.0
    %132 = vmatpush1.msra.mxu0 0.0
    %133 = vmatprep.subr.mxu0 0.0
    %134 = vmatpush1.msra.mxu0 0.0
    %135 = vmatprep.subr.mxu0 0.0
    %136 = vmatpush1.msra.mxu0 0.0
    %137 = vmatprep.subr.mxu0 0.0
    %138 = vmatpush1.msra.mxu0 0.0
    %139 = vmatprep.subr.mxu0 0.0
    %140 = vmatpush1.msra.mxu0 0.0
    %141 = vmatprep.subr.mxu0 0.0
    %142 = vmatpush1.msra.mxu0 0.0
    %143 = vmatprep.subr.mxu0 0.0
    %144 = vmatpush1.msra.mxu0 0.0
    %145 = vmatprep.subr.mxu0 0.0
    %146 = vmatpush1.msra.mxu0 0.0
    %147 = vmatprep.subr.mxu0 0.0
    %148 = vmatpush1.msra.mxu0 0.0
    %149 = vmatprep.subr.mxu0 0.0
    %150 = vmatpush1.msra.mxu0 0.0
    %151 = vmatprep.subr.mxu0 0.0
    %152 = vmatpush1.msra.mxu0 0.0
    %153 = vmatprep.subr.mxu0 0.0
    %154 = vmatpush1.msra.mxu0 0.0
    %155 = vmatprep.subr.mxu0 0.0
    %156 = vmatpush1.msra.mxu0 0.0
    %157 = vmatprep.subr.mxu0 0.0
    %158 = vmatpush1.msra.mxu0 0.0
    %159 = vmatprep.subr.mxu0 0.0
    %160 = vmatpush1.msra.mxu0 0.0
    %161 = vmatprep.mubr.f32.mxu0 0.0
    %162 = vmatmul.mubr.f32.gmra.mrb[0].mxu0 %v45
    %v163 = vpop.f32.mrb[0].mxu0
    %v164 = vadd.f32 %v90, %v163
    %v165 = vpop.f32.mrb[0].mxu0
    %v166 = vadd.f32 %v94, %v165
    %167 = vmatprep.mubr.f32.mxu0 0.0
    %168 = vmatmul.mubr.f32.gmra.mrb[0].mxu0 %v46
    %v169 = vpop.f32.mrb[0].mxu0
    %v170 = vadd.f32 %v90, %v169
    %v171 = vpop.f32.mrb[0].mxu0
    %v172 = vadd.f32 %v94, %v171
    %173 = vmatprep.mubr.f32.mxu0 0.0
    %174 = vmatmul.mubr.f32.gmra.mrb[0].mxu0 %v47
    %v175 = vpop.f32.mrb[0].mxu0
    %v176 = vadd.f32 %v90, %v175
    %v177 = vpop.f32.mrb[0].mxu0
    %v178 = vadd.f32 %v94, %v177
    %179 = vmatprep.mubr.f32.mxu0 0.0
    %180 = vmatmul.mubr.f32.gmra.mrb[0].mxu0 %v48
    %v181 = vpop.f32.mrb[0].mxu0
    %v182 = vadd.f32 %v90, %v181
    %v183 = vpop.f32.mrb[0].mxu0
    %v184 = vadd.f32 %v94, %v183
    %185 = vmatprep.mubr.f32.mxu0 0.0
    %186 = vmatmul.mubr.f32.gmra.mrb[0].mxu0 %v49
    %v187 = vpop.f32.mrb[0].mxu0
    %v188 = vadd.f32 %v90, %v187
    %v189 = vpop.f32.mrb[0].mxu0
    %v190 = vadd.f32 %v94, %v189
    %191 = vmatprep.mubr.f32.mxu0 0.0
    %192 = vmatmul.mubr.f32.gmra.mrb[0].mxu0 %v50
    %v193 = vpop.f32.mrb[0].mxu0
    %v194 = vadd.f32 %v90, %v193
    %v195 = vpop.f32.mrb[0].mxu0
    %v196 = vadd.f32 %v94, %v195
    %197 = vmatprep.mubr.f32.mxu0 0.0
    %198 = vmatmul.mubr.f32.gmra.mrb[0].mxu0 %v51
    %v199 = vpop.f32.mrb[0].mxu0
    %v200 = vadd.f32 %v90, %v199
    %v201 = vpop.f32.mrb[0].mxu0
    %v202 = vadd.f32 %v94, %v201
    %203 = vmatprep.mubr.f32.mxu0 0.0
    %204 = vmatmul.mubr.f32.gmra.mrb[0].mxu0 %v52
    %v205 = vpop.f32.mrb[0].mxu0
    %v206 = vadd.f32 %v90, %v205
    %v207 = vpop.f32.mrb[0].mxu0
    %v208 = vadd.f32 %v94, %v207
    %209 = vdwg.mxu0
    %210 = vst [vmem:[#allocation3] sm:$0xff] %v164
    %211 = vst [vmem:[#allocation3 + $0x8] sm:$0xff] %v166
    %212 = vst [vmem:[#allocation3 + $0x10] sm:$0xff] %v170
    %213 = vst [vmem:[#allocation3 + $0x18] sm:$0xff] %v172
    %214 = vst [vmem:[#allocation3 + $0x20] sm:$0xff] %v176
    %215 = vst [vmem:[#allocation3 + $0x28] sm:$0xff] %v178
    %216 = vst [vmem:[#allocation3 + $0x30] sm:$0xff] %v182
    %217 = vst [vmem:[#allocation3 + $0x38] sm:$0xff] %v184
    %218 = vst [vmem:[#allocation3 + $0x40] sm:$0xff] %v188
    %219 = vst [vmem:[#allocation3 + $0x48] sm:$0xff] %v190
    %220 = vst [vmem:[#allocation3 + $0x50] sm:$0xff] %v194
    %221 = vst [vmem:[#allocation3 + $0x58] sm:$0xff] %v196
    %222 = vst [vmem:[#allocation3 + $0x60] sm:$0xff] %v200
    %223 = vst [vmem:[#allocation3 + $0x68] sm:$0xff] %v202
    %224 = vst [vmem:[#allocation3 + $0x70] sm:$0xff] %v206
    %225 = vst [vmem:[#allocation3 + $0x78] sm:$0xff] %v208
    %v226 = vld [vmem:[%s3] sm:$0xff]
    %v227 = vld [vmem:[%s3 + $0x8] sm:$0xff]
    %v228 = vld [vmem:[%s3 + $0x10] sm:$0xff]
    %v229 = vld [vmem:[%s3 + $0x18] sm:$0xff]
    %v230 = vld [vmem:[%s3 + $0x20] sm:$0xff]
    %v231 = vld [vmem:[%s3 + $0x28] sm:$0xff]
    %v232 = vld [vmem:[%s3 + $0x30] sm:$0xff]
    %v233 = vld [vmem:[%s3 + $0x38] sm:$0xff]
    %v234 = vld [vmem:[%s3 + $0x40] sm:$0xff]
    %v235 = vld [vmem:[%s3 + $0x48] sm:$0xff]
    %v236 = vld [vmem:[%s3 + $0x50] sm:$0xff]
    %v237 = vld [vmem:[%s3 + $0x58] sm:$0xff]
    %v238 = vld [vmem:[%s3 + $0x60] sm:$0xff]
    %v239 = vld [vmem:[%s3 + $0x68] sm:$0xff]
    %v240 = vld [vmem:[%s3 + $0x70] sm:$0xff]
    %v241 = vld [vmem:[%s3 + $0x78] sm:$0xff]
    %v242 = vld [vmem:[%s4] sm:$0xff]
    %v243 = vld [vmem:[%s4 + $0x8] sm:$0xff]
    %v244 = vld [vmem:[%s4 + $0x10] sm:$0xff]
    %v245 = vld [vmem:[%s4 + $0x18] sm:$0xff]
    %v246 = vld [vmem:[%s4 + $0x20] sm:$0xff]
    %v247 = vld [vmem:[%s4 + $0x28] sm:$0xff]
    %v248 = vld [vmem:[%s4 + $0x30] sm:$0xff]
    %v249 = vld [vmem:[%s4 + $0x38] sm:$0xff]
    %v250 = vld [vmem:[%s4 + $0x40] sm:$0xff]
    %v251 = vld [vmem:[%s4 + $0x48] sm:$0xff]
    %v252 = vld [vmem:[%s4 + $0x50] sm:$0xff]
    %v253 = vld [vmem:[%s4 + $0x58] sm:$0xff]
    %v254 = vld [vmem:[%s4 + $0x60] sm:$0xff]
    %v255 = vld [vmem:[%s4 + $0x68] sm:$0xff]
    %v256 = vld [vmem:[%s4 + $0x70] sm:$0xff]
    %v257 = vld [vmem:[%s4 + $0x78] sm:$0xff]
    %v258 = vld [vmem:[%s5] sm:$0xff]
    %v259 = vld [vmem:[%s5 + $0x8] sm:$0xff]
    %v260 = vld [vmem:[%s5 + $0x10] sm:$0xff]
    %v261 = vld [vmem:[%s5 + $0x18] sm:$0xff]
    %v262 = vld [vmem:[%s5 + $0x20] sm:$0xff]
    %v263 = vld [vmem:[%s5 + $0x28] sm:$0xff]
    %v264 = vld [vmem:[%s5 + $0x30] sm:$0xff]
    %v265 = vld [vmem:[%s5 + $0x38] sm:$0xff]
    %v266 = vld [vmem:[%s5 + $0x40] sm:$0xff]
    %v267 = vld [vmem:[%s5 + $0x48] sm:$0xff]
    %v268 = vld [vmem:[%s5 + $0x50] sm:$0xff]
    %v269 = vld [vmem:[%s5 + $0x58] sm:$0xff]
    %v270 = vld [vmem:[%s5 + $0x60] sm:$0xff]
    %v271 = vld [vmem:[%s5 + $0x68] sm:$0xff]
    %v272 = vld [vmem:[%s5 + $0x70] sm:$0xff]
    %v273 = vld [vmem:[%s5 + $0x78] sm:$0xff]
    %v274 = vld [vmem:[%s5 + $0x80] sm:$0xff]
    %v275 = vld [vmem:[%s5 + $0x88] sm:$0xff]
    %v276 = vld [vmem:[%s5 + $0x90] sm:$0xff]
    %v277 = vld [vmem:[%s5 + $0x98] sm:$0xff]
    %v278 = vld [vmem:[%s5 + $0xa0] sm:$0xff]
    %v279 = vld [vmem:[%s5 + $0xa8] sm:$0xff]
    %v280 = vld [vmem:[%s5 + $0xb0] sm:$0xff]
    %v281 = vld [vmem:[%s5 + $0xb8] sm:$0xff]
    %v282 = vld [vmem:[%s5 + $0xc0] sm:$0xff]
    %v283 = vld [vmem:[%s5 + $0xc8] sm:$0xff]
    %v284 = vld [vmem:[%s5 + $0xd0] sm:$0xff]
    %v285 = vld [vmem:[%s5 + $0xd8] sm:$0xff]
    %v286 = vld [vmem:[%s5 + $0xe0] sm:$0xff]
    %v287 = vld [vmem:[%s5 + $0xe8] sm:$0xff]
    %v288 = vld [vmem:[%s5 + $0xf0] sm:$0xff]
    %v289 = vld [vmem:[%s5 + $0xf8] sm:$0xff]
    %v290 = vld [vmem:[%s6] sm:$0x3]
    %v292 = vlaneseq
    %v293 = vshrl.u32 %v292, 7
    %v294 = vsub.s32 0, %v293
    %v295 = vrot.slane %v290, %v294
    %v296 = vlaneseq
    %v297 = vshrl.u32 %v296, 7
    %v298 = vsub.s32 1, %v297
    %v299 = vrot.slane %v290, %v298
    %v302 = vld [vmem:[%s7] sm:$0x1]
    %v304 = vlaneseq
    %v305 = vshrl.u32 %v304, 7
    %v306 = vsub.s32 0, %v305
    %v307 = vrot.slane %v302, %v306
    %v309 = vld [vmem:[#allocation2] sm:$0xff]
    %v310 = vld [vmem:[#allocation2 + $0x8] sm:$0xff]
    %v311 = vld [vmem:[#allocation3] sm:$0xff]
    %v312 = vld [vmem:[#allocation3 + $0x8] sm:$0xff]
    %313 = vmatprep.subr.mxu0 0.0
    %314 = vmatpush1.msra.mxu0 %v226
    %315 = vmatprep.subr.mxu0 0.0
    %316 = vmatpush1.msra.mxu0 %v227
    %317 = vmatprep.subr.mxu0 0.0
    %318 = vmatpush1.msra.mxu0 %v228
    %319 = vmatprep.subr.mxu0 0.0
    %320 = vmatpush1.msra.mxu0 %v229
    %321 = vmatprep.subr.mxu0 0.0
    %322 = vmatpush1.msra.mxu0 %v230
    %323 = vmatprep.subr.mxu0 0.0
    %324 = vmatpush1.msra.mxu0 %v231
    %325 = vmatprep.subr.mxu0 0.0
    %326 = vmatpush1.msra.mxu0 %v232
    %327 = vmatprep.subr.mxu0 0.0
    %328 = vmatpush1.msra.mxu0 %v233
    %329 = vmatprep.subr.mxu0 0.0
    %330 = vmatpush1.msra.mxu0 %v234
    %331 = vmatprep.subr.mxu0 0.0
    %332 = vmatpush1.msra.mxu0 %v235
    %333 = vmatprep.subr.mxu0 0.0
    %334 = vmatpush1.msra.mxu0 %v236
    %335 = vmatprep.subr.mxu0 0.0
    %336 = vmatpush1.msra.mxu0 %v237
    %337 = vmatprep.subr.mxu0 0.0
    %338 = vmatpush1.msra.mxu0 %v238
    %339 = vmatprep.subr.mxu0 0.0
    %340 = vmatpush1.msra.mxu0 %v239
    %341 = vmatprep.subr.mxu0 0.0
    %342 = vmatpush1.msra.mxu0 %v240
    %343 = vmatprep.subr.mxu0 0.0
    %344 = vmatpush1.msra.mxu0 %v241
    %345 = vmatprep.subr.mxu0 0.0
    %346 = vmatpush1.msra.mxu0 0.0
    %347 = vmatprep.subr.mxu0 0.0
    %348 = vmatpush1.msra.mxu0 0.0
    %349 = vmatprep.subr.mxu0 0.0
    %350 = vmatpush1.msra.mxu0 0.0
    %351 = vmatprep.subr.mxu0 0.0
    %352 = vmatpush1.msra.mxu0 0.0
    %353 = vmatprep.subr.mxu0 0.0
    %354 = vmatpush1.msra.mxu0 0.0
    %355 = vmatprep.subr.mxu0 0.0
    %356 = vmatpush1.msra.mxu0 0.0
    %357 = vmatprep.subr.mxu0 0.0
    %358 = vmatpush1.msra.mxu0 0.0
    %359 = vmatprep.subr.mxu0 0.0
    %360 = vmatpush1.msra.mxu0 0.0
    %361 = vmatprep.subr.mxu0 0.0
    %362 = vmatpush1.msra.mxu0 0.0
    %363 = vmatprep.subr.mxu0 0.0
    %364 = vmatpush1.msra.mxu0 0.0
    %365 = vmatprep.subr.mxu0 0.0
    %366 = vmatpush1.msra.mxu0 0.0
    %367 = vmatprep.subr.mxu0 0.0
    %368 = vmatpush1.msra.mxu0 0.0
    %369 = vmatprep.subr.mxu0 0.0
    %370 = vmatpush1.msra.mxu0 0.0
    %371 = vmatprep.subr.mxu0 0.0
    %372 = vmatpush1.msra.mxu0 0.0
    %373 = vmatprep.subr.mxu0 0.0
    %374 = vmatpush1.msra.mxu0 0.0
    %375 = vmatprep.subr.mxu0 0.0
    %376 = vmatpush1.msra.mxu0 0.0
    %377 = vmatprep.mubr.f32.mxu0 0.0
    %378 = vmatmul.mubr.f32.gmra.mrb[0].mxu0 %v309
    %v379 = vpop.f32.mrb[0].mxu0
    %v380 = vadd.f32 0.0, %v379
    %v381 = vpop.f32.mrb[0].mxu0
    %382 = vdwg.mxu0
    %v383 = vadd.f32 %v311, %v380
    %v384 = vtanh.pop %v383
    %385 = vmatprep.subr.mxu0 %v259
    %386 = vmatpush1.msra.mxu0 %v258
    %387 = vmatprep.subr.mxu0 %v261
    %388 = vmatpush1.msra.mxu0 %v260
    %389 = vmatprep.subr.mxu0 %v263
    %390 = vmatpush1.msra.mxu0 %v262
    %391 = vmatprep.subr.mxu0 %v265
    %392 = vmatpush1.msra.mxu0 %v264
    %393 = vmatprep.subr.mxu0 %v267
    %394 = vmatpush1.msra.mxu0 %v266
    %395 = vmatprep.subr.mxu0 %v269
    %396 = vmatpush1.msra.mxu0 %v268
    %397 = vmatprep.subr.mxu0 %v271
    %398 = vmatpush1.msra.mxu0 %v270
    %399 = vmatprep.subr.mxu0 %v273
    %400 = vmatpush1.msra.mxu0 %v272
    %401 = vmatprep.subr.mxu0 %v275
    %402 = vmatpush1.msra.mxu0 %v274
    %403 = vmatprep.subr.mxu0 %v277
    %404 = vmatpush1.msra.mxu0 %v276
    %405 = vmatprep.subr.mxu0 %v279
    %406 = vmatpush1.msra.mxu0 %v278
    %407 = vmatprep.subr.mxu0 %v281
    %408 = vmatpush1.msra.mxu0 %v280
    %409 = vmatprep.subr.mxu0 %v283
    %410 = vmatpush1.msra.mxu0 %v282
    %411 = vmatprep.subr.mxu0 %v285
    %412 = vmatpush1.msra.mxu0 %v284
    %413 = vmatprep.subr.mxu0 %v287
    %414 = vmatpush1.msra.mxu0 %v286
    %415 = vmatprep.subr.mxu0 %v289
    %416 = vmatpush1.msra.mxu0 %v288
    %417 = vmatprep.subr.mxu0 0.0
    %418 = vmatpush1.msra.mxu0 0.0
    %419 = vmatprep.subr.mxu0 0.0
    %420 = vmatpush1.msra.mxu0 0.0
    %421 = vmatprep.subr.mxu0 0.0
    %422 = vmatpush1.msra.mxu0 0.0
    %423 = vmatprep.subr.mxu0 0.0
    %424 = vmatpush1.msra.mxu0 0.0
    %425 = vmatprep.subr.mxu0 0.0
    %426 = vmatpush1.msra.mxu0 0.0
    %427 = vmatprep.subr.mxu0 0.0
    %428 = vmatpush1.msra.mxu0 0.0
    %429 = vmatprep.subr.mxu0 0.0
    %430 = vmatpush1.msra.mxu0 0.0
    %431 = vmatprep.subr.mxu0 0.0
    %432 = vmatpush1.msra.mxu0 0.0
    %433 = vmatprep.subr.mxu0 0.0
    %434 = vmatpush1.msra.mxu0 0.0
    %435 = vmatprep.subr.mxu0 0.0
    %436 = vmatpush1.msra.mxu0 0.0
    %437 = vmatprep.subr.mxu0 0.0
    %438 = vmatpush1.msra.mxu0 0.0
    %439 = vmatprep.subr.mxu0 0.0
    %440 = vmatpush1.msra.mxu0 0.0
    %441 = vmatprep.subr.mxu0 0.0
    %442 = vmatpush1.msra.mxu0 0.0
    %443 = vmatprep.subr.mxu0 0.0
    %444 = vmatpush1.msra.mxu0 0.0
    %445 = vmatprep.subr.mxu0 0.0
    %446 = vmatpush1.msra.mxu0 0.0
    %447 = vmatprep.subr.mxu0 0.0
    %448 = vmatpush1.msra.mxu0 0.0
    %449 = vmatprep.mubr.f32.mxu0 0.0
    %450 = vmatmul.mubr.f32.gmra.mrb[0].mxu0 %v384
    %v451 = vpop.f32.mrb[0].mxu0
    %v452 = vadd.f32 %v295, %v451
    %v453 = vpop.f32.mrb[0].mxu0
    %v454 = vadd.f32 %v299, %v453
    %455 = vdwg.mxu0
    %v456 = vxor.u32 %v452, 2147483648
    %v457 = vxor.u32 %v454, 2147483648
    %v458 = vmul.f32 %v456, 1.442695
    %v459 = vpow.pop %v458
    %v460 = vmul.f32 %v457, 1.442695
    %v461 = vpow.pop %v460
    %v462 = vadd.f32 %v459, 1.0
    %v463 = vadd.f32 %v461, 1.0
    %v464 = vrcp.pop %v462
    %v465 = vmul.f32 1.0, %v464
    %v466 = vrcp.pop %v463
    %v467 = vmul.f32 1.0, %v466
    %v468 = vmul.f32 %v465, %v312
    %469 = vmatprep.subr.mxu0 0.0
    %470 = vmatpush1.msra.mxu0 %v242
    %471 = vmatprep.subr.mxu0 0.0
    %472 = vmatpush1.msra.mxu0 %v243
    %473 = vmatprep.subr.mxu0 0.0
    %474 = vmatpush1.msra.mxu0 %v244
    %475 = vmatprep.subr.mxu0 0.0
    %476 = vmatpush1.msra.mxu0 %v245
    %477 = vmatprep.subr.mxu0 0.0
    %478 = vmatpush1.msra.mxu0 %v246
    %479 = vmatprep.subr.mxu0 0.0
    %480 = vmatpush1.msra.mxu0 %v247
    %481 = vmatprep.subr.mxu0 0.0
    %482 = vmatpush1.msra.mxu0 %v248
    %483 = vmatprep.subr.mxu0 0.0
    %484 = vmatpush1.msra.mxu0 %v249
    %485 = vmatprep.subr.mxu0 0.0
    %486 = vmatpush1.msra.mxu0 %v250
    %487 = vmatprep.subr.mxu0 0.0
    %488 = vmatpush1.msra.mxu0 %v251
    %489 = vmatprep.subr.mxu0 0.0
    %490 = vmatpush1.msra.mxu0 %v252
    %491 = vmatprep.subr.mxu0 0.0
    %492 = vmatpush1.msra.mxu0 %v253
    %493 = vmatprep.subr.mxu0 0.0
    %494 = vmatpush1.msra.mxu0 %v254
    %495 = vmatprep.subr.mxu0 0.0
    %496 = vmatpush1.msra.mxu0 %v255
    %497 = vmatprep.subr.mxu0 0.0
    %498 = vmatpush1.msra.mxu0 %v256
    %499 = vmatprep.subr.mxu0 0.0
    %500 = vmatpush1.msra.mxu0 %v257
    %501 = vmatprep.subr.mxu0 0.0
    %502 = vmatpush1.msra.mxu0 0.0
    %503 = vmatprep.subr.mxu0 0.0
    %504 = vmatpush1.msra.mxu0 0.0
    %505 = vmatprep.subr.mxu0 0.0
    %506 = vmatpush1.msra.mxu0 0.0
    %507 = vmatprep.subr.mxu0 0.0
    %508 = vmatpush1.msra.mxu0 0.0
    %509 = vmatprep.subr.mxu0 0.0
    %510 = vmatpush1.msra.mxu0 0.0
    %511 = vmatprep.subr.mxu0 0.0
    %512 = vmatpush1.msra.mxu0 0.0
    %513 = vmatprep.subr.mxu0 0.0
    %514 = vmatpush1.msra.mxu0 0.0
    %515 = vmatprep.subr.mxu0 0.0
    %516 = vmatpush1.msra.mxu0 0.0
    %517 = vmatprep.subr.mxu0 0.0
    %518 = vmatpush1.msra.mxu0 0.0
    %519 = vmatprep.subr.mxu0 0.0
    %520 = vmatpush1.msra.mxu0 0.0
    %521 = vmatprep.subr.mxu0 0.0
    %522 = vmatpush1.msra.mxu0 0.0
    %523 = vmatprep.subr.mxu0 0.0
    %524 = vmatpush1.msra.mxu0 0.0
    %525 = vmatprep.subr.mxu0 0.0
    %526 = vmatpush1.msra.mxu0 0.0
    %527 = vmatprep.subr.mxu0 0.0
    %528 = vmatpush1.msra.mxu0 0.0
    %529 = vmatprep.subr.mxu0 0.0
    %530 = vmatpush1.msra.mxu0 0.0
    %531 = vmatprep.subr.mxu0 0.0
    %532 = vmatpush1.msra.mxu0 0.0
    %533 = vmatprep.mubr.f32.mxu0 0.0
    %534 = vmatmul.mubr.f32.gmra.mrb[0].mxu0 %v310
    %v535 = vpop.f32.mrb[0].mxu0
    %v536 = vadd.f32 %v307, %v535
    %v537 = vpop.f32.mrb[0].mxu0
    %538 = vdwg.mxu0
    %v539 = vmul.f32 %v467, %v536
    %v540 = vadd.f32 %v468, %v539
    %v541 = vtanh.pop %v540
    %542 = vst [vmem:[#allocation4] sm:$0xff] %v541
    %s543 = scalar_lea.vmem [#allocation3], 16
    %v544 = vld [vmem:[%s543] sm:$0xff]
    %v545 = vld [vmem:[%s543 + $0x8] sm:$0xff]
    %546 = vmatprep.subr.mxu0 0.0
    %547 = vmatpush1.msra.mxu0 %v226
    %548 = vmatprep.subr.mxu0 0.0
    %549 = vmatpush1.msra.mxu0 %v227
    %550 = vmatprep.subr.mxu0 0.0
    %551 = vmatpush1.msra.mxu0 %v228
    %552 = vmatprep.subr.mxu0 0.0
    %553 = vmatpush1.msra.mxu0 %v229
    %554 = vmatprep.subr.mxu0 0.0
    %555 = vmatpush1.msra.mxu0 %v230
    %556 = vmatprep.subr.mxu0 0.0
    %557 = vmatpush1.msra.mxu0 %v231
    %558 = vmatprep.subr.mxu0 0.0
    %559 = vmatpush1.msra.mxu0 %v232
    %560 = vmatprep.subr.mxu0 0.0
    %561 = vmatpush1.msra.mxu0 %v233
    %562 = vmatprep.subr.mxu0 0.0
    %563 = vmatpush1.msra.mxu0 %v234
    %564 = vmatprep.subr.mxu0 0.0
    %565 = vmatpush1.msra.mxu0 %v235
    %566 = vmatprep.subr.mxu0 0.0
    %567 = vmatpush1.msra.mxu0 %v236
    %568 = vmatprep.subr.mxu0 0.0
    %569 = vmatpush1.msra.mxu0 %v237
    %570 = vmatprep.subr.mxu0 0.0
    %571 = vmatpush1.msra.mxu0 %v238
    %572 = vmatprep.subr.mxu0 0.0
    %573 = vmatpush1.msra.mxu0 %v239
    %574 = vmatprep.subr.mxu0 0.0
    %575 = vmatpush1.msra.mxu0 %v240
    %576 = vmatprep.subr.mxu0 0.0
    %577 = vmatpush1.msra.mxu0 %v241
    %578 = vmatprep.subr.mxu0 0.0
    %579 = vmatpush1.msra.mxu0 0.0
    %580 = vmatprep.subr.mxu0 0.0
    %581 = vmatpush1.msra.mxu0 0.0
    %582 = vmatprep.subr.mxu0 0.0
    %583 = vmatpush1.msra.mxu0 0.0
    %584 = vmatprep.subr.mxu0 0.0
    %585 = vmatpush1.msra.mxu0 0.0
    %586 = vmatprep.subr.mxu0 0.0
    %587 = vmatpush1.msra.mxu0 0.0
    %588 = vmatprep.subr.mxu0 0.0
    %589 = vmatpush1.msra.mxu0 0.0
    %590 = vmatprep.subr.mxu0 0.0
    %591 = vmatpush1.msra.mxu0 0.0
    %592 = vmatprep.subr.mxu0 0.0
    %593 = vmatpush1.msra.mxu0 0.0
    %594 = vmatprep.subr.mxu0 0.0
    %595 = vmatpush1.msra.mxu0 0.0
    %596 = vmatprep.subr.mxu0 0.0
    %597 = vmatpush1.msra.mxu0 0.0
    %598 = vmatprep.subr.mxu0 0.0
    %599 = vmatpush1.msra.mxu0 0.0
    %600 = vmatprep.subr.mxu0 0.0
    %601 = vmatpush1.msra.mxu0 0.0
    %602 = vmatprep.subr.mxu0 0.0
    %603 = vmatpush1.msra.mxu0 0.0
    %604 = vmatprep.subr.mxu0 0.0
    %605 = vmatpush1.msra.mxu0 0.0
    %606 = vmatprep.subr.mxu0 0.0
    %607 = vmatpush1.msra.mxu0 0.0
    %608 = vmatprep.subr.mxu0 0.0
    %609 = vmatpush1.msra.mxu0 0.0
    %610 = vmatprep.mubr.f32.mxu0 0.0
    %611 = vmatmul.mubr.f32.gmra.mrb[0].mxu0 %v384
    %v612 = vpop.f32.mrb[0].mxu0
    %v613 = vadd.f32 0.0, %v612
    %v614 = vpop.f32.mrb[0].mxu0
    %615 = vdwg.mxu0
    %v616 = vadd.f32 %v544, %v613
    %v617 = vtanh.pop %v616
    %618 = vmatprep.subr.mxu0 %v259
    %619 = vmatpush1.msra.mxu0 %v258
    %620 = vmatprep.subr.mxu0 %v261
    %621 = vmatpush1.msra.mxu0 %v260
    %622 = vmatprep.subr.mxu0 %v263
    %623 = vmatpush1.msra.mxu0 %v262
    %624 = vmatprep.subr.mxu0 %v265
    %625 = vmatpush1.msra.mxu0 %v264
    %626 = vmatprep.subr.mxu0 %v267
    %627 = vmatpush1.msra.mxu0 %v266
    %628 = vmatprep.subr.mxu0 %v269
    %629 = vmatpush1.msra.mxu0 %v268
    %630 = vmatprep.subr.mxu0 %v271
    %631 = vmatpush1.msra.mxu0 %v270
    %632 = vmatprep.subr.mxu0 %v273
    %633 = vmatpush1.msra.mxu0 %v272
    %634 = vmatprep.subr.mxu0 %v275
    %635 = vmatpush1.msra.mxu0 %v274
    %636 = vmatprep.subr.mxu0 %v277
    %637 = vmatpush1.msra.mxu0 %v276
    %638 = vmatprep.subr.mxu0 %v279
    %639 = vmatpush1.msra.mxu0 %v278
    %640 = vmatprep.subr.mxu0 %v281
    %641 = vmatpush1.msra.mxu0 %v280
    %642 = vmatprep.subr.mxu0 %v283
    %643 = vmatpush1.msra.mxu0 %v282
    %644 = vmatprep.subr.mxu0 %v285
    %645 = vmatpush1.msra.mxu0 %v284
    %646 = vmatprep.subr.mxu0 %v287
    %647 = vmatpush1.msra.mxu0 %v286
    %648 = vmatprep.subr.mxu0 %v289
    %649 = vmatpush1.msra.mxu0 %v288
    %650 = vmatprep.subr.mxu0 0.0
    %651 = vmatpush1.msra.mxu0 0.0
    %652 = vmatprep.subr.mxu0 0.0
    %653 = vmatpush1.msra.mxu0 0.0
    %654 = vmatprep.subr.mxu0 0.0
    %655 = vmatpush1.msra.mxu0 0.0
    %656 = vmatprep.subr.mxu0 0.0
    %657 = vmatpush1.msra.mxu0 0.0
    %658 = vmatprep.subr.mxu0 0.0
    %659 = vmatpush1.msra.mxu0 0.0
    %660 = vmatprep.subr.mxu0 0.0
    %661 = vmatpush1.msra.mxu0 0.0
    %662 = vmatprep.subr.mxu0 0.0
    %663 = vmatpush1.msra.mxu0 0.0
    %664 = vmatprep.subr.mxu0 0.0
    %665 = vmatpush1.msra.mxu0 0.0
    %666 = vmatprep.subr.mxu0 0.0
    %667 = vmatpush1.msra.mxu0 0.0
    %668 = vmatprep.subr.mxu0 0.0
    %669 = vmatpush1.msra.mxu0 0.0
    %670 = vmatprep.subr.mxu0 0.0
    %671 = vmatpush1.msra.mxu0 0.0
    %672 = vmatprep.subr.mxu0 0.0
    %673 = vmatpush1.msra.mxu0 0.0
    %674 = vmatprep.subr.mxu0 0.0
    %675 = vmatpush1.msra.mxu0 0.0
    %676 = vmatprep.subr.mxu0 0.0
    %677 = vmatpush1.msra.mxu0 0.0
    %678 = vmatprep.subr.mxu0 0.0
    %679 = vmatpush1.msra.mxu0 0.0
    %680 = vmatprep.subr.mxu0 0.0
    %681 = vmatpush1.msra.mxu0 0.0
    %682 = vmatprep.mubr.f32.mxu0 0.0
    %683 = vmatmul.mubr.f32.gmra.mrb[0].mxu0 %v617
    %v684 = vpop.f32.mrb[0].mxu0
    %v685 = vadd.f32 %v295, %v684
    %v686 = vpop.f32.mrb[0].mxu0
    %v687 = vadd.f32 %v299, %v686
    %688 = vdwg.mxu0
    %v689 = vxor.u32 %v685, 2147483648
    %v690 = vxor.u32 %v687, 2147483648
    %v691 = vmul.f32 %v689, 1.442695
    %v692 = vpow.pop %v691
    %v693 = vmul.f32 %v690, 1.442695
    %v694 = vpow.pop %v693
    %v695 = vadd.f32 %v692, 1.0
    %v696 = vadd.f32 %v694, 1.0
    %v697 = vrcp.pop %v695
    %v698 = vmul.f32 1.0, %v697
    %v699 = vrcp.pop %v696
    %v700 = vmul.f32 1.0, %v699
    %v701 = vmul.f32 %v698, %v545
    %702 = vmatprep.subr.mxu0 0.0
    %703 = vmatpush1.msra.mxu0 %v242
    %704 = vmatprep.subr.mxu0 0.0
    %705 = vmatpush1.msra.mxu0 %v243
    %706 = vmatprep.subr.mxu0 0.0
    %707 = vmatpush1.msra.mxu0 %v244
    %708 = vmatprep.subr.mxu0 0.0
    %709 = vmatpush1.msra.mxu0 %v245
    %710 = vmatprep.subr.mxu0 0.0
    %711 = vmatpush1.msra.mxu0 %v246
    %712 = vmatprep.subr.mxu0 0.0
    %713 = vmatpush1.msra.mxu0 %v247
    %714 = vmatprep.subr.mxu0 0.0
    %715 = vmatpush1.msra.mxu0 %v248
    %716 = vmatprep.subr.mxu0 0.0
    %717 = vmatpush1.msra.mxu0 %v249
    %718 = vmatprep.subr.mxu0 0.0
    %719 = vmatpush1.msra.mxu0 %v250
    %720 = vmatprep.subr.mxu0 0.0
    %721 = vmatpush1.msra.mxu0 %v251
    %722 = vmatprep.subr.mxu0 0.0
    %723 = vmatpush1.msra.mxu0 %v252
    %724 = vmatprep.subr.mxu0 0.0
    %725 = vmatpush1.msra.mxu0 %v253
    %726 = vmatprep.subr.mxu0 0.0
    %727 = vmatpush1.msra.mxu0 %v254
    %728 = vmatprep.subr.mxu0 0.0
    %729 = vmatpush1.msra.mxu0 %v255
    %730 = vmatprep.subr.mxu0 0.0
    %731 = vmatpush1.msra.mxu0 %v256
    %732 = vmatprep.subr.mxu0 0.0
    %733 = vmatpush1.msra.mxu0 %v257
    %734 = vmatprep.subr.mxu0 0.0
    %735 = vmatpush1.msra.mxu0 0.0
    %736 = vmatprep.subr.mxu0 0.0
    %737 = vmatpush1.msra.mxu0 0.0
    %738 = vmatprep.subr.mxu0 0.0
    %739 = vmatpush1.msra.mxu0 0.0
    %740 = vmatprep.subr.mxu0 0.0
    %741 = vmatpush1.msra.mxu0 0.0
    %742 = vmatprep.subr.mxu0 0.0
    %743 = vmatpush1.msra.mxu0 0.0
    %744 = vmatprep.subr.mxu0 0.0
    %745 = vmatpush1.msra.mxu0 0.0
    %746 = vmatprep.subr.mxu0 0.0
    %747 = vmatpush1.msra.mxu0 0.0
    %748 = vmatprep.subr.mxu0 0.0
    %749 = vmatpush1.msra.mxu0 0.0
    %750 = vmatprep.subr.mxu0 0.0
    %751 = vmatpush1.msra.mxu0 0.0
    %752 = vmatprep.subr.mxu0 0.0
    %753 = vmatpush1.msra.mxu0 0.0
    %754 = vmatprep.subr.mxu0 0.0
    %755 = vmatpush1.msra.mxu0 0.0
    %756 = vmatprep.subr.mxu0 0.0
    %757 = vmatpush1.msra.mxu0 0.0
    %758 = vmatprep.subr.mxu0 0.0
    %759 = vmatpush1.msra.mxu0 0.0
    %760 = vmatprep.subr.mxu0 0.0
    %761 = vmatpush1.msra.mxu0 0.0
    %762 = vmatprep.subr.mxu0 0.0
    %763 = vmatpush1.msra.mxu0 0.0
    %764 = vmatprep.subr.mxu0 0.0
    %765 = vmatpush1.msra.mxu0 0.0
    %766 = vmatprep.mubr.f32.mxu0 0.0
    %767 = vmatmul.mubr.f32.gmra.mrb[0].mxu0 %v541
    %v768 = vpop.f32.mrb[0].mxu0
    %v769 = vadd.f32 %v307, %v768
    %v770 = vpop.f32.mrb[0].mxu0
    %771 = vdwg.mxu0
    %v772 = vmul.f32 %v700, %v769
    %v773 = vadd.f32 %v701, %v772
    %v774 = vtanh.pop %v773
    %s775 = scalar_lea.vmem [#allocation4], 8
    %776 = vst [vmem:[%s775] sm:$0xff] %v774
    %s777 = scalar_lea.vmem [#allocation3], 32
    %v778 = vld [vmem:[%s777] sm:$0xff]
    %v779 = vld [vmem:[%s777 + $0x8] sm:$0xff]
    %780 = vmatprep.subr.mxu0 0.0
    %781 = vmatpush1.msra.mxu0 %v226
    %782 = vmatprep.subr.mxu0 0.0
    %783 = vmatpush1.msra.mxu0 %v227
    %784 = vmatprep.subr.mxu0 0.0
    %785 = vmatpush1.msra.mxu0 %v228
    %786 = vmatprep.subr.mxu0 0.0
    %787 = vmatpush1.msra.mxu0 %v229
    %788 = vmatprep.subr.mxu0 0.0
    %789 = vmatpush1.msra.mxu0 %v230
    %790 = vmatprep.subr.mxu0 0.0
    %791 = vmatpush1.msra.mxu0 %v231
    %792 = vmatprep.subr.mxu0 0.0
    %793 = vmatpush1.msra.mxu0 %v232
    %794 = vmatprep.subr.mxu0 0.0
    %795 = vmatpush1.msra.mxu0 %v233
    %796 = vmatprep.subr.mxu0 0.0
    %797 = vmatpush1.msra.mxu0 %v234
    %798 = vmatprep.subr.mxu0 0.0
    %799 = vmatpush1.msra.mxu0 %v235
    %800 = vmatprep.subr.mxu0 0.0
    %801 = vmatpush1.msra.mxu0 %v236
    %802 = vmatprep.subr.mxu0 0.0
    %803 = vmatpush1.msra.mxu0 %v237
    %804 = vmatprep.subr.mxu0 0.0
    %805 = vmatpush1.msra.mxu0 %v238
    %806 = vmatprep.subr.mxu0 0.0
    %807 = vmatpush1.msra.mxu0 %v239
    %808 = vmatprep.subr.mxu0 0.0
    %809 = vmatpush1.msra.mxu0 %v240
    %810 = vmatprep.subr.mxu0 0.0
    %811 = vmatpush1.msra.mxu0 %v241
    %812 = vmatprep.subr.mxu0 0.0
    %813 = vmatpush1.msra.mxu0 0.0
    %814 = vmatprep.subr.mxu0 0.0
    %815 = vmatpush1.msra.mxu0 0.0
    %816 = vmatprep.subr.mxu0 0.0
    %817 = vmatpush1.msra.mxu0 0.0
    %818 = vmatprep.subr.mxu0 0.0
    %819 = vmatpush1.msra.mxu0 0.0
    %820 = vmatprep.subr.mxu0 0.0
    %821 = vmatpush1.msra.mxu0 0.0
    %822 = vmatprep.subr.mxu0 0.0
    %823 = vmatpush1.msra.mxu0 0.0
    %824 = vmatprep.subr.mxu0 0.0
    %825 = vmatpush1.msra.mxu0 0.0
    %826 = vmatprep.subr.mxu0 0.0
    %827 = vmatpush1.msra.mxu0 0.0
    %828 = vmatprep.subr.mxu0 0.0
    %829 = vmatpush1.msra.mxu0 0.0
    %830 = vmatprep.subr.mxu0 0.0
    %831 = vmatpush1.msra.mxu0 0.0
    %832 = vmatprep.subr.mxu0 0.0
    %833 = vmatpush1.msra.mxu0 0.0
    %834 = vmatprep.subr.mxu0 0.0
    %835 = vmatpush1.msra.mxu0 0.0
    %836 = vmatprep.subr.mxu0 0.0
    %837 = vmatpush1.msra.mxu0 0.0
    %838 = vmatprep.subr.mxu0 0.0
    %839 = vmatpush1.msra.mxu0 0.0
    %840 = vmatprep.subr.mxu0 0.0
    %841 = vmatpush1.msra.mxu0 0.0
    %842 = vmatprep.subr.mxu0 0.0
    %843 = vmatpush1.msra.mxu0 0.0
    %844 = vmatprep.mubr.f32.mxu0 0.0
    %845 = vmatmul.mubr.f32.gmra.mrb[0].mxu0 %v617
    %v846 = vpop.f32.mrb[0].mxu0
    %v847 = vadd.f32 0.0, %v846
    %v848 = vpop.f32.mrb[0].mxu0
    %849 = vdwg.mxu0
    %v850 = vadd.f32 %v778, %v847
    %v851 = vtanh.pop %v850
    %852 = vmatprep.subr.mxu0 %v259
    %853 = vmatpush1.msra.mxu0 %v258
    %854 = vmatprep.subr.mxu0 %v261
    %855 = vmatpush1.msra.mxu0 %v260
    %856 = vmatprep.subr.mxu0 %v263
    %857 = vmatpush1.msra.mxu0 %v262
    %858 = vmatprep.subr.mxu0 %v265
    %859 = vmatpush1.msra.mxu0 %v264
    %860 = vmatprep.subr.mxu0 %v267
    %861 = vmatpush1.msra.mxu0 %v266
    %862 = vmatprep.subr.mxu0 %v269
    %863 = vmatpush1.msra.mxu0 %v268
    %864 = vmatprep.subr.mxu0 %v271
    %865 = vmatpush1.msra.mxu0 %v270
    %866 = vmatprep.subr.mxu0 %v273
    %867 = vmatpush1.msra.mxu0 %v272
    %868 = vmatprep.subr.mxu0 %v275
    %869 = vmatpush1.msra.mxu0 %v274
    %870 = vmatprep.subr.mxu0 %v277
    %871 = vmatpush1.msra.mxu0 %v276
    %872 = vmatprep.subr.mxu0 %v279
    %873 = vmatpush1.msra.mxu0 %v278
    %874 = vmatprep.subr.mxu0 %v281
    %875 = vmatpush1.msra.mxu0 %v280
    %876 = vmatprep.subr.mxu0 %v283
    %877 = vmatpush1.msra.mxu0 %v282
    %878 = vmatprep.subr.mxu0 %v285
    %879 = vmatpush1.msra.mxu0 %v284
    %880 = vmatprep.subr.mxu0 %v287
    %881 = vmatpush1.msra.mxu0 %v286
    %882 = vmatprep.subr.mxu0 %v289
    %883 = vmatpush1.msra.mxu0 %v288
    %884 = vmatprep.subr.mxu0 0.0
    %885 = vmatpush1.msra.mxu0 0.0
    %886 = vmatprep.subr.mxu0 0.0
    %887 = vmatpush1.msra.mxu0 0.0
    %888 = vmatprep.subr.mxu0 0.0
    %889 = vmatpush1.msra.mxu0 0.0
    %890 = vmatprep.subr.mxu0 0.0
    %891 = vmatpush1.msra.mxu0 0.0
    %892 = vmatprep.subr.mxu0 0.0
    %893 = vmatpush1.msra.mxu0 0.0
    %894 = vmatprep.subr.mxu0 0.0
    %895 = vmatpush1.msra.mxu0 0.0
    %896 = vmatprep.subr.mxu0 0.0
    %897 = vmatpush1.msra.mxu0 0.0
    %898 = vmatprep.subr.mxu0 0.0
    %899 = vmatpush1.msra.mxu0 0.0
    %900 = vmatprep.subr.mxu0 0.0
    %901 = vmatpush1.msra.mxu0 0.0
    %902 = vmatprep.subr.mxu0 0.0
    %903 = vmatpush1.msra.mxu0 0.0
    %904 = vmatprep.subr.mxu0 0.0
    %905 = vmatpush1.msra.mxu0 0.0
    %906 = vmatprep.subr.mxu0 0.0
    %907 = vmatpush1.msra.mxu0 0.0
    %908 = vmatprep.subr.mxu0 0.0
    %909 = vmatpush1.msra.mxu0 0.0
    %910 = vmatprep.subr.mxu0 0.0
    %911 = vmatpush1.msra.mxu0 0.0
    %912 = vmatprep.subr.mxu0 0.0
    %913 = vmatpush1.msra.mxu0 0.0
    %914 = vmatprep.subr.mxu0 0.0
    %915 = vmatpush1.msra.mxu0 0.0
    %916 = vmatprep.mubr.f32.mxu0 0.0
    %917 = vmatmul.mubr.f32.gmra.mrb[0].mxu0 %v851
    %v918 = vpop.f32.mrb[0].mxu0
    %v919 = vadd.f32 %v295, %v918
    %v920 = vpop.f32.mrb[0].mxu0
    %v921 = vadd.f32 %v299, %v920
    %922 = vdwg.mxu0
    %v923 = vxor.u32 %v919, 2147483648
    %v924 = vxor.u32 %v921, 2147483648
    %v925 = vmul.f32 %v923, 1.442695
    %v926 = vpow.pop %v925
    %v927 = vmul.f32 %v924, 1.442695
    %v928 = vpow.pop %v927
    %v929 = vadd.f32 %v926, 1.0
    %v930 = vadd.f32 %v928, 1.0
    %v931 = vrcp.pop %v929
    %v932 = vmul.f32 1.0, %v931
    %v933 = vrcp.pop %v930
    %v934 = vmul.f32 1.0, %v933
    %v935 = vmul.f32 %v932, %v779
    %936 = vmatprep.subr.mxu0 0.0
    %937 = vmatpush1.msra.mxu0 %v242
    %938 = vmatprep.subr.mxu0 0.0
    %939 = vmatpush1.msra.mxu0 %v243
    %940 = vmatprep.subr.mxu0 0.0
    %941 = vmatpush1.msra.mxu0 %v244
    %942 = vmatprep.subr.mxu0 0.0
    %943 = vmatpush1.msra.mxu0 %v245
    %944 = vmatprep.subr.mxu0 0.0
    %945 = vmatpush1.msra.mxu0 %v246
    %946 = vmatprep.subr.mxu0 0.0
    %947 = vmatpush1.msra.mxu0 %v247
    %948 = vmatprep.subr.mxu0 0.0
    %949 = vmatpush1.msra.mxu0 %v248
    %950 = vmatprep.subr.mxu0 0.0
    %951 = vmatpush1.msra.mxu0 %v249
    %952 = vmatprep.subr.mxu0 0.0
    %953 = vmatpush1.msra.mxu0 %v250
    %954 = vmatprep.subr.mxu0 0.0
    %955 = vmatpush1.msra.mxu0 %v251
    %956 = vmatprep.subr.mxu0 0.0
    %957 = vmatpush1.msra.mxu0 %v252
    %958 = vmatprep.subr.mxu0 0.0
    %959 = vmatpush1.msra.mxu0 %v253
    %960 = vmatprep.subr.mxu0 0.0
    %961 = vmatpush1.msra.mxu0 %v254
    %962 = vmatprep.subr.mxu0 0.0
    %963 = vmatpush1.msra.mxu0 %v255
    %964 = vmatprep.subr.mxu0 0.0
    %965 = vmatpush1.msra.mxu0 %v256
    %966 = vmatprep.subr.mxu0 0.0
    %967 = vmatpush1.msra.mxu0 %v257
    %968 = vmatprep.subr.mxu0 0.0
    %969 = vmatpush1.msra.mxu0 0.0
    %970 = vmatprep.subr.mxu0 0.0
    %971 = vmatpush1.msra.mxu0 0.0
    %972 = vmatprep.subr.mxu0 0.0
    %973 = vmatpush1.msra.mxu0 0.0
    %974 = vmatprep.subr.mxu0 0.0
    %975 = vmatpush1.msra.mxu0 0.0
    %976 = vmatprep.subr.mxu0 0.0
    %977 = vmatpush1.msra.mxu0 0.0
    %978 = vmatprep.subr.mxu0 0.0
    %979 = vmatpush1.msra.mxu0 0.0
    %980 = vmatprep.subr.mxu0 0.0
    %981 = vmatpush1.msra.mxu0 0.0
    %982 = vmatprep.subr.mxu0 0.0
    %983 = vmatpush1.msra.mxu0 0.0
    %984 = vmatprep.subr.mxu0 0.0
    %985 = vmatpush1.msra.mxu0 0.0
    %986 = vmatprep.subr.mxu0 0.0
    %987 = vmatpush1.msra.mxu0 0.0
    %988 = vmatprep.subr.mxu0 0.0
    %989 = vmatpush1.msra.mxu0 0.0
    %990 = vmatprep.subr.mxu0 0.0
    %991 = vmatpush1.msra.mxu0 0.0
    %992 = vmatprep.subr.mxu0 0.0
    %993 = vmatpush1.msra.mxu0 0.0
    %994 = vmatprep.subr.mxu0 0.0
    %995 = vmatpush1.msra.mxu0 0.0
    %996 = vmatprep.subr.mxu0 0.0
    %997 = vmatpush1.msra.mxu0 0.0
    %998 = vmatprep.subr.mxu0 0.0
    %999 = vmatpush1.msra.mxu0 0.0
    %1000 = vmatprep.mubr.f32.mxu0 0.0
    %1001 = vmatmul.mubr.f32.gmra.mrb[0].mxu0 %v774
    %v1002 = vpop.f32.mrb[0].mxu0
    %v1003 = vadd.f32 %v307, %v1002
    %v1004 = vpop.f32.mrb[0].mxu0
    %1005 = vdwg.mxu0
    %v1006 = vmul.f32 %v934, %v1003
    %v1007 = vadd.f32 %v935, %v1006
    %v1008 = vtanh.pop %v1007
    %s1009 = scalar_lea.vmem [#allocation4], 16
    %1010 = vst [vmem:[%s1009] sm:$0xff] %v1008
    %s1011 = scalar_lea.vmem [#allocation3], 48
    %v1012 = vld [vmem:[%s1011] sm:$0xff]
    %v1013 = vld [vmem:[%s1011 + $0x8] sm:$0xff]
    %1014 = vmatprep.subr.mxu0 0.0
    %1015 = vmatpush1.msra.mxu0 %v226
    %1016 = vmatprep.subr.mxu0 0.0
    %1017 = vmatpush1.msra.mxu0 %v227
    %1018 = vmatprep.subr.mxu0 0.0
    %1019 = vmatpush1.msra.mxu0 %v228
    %1020 = vmatprep.subr.mxu0 0.0
    %1021 = vmatpush1.msra.mxu0 %v229
    %1022 = vmatprep.subr.mxu0 0.0
    %1023 = vmatpush1.msra.mxu0 %v230
    %1024 = vmatprep.subr.mxu0 0.0
    %1025 = vmatpush1.msra.mxu0 %v231
    %1026 = vmatprep.subr.mxu0 0.0
    %1027 = vmatpush1.msra.mxu0 %v232
    %1028 = vmatprep.subr.mxu0 0.0
    %1029 = vmatpush1.msra.mxu0 %v233
    %1030 = vmatprep.subr.mxu0 0.0
    %1031 = vmatpush1.msra.mxu0 %v234
    %1032 = vmatprep.subr.mxu0 0.0
    %1033 = vmatpush1.msra.mxu0 %v235
    %1034 = vmatprep.subr.mxu0 0.0
    %1035 = vmatpush1.msra.mxu0 %v236
    %1036 = vmatprep.subr.mxu0 0.0
    %1037 = vmatpush1.msra.mxu0 %v237
    %1038 = vmatprep.subr.mxu0 0.0
    %1039 = vmatpush1.msra.mxu0 %v238
    %1040 = vmatprep.subr.mxu0 0.0
    %1041 = vmatpush1.msra.mxu0 %v239
    %1042 = vmatprep.subr.mxu0 0.0
    %1043 = vmatpush1.msra.mxu0 %v240
    %1044 = vmatprep.subr.mxu0 0.0
    %1045 = vmatpush1.msra.mxu0 %v241
    %1046 = vmatprep.subr.mxu0 0.0
    %1047 = vmatpush1.msra.mxu0 0.0
    %1048 = vmatprep.subr.mxu0 0.0
    %1049 = vmatpush1.msra.mxu0 0.0
    %1050 = vmatprep.subr.mxu0 0.0
    %1051 = vmatpush1.msra.mxu0 0.0
    %1052 = vmatprep.subr.mxu0 0.0
    %1053 = vmatpush1.msra.mxu0 0.0
    %1054 = vmatprep.subr.mxu0 0.0
    %1055 = vmatpush1.msra.mxu0 0.0
    %1056 = vmatprep.subr.mxu0 0.0
    %1057 = vmatpush1.msra.mxu0 0.0
    %1058 = vmatprep.subr.mxu0 0.0
    %1059 = vmatpush1.msra.mxu0 0.0
    %1060 = vmatprep.subr.mxu0 0.0
    %1061 = vmatpush1.msra.mxu0 0.0
    %1062 = vmatprep.subr.mxu0 0.0
    %1063 = vmatpush1.msra.mxu0 0.0
    %1064 = vmatprep.subr.mxu0 0.0
    %1065 = vmatpush1.msra.mxu0 0.0
    %1066 = vmatprep.subr.mxu0 0.0
    %1067 = vmatpush1.msra.mxu0 0.0
    %1068 = vmatprep.subr.mxu0 0.0
    %1069 = vmatpush1.msra.mxu0 0.0
    %1070 = vmatprep.subr.mxu0 0.0
    %1071 = vmatpush1.msra.mxu0 0.0
    %1072 = vmatprep.subr.mxu0 0.0
    %1073 = vmatpush1.msra.mxu0 0.0
    %1074 = vmatprep.subr.mxu0 0.0
    %1075 = vmatpush1.msra.mxu0 0.0
    %1076 = vmatprep.subr.mxu0 0.0
    %1077 = vmatpush1.msra.mxu0 0.0
    %1078 = vmatprep.mubr.f32.mxu0 0.0
    %1079 = vmatmul.mubr.f32.gmra.mrb[0].mxu0 %v851
    %v1080 = vpop.f32.mrb[0].mxu0
    %v1081 = vadd.f32 0.0, %v1080
    %v1082 = vpop.f32.mrb[0].mxu0
    %1083 = vdwg.mxu0
    %v1084 = vadd.f32 %v1012, %v1081
    %v1085 = vtanh.pop %v1084
    %1086 = vmatprep.subr.mxu0 %v259
    %1087 = vmatpush1.msra.mxu0 %v258
    %1088 = vmatprep.subr.mxu0 %v261
    %1089 = vmatpush1.msra.mxu0 %v260
    %1090 = vmatprep.subr.mxu0 %v263
    %1091 = vmatpush1.msra.mxu0 %v262
    %1092 = vmatprep.subr.mxu0 %v265
    %1093 = vmatpush1.msra.mxu0 %v264
    %1094 = vmatprep.subr.mxu0 %v267
    %1095 = vmatpush1.msra.mxu0 %v266
    %1096 = vmatprep.subr.mxu0 %v269
    %1097 = vmatpush1.msra.mxu0 %v268
    %1098 = vmatprep.subr.mxu0 %v271
    %1099 = vmatpush1.msra.mxu0 %v270
    %1100 = vmatprep.subr.mxu0 %v273
    %1101 = vmatpush1.msra.mxu0 %v272
    %1102 = vmatprep.subr.mxu0 %v275
    %1103 = vmatpush1.msra.mxu0 %v274
    %1104 = vmatprep.subr.mxu0 %v277
    %1105 = vmatpush1.msra.mxu0 %v276
    %1106 = vmatprep.subr.mxu0 %v279
    %1107 = vmatpush1.msra.mxu0 %v278
    %1108 = vmatprep.subr.mxu0 %v281
    %1109 = vmatpush1.msra.mxu0 %v280
    %1110 = vmatprep.subr.mxu0 %v283
    %1111 = vmatpush1.msra.mxu0 %v282
    %1112 = vmatprep.subr.mxu0 %v285
    %1113 = vmatpush1.msra.mxu0 %v284
    %1114 = vmatprep.subr.mxu0 %v287
    %1115 = vmatpush1.msra.mxu0 %v286
    %1116 = vmatprep.subr.mxu0 %v289
    %1117 = vmatpush1.msra.mxu0 %v288
    %1118 = vmatprep.subr.mxu0 0.0
    %1119 = vmatpush1.msra.mxu0 0.0
    %1120 = vmatprep.subr.mxu0 0.0
    %1121 = vmatpush1.msra.mxu0 0.0
    %1122 = vmatprep.subr.mxu0 0.0
    %1123 = vmatpush1.msra.mxu0 0.0
    %1124 = vmatprep.subr.mxu0 0.0
    %1125 = vmatpush1.msra.mxu0 0.0
    %1126 = vmatprep.subr.mxu0 0.0
    %1127 = vmatpush1.msra.mxu0 0.0
    %1128 = vmatprep.subr.mxu0 0.0
    %1129 = vmatpush1.msra.mxu0 0.0
    %1130 = vmatprep.subr.mxu0 0.0
    %1131 = vmatpush1.msra.mxu0 0.0
    %1132 = vmatprep.subr.mxu0 0.0
    %1133 = vmatpush1.msra.mxu0 0.0
    %1134 = vmatprep.subr.mxu0 0.0
    %1135 = vmatpush1.msra.mxu0 0.0
    %1136 = vmatprep.subr.mxu0 0.0
    %1137 = vmatpush1.msra.mxu0 0.0
    %1138 = vmatprep.subr.mxu0 0.0
    %1139 = vmatpush1.msra.mxu0 0.0
    %1140 = vmatprep.subr.mxu0 0.0
    %1141 = vmatpush1.msra.mxu0 0.0
    %1142 = vmatprep.subr.mxu0 0.0
    %1143 = vmatpush1.msra.mxu0 0.0
    %1144 = vmatprep.subr.mxu0 0.0
    %1145 = vmatpush1.msra.mxu0 0.0
    %1146 = vmatprep.subr.mxu0 0.0
    %1147 = vmatpush1.msra.mxu0 0.0
    %1148 = vmatprep.subr.mxu0 0.0
    %1149 = vmatpush1.msra.mxu0 0.0
    %1150 = vmatprep.mubr.f32.mxu0 0.0
    %1151 = vmatmul.mubr.f32.gmra.mrb[0].mxu0 %v1085
    %v1152 = vpop.f32.mrb[0].mxu0
    %v1153 = vadd.f32 %v295, %v1152
    %v1154 = vpop.f32.mrb[0].mxu0
    %v1155 = vadd.f32 %v299, %v1154
    %1156 = vdwg.mxu0
    %v1157 = vxor.u32 %v1153, 2147483648
    %v1158 = vxor.u32 %v1155, 2147483648
    %v1159 = vmul.f32 %v1157, 1.442695
    %v1160 = vpow.pop %v1159
    %v1161 = vmul.f32 %v1158, 1.442695
    %v1162 = vpow.pop %v1161
    %v1163 = vadd.f32 %v1160, 1.0
    %v1164 = vadd.f32 %v1162, 1.0
    %v1165 = vrcp.pop %v1163
    %v1166 = vmul.f32 1.0, %v1165
    %v1167 = vrcp.pop %v1164
    %v1168 = vmul.f32 1.0, %v1167
    %v1169 = vmul.f32 %v1166, %v1013
    %1170 = vmatprep.subr.mxu0 0.0
    %1171 = vmatpush1.msra.mxu0 %v242
    %1172 = vmatprep.subr.mxu0 0.0
    %1173 = vmatpush1.msra.mxu0 %v243
    %1174 = vmatprep.subr.mxu0 0.0
    %1175 = vmatpush1.msra.mxu0 %v244
    %1176 = vmatprep.subr.mxu0 0.0
    %1177 = vmatpush1.msra.mxu0 %v245
    %1178 = vmatprep.subr.mxu0 0.0
    %1179 = vmatpush1.msra.mxu0 %v246
    %1180 = vmatprep.subr.mxu0 0.0
    %1181 = vmatpush1.msra.mxu0 %v247
    %1182 = vmatprep.subr.mxu0 0.0
    %1183 = vmatpush1.msra.mxu0 %v248
    %1184 = vmatprep.subr.mxu0 0.0
    %1185 = vmatpush1.msra.mxu0 %v249
    %1186 = vmatprep.subr.mxu0 0.0
    %1187 = vmatpush1.msra.mxu0 %v250
    %1188 = vmatprep.subr.mxu0 0.0
    %1189 = vmatpush1.msra.mxu0 %v251
    %1190 = vmatprep.subr.mxu0 0.0
    %1191 = vmatpush1.msra.mxu0 %v252
    %1192 = vmatprep.subr.mxu0 0.0
    %1193 = vmatpush1.msra.mxu0 %v253
    %1194 = vmatprep.subr.mxu0 0.0
    %1195 = vmatpush1.msra.mxu0 %v254
    %1196 = vmatprep.subr.mxu0 0.0
    %1197 = vmatpush1.msra.mxu0 %v255
    %1198 = vmatprep.subr.mxu0 0.0
    %1199 = vmatpush1.msra.mxu0 %v256
    %1200 = vmatprep.subr.mxu0 0.0
    %1201 = vmatpush1.msra.mxu0 %v257
    %1202 = vmatprep.subr.mxu0 0.0
    %1203 = vmatpush1.msra.mxu0 0.0
    %1204 = vmatprep.subr.mxu0 0.0
    %1205 = vmatpush1.msra.mxu0 0.0
    %1206 = vmatprep.subr.mxu0 0.0
    %1207 = vmatpush1.msra.mxu0 0.0
    %1208 = vmatprep.subr.mxu0 0.0
    %1209 = vmatpush1.msra.mxu0 0.0
    %1210 = vmatprep.subr.mxu0 0.0
    %1211 = vmatpush1.msra.mxu0 0.0
    %1212 = vmatprep.subr.mxu0 0.0
    %1213 = vmatpush1.msra.mxu0 0.0
    %1214 = vmatprep.subr.mxu0 0.0
    %1215 = vmatpush1.msra.mxu0 0.0
    %1216 = vmatprep.subr.mxu0 0.0
    %1217 = vmatpush1.msra.mxu0 0.0
    %1218 = vmatprep.subr.mxu0 0.0
    %1219 = vmatpush1.msra.mxu0 0.0
    %1220 = vmatprep.subr.mxu0 0.0
    %1221 = vmatpush1.msra.mxu0 0.0
    %1222 = vmatprep.subr.mxu0 0.0
    %1223 = vmatpush1.msra.mxu0 0.0
    %1224 = vmatprep.subr.mxu0 0.0
    %1225 = vmatpush1.msra.mxu0 0.0
    %1226 = vmatprep.subr.mxu0 0.0
    %1227 = vmatpush1.msra.mxu0 0.0
    %1228 = vmatprep.subr.mxu0 0.0
    %1229 = vmatpush1.msra.mxu0 0.0
    %1230 = vmatprep.subr.mxu0 0.0
    %1231 = vmatpush1.msra.mxu0 0.0
    %1232 = vmatprep.subr.mxu0 0.0
    %1233 = vmatpush1.msra.mxu0 0.0
    %1234 = vmatprep.mubr.f32.mxu0 0.0
    %1235 = vmatmul.mubr.f32.gmra.mrb[0].mxu0 %v1008
    %v1236 = vpop.f32.mrb[0].mxu0
    %v1237 = vadd.f32 %v307, %v1236
    %v1238 = vpop.f32.mrb[0].mxu0
    %1239 = vdwg.mxu0
    %v1240 = vmul.f32 %v1168, %v1237
    %v1241 = vadd.f32 %v1169, %v1240
    %v1242 = vtanh.pop %v1241
    %s1243 = scalar_lea.vmem [#allocation4], 24
    %1244 = vst [vmem:[%s1243] sm:$0xff] %v1242
    %s1245 = scalar_lea.vmem [#allocation3], 64
    %v1246 = vld [vmem:[%s1245] sm:$0xff]
    %v1247 = vld [vmem:[%s1245 + $0x8] sm:$0xff]
    %1248 = vmatprep.subr.mxu0 0.0
    %1249 = vmatpush1.msra.mxu0 %v226
    %1250 = vmatprep.subr.mxu0 0.0
    %1251 = vmatpush1.msra.mxu0 %v227
    %1252 = vmatprep.subr.mxu0 0.0
    %1253 = vmatpush1.msra.mxu0 %v228
    %1254 = vmatprep.subr.mxu0 0.0
    %1255 = vmatpush1.msra.mxu0 %v229
    %1256 = vmatprep.subr.mxu0 0.0
    %1257 = vmatpush1.msra.mxu0 %v230
    %1258 = vmatprep.subr.mxu0 0.0
    %1259 = vmatpush1.msra.mxu0 %v231
    %1260 = vmatprep.subr.mxu0 0.0
    %1261 = vmatpush1.msra.mxu0 %v232
    %1262 = vmatprep.subr.mxu0 0.0
    %1263 = vmatpush1.msra.mxu0 %v233
    %1264 = vmatprep.subr.mxu0 0.0
    %1265 = vmatpush1.msra.mxu0 %v234
    %1266 = vmatprep.subr.mxu0 0.0
    %1267 = vmatpush1.msra.mxu0 %v235
    %1268 = vmatprep.subr.mxu0 0.0
    %1269 = vmatpush1.msra.mxu0 %v236
    %1270 = vmatprep.subr.mxu0 0.0
    %1271 = vmatpush1.msra.mxu0 %v237
    %1272 = vmatprep.subr.mxu0 0.0
    %1273 = vmatpush1.msra.mxu0 %v238
    %1274 = vmatprep.subr.mxu0 0.0
    %1275 = vmatpush1.msra.mxu0 %v239
    %1276 = vmatprep.subr.mxu0 0.0
    %1277 = vmatpush1.msra.mxu0 %v240
    %1278 = vmatprep.subr.mxu0 0.0
    %1279 = vmatpush1.msra.mxu0 %v241
    %1280 = vmatprep.subr.mxu0 0.0
    %1281 = vmatpush1.msra.mxu0 0.0
    %1282 = vmatprep.subr.mxu0 0.0
    %1283 = vmatpush1.msra.mxu0 0.0
    %1284 = vmatprep.subr.mxu0 0.0
    %1285 = vmatpush1.msra.mxu0 0.0
    %1286 = vmatprep.subr.mxu0 0.0
    %1287 = vmatpush1.msra.mxu0 0.0
    %1288 = vmatprep.subr.mxu0 0.0
    %1289 = vmatpush1.msra.mxu0 0.0
    %1290 = vmatprep.subr.mxu0 0.0
    %1291 = vmatpush1.msra.mxu0 0.0
    %1292 = vmatprep.subr.mxu0 0.0
    %1293 = vmatpush1.msra.mxu0 0.0
    %1294 = vmatprep.subr.mxu0 0.0
    %1295 = vmatpush1.msra.mxu0 0.0
    %1296 = vmatprep.subr.mxu0 0.0
    %1297 = vmatpush1.msra.mxu0 0.0
    %1298 = vmatprep.subr.mxu0 0.0
    %1299 = vmatpush1.msra.mxu0 0.0
    %1300 = vmatprep.subr.mxu0 0.0
    %1301 = vmatpush1.msra.mxu0 0.0
    %1302 = vmatprep.subr.mxu0 0.0
    %1303 = vmatpush1.msra.mxu0 0.0
    %1304 = vmatprep.subr.mxu0 0.0
    %1305 = vmatpush1.msra.mxu0 0.0
    %1306 = vmatprep.subr.mxu0 0.0
    %1307 = vmatpush1.msra.mxu0 0.0
    %1308 = vmatprep.subr.mxu0 0.0
    %1309 = vmatpush1.msra.mxu0 0.0
    %1310 = vmatprep.subr.mxu0 0.0
    %1311 = vmatpush1.msra.mxu0 0.0
    %1312 = vmatprep.mubr.f32.mxu0 0.0
    %1313 = vmatmul.mubr.f32.gmra.mrb[0].mxu0 %v1085
    %v1314 = vpop.f32.mrb[0].mxu0
    %v1315 = vadd.f32 0.0, %v1314
    %v1316 = vpop.f32.mrb[0].mxu0
    %1317 = vdwg.mxu0
    %v1318 = vadd.f32 %v1246, %v1315
    %v1319 = vtanh.pop %v1318
    %1320 = vmatprep.subr.mxu0 %v259
    %1321 = vmatpush1.msra.mxu0 %v258
    %1322 = vmatprep.subr.mxu0 %v261
    %1323 = vmatpush1.msra.mxu0 %v260
    %1324 = vmatprep.subr.mxu0 %v263
    %1325 = vmatpush1.msra.mxu0 %v262
    %1326 = vmatprep.subr.mxu0 %v265
    %1327 = vmatpush1.msra.mxu0 %v264
    %1328 = vmatprep.subr.mxu0 %v267
    %1329 = vmatpush1.msra.mxu0 %v266
    %1330 = vmatprep.subr.mxu0 %v269
    %1331 = vmatpush1.msra.mxu0 %v268
    %1332 = vmatprep.subr.mxu0 %v271
    %1333 = vmatpush1.msra.mxu0 %v270
    %1334 = vmatprep.subr.mxu0 %v273
    %1335 = vmatpush1.msra.mxu0 %v272
    %1336 = vmatprep.subr.mxu0 %v275
    %1337 = vmatpush1.msra.mxu0 %v274
    %1338 = vmatprep.subr.mxu0 %v277
    %1339 = vmatpush1.msra.mxu0 %v276
    %1340 = vmatprep.subr.mxu0 %v279
    %1341 = vmatpush1.msra.mxu0 %v278
    %1342 = vmatprep.subr.mxu0 %v281
    %1343 = vmatpush1.msra.mxu0 %v280
    %1344 = vmatprep.subr.mxu0 %v283
    %1345 = vmatpush1.msra.mxu0 %v282
    %1346 = vmatprep.subr.mxu0 %v285
    %1347 = vmatpush1.msra.mxu0 %v284
    %1348 = vmatprep.subr.mxu0 %v287
    %1349 = vmatpush1.msra.mxu0 %v286
    %1350 = vmatprep.subr.mxu0 %v289
    %1351 = vmatpush1.msra.mxu0 %v288
    %1352 = vmatprep.subr.mxu0 0.0
    %1353 = vmatpush1.msra.mxu0 0.0
    %1354 = vmatprep.subr.mxu0 0.0
    %1355 = vmatpush1.msra.mxu0 0.0
    %1356 = vmatprep.subr.mxu0 0.0
    %1357 = vmatpush1.msra.mxu0 0.0
    %1358 = vmatprep.subr.mxu0 0.0
    %1359 = vmatpush1.msra.mxu0 0.0
    %1360 = vmatprep.subr.mxu0 0.0
    %1361 = vmatpush1.msra.mxu0 0.0
    %1362 = vmatprep.subr.mxu0 0.0
    %1363 = vmatpush1.msra.mxu0 0.0
    %1364 = vmatprep.subr.mxu0 0.0
    %1365 = vmatpush1.msra.mxu0 0.0
    %1366 = vmatprep.subr.mxu0 0.0
    %1367 = vmatpush1.msra.mxu0 0.0
    %1368 = vmatprep.subr.mxu0 0.0
    %1369 = vmatpush1.msra.mxu0 0.0
    %1370 = vmatprep.subr.mxu0 0.0
    %1371 = vmatpush1.msra.mxu0 0.0
    %1372 = vmatprep.subr.mxu0 0.0
    %1373 = vmatpush1.msra.mxu0 0.0
    %1374 = vmatprep.subr.mxu0 0.0
    %1375 = vmatpush1.msra.mxu0 0.0
    %1376 = vmatprep.subr.mxu0 0.0
    %1377 = vmatpush1.msra.mxu0 0.0
    %1378 = vmatprep.subr.mxu0 0.0
    %1379 = vmatpush1.msra.mxu0 0.0
    %1380 = vmatprep.subr.mxu0 0.0
    %1381 = vmatpush1.msra.mxu0 0.0
    %1382 = vmatprep.subr.mxu0 0.0
    %1383 = vmatpush1.msra.mxu0 0.0
    %1384 = vmatprep.mubr.f32.mxu0 0.0
    %1385 = vmatmul.mubr.f32.gmra.mrb[0].mxu0 %v1319
    %v1386 = vpop.f32.mrb[0].mxu0
    %v1387 = vadd.f32 %v295, %v1386
    %v1388 = vpop.f32.mrb[0].mxu0
    %v1389 = vadd.f32 %v299, %v1388
    %1390 = vdwg.mxu0
    %v1391 = vxor.u32 %v1387, 2147483648
    %v1392 = vxor.u32 %v1389, 2147483648
    %v1393 = vmul.f32 %v1391, 1.442695
    %v1394 = vpow.pop %v1393
    %v1395 = vmul.f32 %v1392, 1.442695
    %v1396 = vpow.pop %v1395
    %v1397 = vadd.f32 %v1394, 1.0
    %v1398 = vadd.f32 %v1396, 1.0
    %v1399 = vrcp.pop %v1397
    %v1400 = vmul.f32 1.0, %v1399
    %v1401 = vrcp.pop %v1398
    %v1402 = vmul.f32 1.0, %v1401
    %v1403 = vmul.f32 %v1400, %v1247
    %1404 = vmatprep.subr.mxu0 0.0
    %1405 = vmatpush1.msra.mxu0 %v242
    %1406 = vmatprep.subr.mxu0 0.0
    %1407 = vmatpush1.msra.mxu0 %v243
    %1408 = vmatprep.subr.mxu0 0.0
    %1409 = vmatpush1.msra.mxu0 %v244
    %1410 = vmatprep.subr.mxu0 0.0
    %1411 = vmatpush1.msra.mxu0 %v245
    %1412 = vmatprep.subr.mxu0 0.0
    %1413 = vmatpush1.msra.mxu0 %v246
    %1414 = vmatprep.subr.mxu0 0.0
    %1415 = vmatpush1.msra.mxu0 %v247
    %1416 = vmatprep.subr.mxu0 0.0
    %1417 = vmatpush1.msra.mxu0 %v248
    %1418 = vmatprep.subr.mxu0 0.0
    %1419 = vmatpush1.msra.mxu0 %v249
    %1420 = vmatprep.subr.mxu0 0.0
    %1421 = vmatpush1.msra.mxu0 %v250
    %1422 = vmatprep.subr.mxu0 0.0
    %1423 = vmatpush1.msra.mxu0 %v251
    %1424 = vmatprep.subr.mxu0 0.0
    %1425 = vmatpush1.msra.mxu0 %v252
    %1426 = vmatprep.subr.mxu0 0.0
    %1427 = vmatpush1.msra.mxu0 %v253
    %1428 = vmatprep.subr.mxu0 0.0
    %1429 = vmatpush1.msra.mxu0 %v254
    %1430 = vmatprep.subr.mxu0 0.0
    %1431 = vmatpush1.msra.mxu0 %v255
    %1432 = vmatprep.subr.mxu0 0.0
    %1433 = vmatpush1.msra.mxu0 %v256
    %1434 = vmatprep.subr.mxu0 0.0
    %1435 = vmatpush1.msra.mxu0 %v257
    %1436 = vmatprep.subr.mxu0 0.0
    %1437 = vmatpush1.msra.mxu0 0.0
    %1438 = vmatprep.subr.mxu0 0.0
    %1439 = vmatpush1.msra.mxu0 0.0
    %1440 = vmatprep.subr.mxu0 0.0
    %1441 = vmatpush1.msra.mxu0 0.0
    %1442 = vmatprep.subr.mxu0 0.0
    %1443 = vmatpush1.msra.mxu0 0.0
    %1444 = vmatprep.subr.mxu0 0.0
    %1445 = vmatpush1.msra.mxu0 0.0
    %1446 = vmatprep.subr.mxu0 0.0
    %1447 = vmatpush1.msra.mxu0 0.0
    %1448 = vmatprep.subr.mxu0 0.0
    %1449 = vmatpush1.msra.mxu0 0.0
    %1450 = vmatprep.subr.mxu0 0.0
    %1451 = vmatpush1.msra.mxu0 0.0
    %1452 = vmatprep.subr.mxu0 0.0
    %1453 = vmatpush1.msra.mxu0 0.0
    %1454 = vmatprep.subr.mxu0 0.0
    %1455 = vmatpush1.msra.mxu0 0.0
    %1456 = vmatprep.subr.mxu0 0.0
    %1457 = vmatpush1.msra.mxu0 0.0
    %1458 = vmatprep.subr.mxu0 0.0
    %1459 = vmatpush1.msra.mxu0 0.0
    %1460 = vmatprep.subr.mxu0 0.0
    %1461 = vmatpush1.msra.mxu0 0.0
    %1462 = vmatprep.subr.mxu0 0.0
    %1463 = vmatpush1.msra.mxu0 0.0
    %1464 = vmatprep.subr.mxu0 0.0
    %1465 = vmatpush1.msra.mxu0 0.0
    %1466 = vmatprep.subr.mxu0 0.0
    %1467 = vmatpush1.msra.mxu0 0.0
    %1468 = vmatprep.mubr.f32.mxu0 0.0
    %1469 = vmatmul.mubr.f32.gmra.mrb[0].mxu0 %v1242
    %v1470 = vpop.f32.mrb[0].mxu0
    %v1471 = vadd.f32 %v307, %v1470
    %v1472 = vpop.f32.mrb[0].mxu0
    %1473 = vdwg.mxu0
    %v1474 = vmul.f32 %v1402, %v1471
    %v1475 = vadd.f32 %v1403, %v1474
    %v1476 = vtanh.pop %v1475
    %s1477 = scalar_lea.vmem [#allocation4], 32
    %1478 = vst [vmem:[%s1477] sm:$0xff] %v1476
    %s1479 = scalar_lea.vmem [#allocation3], 80
    %v1480 = vld [vmem:[%s1479] sm:$0xff]
    %v1481 = vld [vmem:[%s1479 + $0x8] sm:$0xff]
    %1482 = vmatprep.subr.mxu0 0.0
    %1483 = vmatpush1.msra.mxu0 %v226
    %1484 = vmatprep.subr.mxu0 0.0
    %1485 = vmatpush1.msra.mxu0 %v227
    %1486 = vmatprep.subr.mxu0 0.0
    %1487 = vmatpush1.msra.mxu0 %v228
    %1488 = vmatprep.subr.mxu0 0.0
    %1489 = vmatpush1.msra.mxu0 %v229
    %1490 = vmatprep.subr.mxu0 0.0
    %1491 = vmatpush1.msra.mxu0 %v230
    %1492 = vmatprep.subr.mxu0 0.0
    %1493 = vmatpush1.msra.mxu0 %v231
    %1494 = vmatprep.subr.mxu0 0.0
    %1495 = vmatpush1.msra.mxu0 %v232
    %1496 = vmatprep.subr.mxu0 0.0
    %1497 = vmatpush1.msra.mxu0 %v233
    %1498 = vmatprep.subr.mxu0 0.0
    %1499 = vmatpush1.msra.mxu0 %v234
    %1500 = vmatprep.subr.mxu0 0.0
    %1501 = vmatpush1.msra.mxu0 %v235
    %1502 = vmatprep.subr.mxu0 0.0
    %1503 = vmatpush1.msra.mxu0 %v236
    %1504 = vmatprep.subr.mxu0 0.0
    %1505 = vmatpush1.msra.mxu0 %v237
    %1506 = vmatprep.subr.mxu0 0.0
    %1507 = vmatpush1.msra.mxu0 %v238
    %1508 = vmatprep.subr.mxu0 0.0
    %1509 = vmatpush1.msra.mxu0 %v239
    %1510 = vmatprep.subr.mxu0 0.0
    %1511 = vmatpush1.msra.mxu0 %v240
    %1512 = vmatprep.subr.mxu0 0.0
    %1513 = vmatpush1.msra.mxu0 %v241
    %1514 = vmatprep.subr.mxu0 0.0
    %1515 = vmatpush1.msra.mxu0 0.0
    %1516 = vmatprep.subr.mxu0 0.0
    %1517 = vmatpush1.msra.mxu0 0.0
    %1518 = vmatprep.subr.mxu0 0.0
    %1519 = vmatpush1.msra.mxu0 0.0
    %1520 = vmatprep.subr.mxu0 0.0
    %1521 = vmatpush1.msra.mxu0 0.0
    %1522 = vmatprep.subr.mxu0 0.0
    %1523 = vmatpush1.msra.mxu0 0.0
    %1524 = vmatprep.subr.mxu0 0.0
    %1525 = vmatpush1.msra.mxu0 0.0
    %1526 = vmatprep.subr.mxu0 0.0
    %1527 = vmatpush1.msra.mxu0 0.0
    %1528 = vmatprep.subr.mxu0 0.0
    %1529 = vmatpush1.msra.mxu0 0.0
    %1530 = vmatprep.subr.mxu0 0.0
    %1531 = vmatpush1.msra.mxu0 0.0
    %1532 = vmatprep.subr.mxu0 0.0
    %1533 = vmatpush1.msra.mxu0 0.0
    %1534 = vmatprep.subr.mxu0 0.0
    %1535 = vmatpush1.msra.mxu0 0.0
    %1536 = vmatprep.subr.mxu0 0.0
    %1537 = vmatpush1.msra.mxu0 0.0
    %1538 = vmatprep.subr.mxu0 0.0
    %1539 = vmatpush1.msra.mxu0 0.0
    %1540 = vmatprep.subr.mxu0 0.0
    %1541 = vmatpush1.msra.mxu0 0.0
    %1542 = vmatprep.subr.mxu0 0.0
    %1543 = vmatpush1.msra.mxu0 0.0
    %1544 = vmatprep.subr.mxu0 0.0
    %1545 = vmatpush1.msra.mxu0 0.0
    %1546 = vmatprep.mubr.f32.mxu0 0.0
    %1547 = vmatmul.mubr.f32.gmra.mrb[0].mxu0 %v1319
    %v1548 = vpop.f32.mrb[0].mxu0
    %v1549 = vadd.f32 0.0, %v1548
    %v1550 = vpop.f32.mrb[0].mxu0
    %1551 = vdwg.mxu0
    %v1552 = vadd.f32 %v1480, %v1549
    %v1553 = vtanh.pop %v1552
    %1554 = vmatprep.subr.mxu0 %v259
    %1555 = vmatpush1.msra.mxu0 %v258
    %1556 = vmatprep.subr.mxu0 %v261
    %1557 = vmatpush1.msra.mxu0 %v260
    %1558 = vmatprep.subr.mxu0 %v263
    %1559 = vmatpush1.msra.mxu0 %v262
    %1560 = vmatprep.subr.mxu0 %v265
    %1561 = vmatpush1.msra.mxu0 %v264
    %1562 = vmatprep.subr.mxu0 %v267
    %1563 = vmatpush1.msra.mxu0 %v266
    %1564 = vmatprep.subr.mxu0 %v269
    %1565 = vmatpush1.msra.mxu0 %v268
    %1566 = vmatprep.subr.mxu0 %v271
    %1567 = vmatpush1.msra.mxu0 %v270
    %1568 = vmatprep.subr.mxu0 %v273
    %1569 = vmatpush1.msra.mxu0 %v272
    %1570 = vmatprep.subr.mxu0 %v275
    %1571 = vmatpush1.msra.mxu0 %v274
    %1572 = vmatprep.subr.mxu0 %v277
    %1573 = vmatpush1.msra.mxu0 %v276
    %1574 = vmatprep.subr.mxu0 %v279
    %1575 = vmatpush1.msra.mxu0 %v278
    %1576 = vmatprep.subr.mxu0 %v281
    %1577 = vmatpush1.msra.mxu0 %v280
    %1578 = vmatprep.subr.mxu0 %v283
    %1579 = vmatpush1.msra.mxu0 %v282
    %1580 = vmatprep.subr.mxu0 %v285
    %1581 = vmatpush1.msra.mxu0 %v284
    %1582 = vmatprep.subr.mxu0 %v287
    %1583 = vmatpush1.msra.mxu0 %v286
    %1584 = vmatprep.subr.mxu0 %v289
    %1585 = vmatpush1.msra.mxu0 %v288
    %1586 = vmatprep.subr.mxu0 0.0
    %1587 = vmatpush1.msra.mxu0 0.0
    %1588 = vmatprep.subr.mxu0 0.0
    %1589 = vmatpush1.msra.mxu0 0.0
    %1590 = vmatprep.subr.mxu0 0.0
    %1591 = vmatpush1.msra.mxu0 0.0
    %1592 = vmatprep.subr.mxu0 0.0
    %1593 = vmatpush1.msra.mxu0 0.0
    %1594 = vmatprep.subr.mxu0 0.0
    %1595 = vmatpush1.msra.mxu0 0.0
    %1596 = vmatprep.subr.mxu0 0.0
    %1597 = vmatpush1.msra.mxu0 0.0
    %1598 = vmatprep.subr.mxu0 0.0
    %1599 = vmatpush1.msra.mxu0 0.0
    %1600 = vmatprep.subr.mxu0 0.0
    %1601 = vmatpush1.msra.mxu0 0.0
    %1602 = vmatprep.subr.mxu0 0.0
    %1603 = vmatpush1.msra.mxu0 0.0
    %1604 = vmatprep.subr.mxu0 0.0
    %1605 = vmatpush1.msra.mxu0 0.0
    %1606 = vmatprep.subr.mxu0 0.0
    %1607 = vmatpush1.msra.mxu0 0.0
    %1608 = vmatprep.subr.mxu0 0.0
    %1609 = vmatpush1.msra.mxu0 0.0
    %1610 = vmatprep.subr.mxu0 0.0
    %1611 = vmatpush1.msra.mxu0 0.0
    %1612 = vmatprep.subr.mxu0 0.0
    %1613 = vmatpush1.msra.mxu0 0.0
    %1614 = vmatprep.subr.mxu0 0.0
    %1615 = vmatpush1.msra.mxu0 0.0
    %1616 = vmatprep.subr.mxu0 0.0
    %1617 = vmatpush1.msra.mxu0 0.0
    %1618 = vmatprep.mubr.f32.mxu0 0.0
    %1619 = vmatmul.mubr.f32.gmra.mrb[0].mxu0 %v1553
    %v1620 = vpop.f32.mrb[0].mxu0
    %v1621 = vadd.f32 %v295, %v1620
    %v1622 = vpop.f32.mrb[0].mxu0
    %v1623 = vadd.f32 %v299, %v1622
    %1624 = vdwg.mxu0
    %v1625 = vxor.u32 %v1621, 2147483648
    %v1626 = vxor.u32 %v1623, 2147483648
    %v1627 = vmul.f32 %v1625, 1.442695
    %v1628 = vpow.pop %v1627
    %v1629 = vmul.f32 %v1626, 1.442695
    %v1630 = vpow.pop %v1629
    %v1631 = vadd.f32 %v1628, 1.0
    %v1632 = vadd.f32 %v1630, 1.0
    %v1633 = vrcp.pop %v1631
    %v1634 = vmul.f32 1.0, %v1633
    %v1635 = vrcp.pop %v1632
    %v1636 = vmul.f32 1.0, %v1635
    %v1637 = vmul.f32 %v1634, %v1481
    %1638 = vmatprep.subr.mxu0 0.0
    %1639 = vmatpush1.msra.mxu0 %v242
    %1640 = vmatprep.subr.mxu0 0.0
    %1641 = vmatpush1.msra.mxu0 %v243
    %1642 = vmatprep.subr.mxu0 0.0
    %1643 = vmatpush1.msra.mxu0 %v244
    %1644 = vmatprep.subr.mxu0 0.0
    %1645 = vmatpush1.msra.mxu0 %v245
    %1646 = vmatprep.subr.mxu0 0.0
    %1647 = vmatpush1.msra.mxu0 %v246
    %1648 = vmatprep.subr.mxu0 0.0
    %1649 = vmatpush1.msra.mxu0 %v247
    %1650 = vmatprep.subr.mxu0 0.0
    %1651 = vmatpush1.msra.mxu0 %v248
    %1652 = vmatprep.subr.mxu0 0.0
    %1653 = vmatpush1.msra.mxu0 %v249
    %1654 = vmatprep.subr.mxu0 0.0
    %1655 = vmatpush1.msra.mxu0 %v250
    %1656 = vmatprep.subr.mxu0 0.0
    %1657 = vmatpush1.msra.mxu0 %v251
    %1658 = vmatprep.subr.mxu0 0.0
    %1659 = vmatpush1.msra.mxu0 %v252
    %1660 = vmatprep.subr.mxu0 0.0
    %1661 = vmatpush1.msra.mxu0 %v253
    %1662 = vmatprep.subr.mxu0 0.0
    %1663 = vmatpush1.msra.mxu0 %v254
    %1664 = vmatprep.subr.mxu0 0.0
    %1665 = vmatpush1.msra.mxu0 %v255
    %1666 = vmatprep.subr.mxu0 0.0
    %1667 = vmatpush1.msra.mxu0 %v256
    %1668 = vmatprep.subr.mxu0 0.0
    %1669 = vmatpush1.msra.mxu0 %v257
    %1670 = vmatprep.subr.mxu0 0.0
    %1671 = vmatpush1.msra.mxu0 0.0
    %1672 = vmatprep.subr.mxu0 0.0
    %1673 = vmatpush1.msra.mxu0 0.0
    %1674 = vmatprep.subr.mxu0 0.0
    %1675 = vmatpush1.msra.mxu0 0.0
    %1676 = vmatprep.subr.mxu0 0.0
    %1677 = vmatpush1.msra.mxu0 0.0
    %1678 = vmatprep.subr.mxu0 0.0
    %1679 = vmatpush1.msra.mxu0 0.0
    %1680 = vmatprep.subr.mxu0 0.0
    %1681 = vmatpush1.msra.mxu0 0.0
    %1682 = vmatprep.subr.mxu0 0.0
    %1683 = vmatpush1.msra.mxu0 0.0
    %1684 = vmatprep.subr.mxu0 0.0
    %1685 = vmatpush1.msra.mxu0 0.0
    %1686 = vmatprep.subr.mxu0 0.0
    %1687 = vmatpush1.msra.mxu0 0.0
    %1688 = vmatprep.subr.mxu0 0.0
    %1689 = vmatpush1.msra.mxu0 0.0
    %1690 = vmatprep.subr.mxu0 0.0
    %1691 = vmatpush1.msra.mxu0 0.0
    %1692 = vmatprep.subr.mxu0 0.0
    %1693 = vmatpush1.msra.mxu0 0.0
    %1694 = vmatprep.subr.mxu0 0.0
    %1695 = vmatpush1.msra.mxu0 0.0
    %1696 = vmatprep.subr.mxu0 0.0
    %1697 = vmatpush1.msra.mxu0 0.0
    %1698 = vmatprep.subr.mxu0 0.0
    %1699 = vmatpush1.msra.mxu0 0.0
    %1700 = vmatprep.subr.mxu0 0.0
    %1701 = vmatpush1.msra.mxu0 0.0
    %1702 = vmatprep.mubr.f32.mxu0 0.0
    %1703 = vmatmul.mubr.f32.gmra.mrb[0].mxu0 %v1476
    %v1704 = vpop.f32.mrb[0].mxu0
    %v1705 = vadd.f32 %v307, %v1704
    %v1706 = vpop.f32.mrb[0].mxu0
    %1707 = vdwg.mxu0
    %v1708 = vmul.f32 %v1636, %v1705
    %v1709 = vadd.f32 %v1637, %v1708
    %v1710 = vtanh.pop %v1709
    %s1711 = scalar_lea.vmem [#allocation4], 40
    %1712 = vst [vmem:[%s1711] sm:$0xff] %v1710
    %s1713 = scalar_lea.vmem [#allocation3], 96
    %v1714 = vld [vmem:[%s1713] sm:$0xff]
    %v1715 = vld [vmem:[%s1713 + $0x8] sm:$0xff]
    %1716 = vmatprep.subr.mxu0 0.0
    %1717 = vmatpush1.msra.mxu0 %v226
    %1718 = vmatprep.subr.mxu0 0.0
    %1719 = vmatpush1.msra.mxu0 %v227
    %1720 = vmatprep.subr.mxu0 0.0
    %1721 = vmatpush1.msra.mxu0 %v228
    %1722 = vmatprep.subr.mxu0 0.0
    %1723 = vmatpush1.msra.mxu0 %v229
    %1724 = vmatprep.subr.mxu0 0.0
    %1725 = vmatpush1.msra.mxu0 %v230
    %1726 = vmatprep.subr.mxu0 0.0
    %1727 = vmatpush1.msra.mxu0 %v231
    %1728 = vmatprep.subr.mxu0 0.0
    %1729 = vmatpush1.msra.mxu0 %v232
    %1730 = vmatprep.subr.mxu0 0.0
    %1731 = vmatpush1.msra.mxu0 %v233
    %1732 = vmatprep.subr.mxu0 0.0
    %1733 = vmatpush1.msra.mxu0 %v234
    %1734 = vmatprep.subr.mxu0 0.0
    %1735 = vmatpush1.msra.mxu0 %v235
    %1736 = vmatprep.subr.mxu0 0.0
    %1737 = vmatpush1.msra.mxu0 %v236
    %1738 = vmatprep.subr.mxu0 0.0
    %1739 = vmatpush1.msra.mxu0 %v237
    %1740 = vmatprep.subr.mxu0 0.0
    %1741 = vmatpush1.msra.mxu0 %v238
    %1742 = vmatprep.subr.mxu0 0.0
    %1743 = vmatpush1.msra.mxu0 %v239
    %1744 = vmatprep.subr.mxu0 0.0
    %1745 = vmatpush1.msra.mxu0 %v240
    %1746 = vmatprep.subr.mxu0 0.0
    %1747 = vmatpush1.msra.mxu0 %v241
    %1748 = vmatprep.subr.mxu0 0.0
    %1749 = vmatpush1.msra.mxu0 0.0
    %1750 = vmatprep.subr.mxu0 0.0
    %1751 = vmatpush1.msra.mxu0 0.0
    %1752 = vmatprep.subr.mxu0 0.0
    %1753 = vmatpush1.msra.mxu0 0.0
    %1754 = vmatprep.subr.mxu0 0.0
    %1755 = vmatpush1.msra.mxu0 0.0
    %1756 = vmatprep.subr.mxu0 0.0
    %1757 = vmatpush1.msra.mxu0 0.0
    %1758 = vmatprep.subr.mxu0 0.0
    %1759 = vmatpush1.msra.mxu0 0.0
    %1760 = vmatprep.subr.mxu0 0.0
    %1761 = vmatpush1.msra.mxu0 0.0
    %1762 = vmatprep.subr.mxu0 0.0
    %1763 = vmatpush1.msra.mxu0 0.0
    %1764 = vmatprep.subr.mxu0 0.0
    %1765 = vmatpush1.msra.mxu0 0.0
    %1766 = vmatprep.subr.mxu0 0.0
    %1767 = vmatpush1.msra.mxu0 0.0
    %1768 = vmatprep.subr.mxu0 0.0
    %1769 = vmatpush1.msra.mxu0 0.0
    %1770 = vmatprep.subr.mxu0 0.0
    %1771 = vmatpush1.msra.mxu0 0.0
    %1772 = vmatprep.subr.mxu0 0.0
    %1773 = vmatpush1.msra.mxu0 0.0
    %1774 = vmatprep.subr.mxu0 0.0
    %1775 = vmatpush1.msra.mxu0 0.0
    %1776 = vmatprep.subr.mxu0 0.0
    %1777 = vmatpush1.msra.mxu0 0.0
    %1778 = vmatprep.subr.mxu0 0.0
    %1779 = vmatpush1.msra.mxu0 0.0
    %1780 = vmatprep.mubr.f32.mxu0 0.0
    %1781 = vmatmul.mubr.f32.gmra.mrb[0].mxu0 %v1553
    %v1782 = vpop.f32.mrb[0].mxu0
    %v1783 = vadd.f32 0.0, %v1782
    %v1784 = vpop.f32.mrb[0].mxu0
    %1785 = vdwg.mxu0
    %v1786 = vadd.f32 %v1714, %v1783
    %v1787 = vtanh.pop %v1786
    %1788 = vmatprep.subr.mxu0 %v259
    %1789 = vmatpush1.msra.mxu0 %v258
    %1790 = vmatprep.subr.mxu0 %v261
    %1791 = vmatpush1.msra.mxu0 %v260
    %1792 = vmatprep.subr.mxu0 %v263
    %1793 = vmatpush1.msra.mxu0 %v262
    %1794 = vmatprep.subr.mxu0 %v265
    %1795 = vmatpush1.msra.mxu0 %v264
    %1796 = vmatprep.subr.mxu0 %v267
    %1797 = vmatpush1.msra.mxu0 %v266
    %1798 = vmatprep.subr.mxu0 %v269
    %1799 = vmatpush1.msra.mxu0 %v268
    %1800 = vmatprep.subr.mxu0 %v271
    %1801 = vmatpush1.msra.mxu0 %v270
    %1802 = vmatprep.subr.mxu0 %v273
    %1803 = vmatpush1.msra.mxu0 %v272
    %1804 = vmatprep.subr.mxu0 %v275
    %1805 = vmatpush1.msra.mxu0 %v274
    %1806 = vmatprep.subr.mxu0 %v277
    %1807 = vmatpush1.msra.mxu0 %v276
    %1808 = vmatprep.subr.mxu0 %v279
    %1809 = vmatpush1.msra.mxu0 %v278
    %1810 = vmatprep.subr.mxu0 %v281
    %1811 = vmatpush1.msra.mxu0 %v280
    %1812 = vmatprep.subr.mxu0 %v283
    %1813 = vmatpush1.msra.mxu0 %v282
    %1814 = vmatprep.subr.mxu0 %v285
    %1815 = vmatpush1.msra.mxu0 %v284
    %1816 = vmatprep.subr.mxu0 %v287
    %1817 = vmatpush1.msra.mxu0 %v286
    %1818 = vmatprep.subr.mxu0 %v289
    %1819 = vmatpush1.msra.mxu0 %v288
    %1820 = vmatprep.subr.mxu0 0.0
    %1821 = vmatpush1.msra.mxu0 0.0
    %1822 = vmatprep.subr.mxu0 0.0
    %1823 = vmatpush1.msra.mxu0 0.0
    %1824 = vmatprep.subr.mxu0 0.0
    %1825 = vmatpush1.msra.mxu0 0.0
    %1826 = vmatprep.subr.mxu0 0.0
    %1827 = vmatpush1.msra.mxu0 0.0
    %1828 = vmatprep.subr.mxu0 0.0
    %1829 = vmatpush1.msra.mxu0 0.0
    %1830 = vmatprep.subr.mxu0 0.0
    %1831 = vmatpush1.msra.mxu0 0.0
    %1832 = vmatprep.subr.mxu0 0.0
    %1833 = vmatpush1.msra.mxu0 0.0
    %1834 = vmatprep.subr.mxu0 0.0
    %1835 = vmatpush1.msra.mxu0 0.0
    %1836 = vmatprep.subr.mxu0 0.0
    %1837 = vmatpush1.msra.mxu0 0.0
    %1838 = vmatprep.subr.mxu0 0.0
    %1839 = vmatpush1.msra.mxu0 0.0
    %1840 = vmatprep.subr.mxu0 0.0
    %1841 = vmatpush1.msra.mxu0 0.0
    %1842 = vmatprep.subr.mxu0 0.0
    %1843 = vmatpush1.msra.mxu0 0.0
    %1844 = vmatprep.subr.mxu0 0.0
    %1845 = vmatpush1.msra.mxu0 0.0
    %1846 = vmatprep.subr.mxu0 0.0
    %1847 = vmatpush1.msra.mxu0 0.0
    %1848 = vmatprep.subr.mxu0 0.0
    %1849 = vmatpush1.msra.mxu0 0.0
    %1850 = vmatprep.subr.mxu0 0.0
    %1851 = vmatpush1.msra.mxu0 0.0
    %1852 = vmatprep.mubr.f32.mxu0 0.0
    %1853 = vmatmul.mubr.f32.gmra.mrb[0].mxu0 %v1787
    %v1854 = vpop.f32.mrb[0].mxu0
    %v1855 = vadd.f32 %v295, %v1854
    %v1856 = vpop.f32.mrb[0].mxu0
    %v1857 = vadd.f32 %v299, %v1856
    %1858 = vdwg.mxu0
    %v1859 = vxor.u32 %v1855, 2147483648
    %v1860 = vxor.u32 %v1857, 2147483648
    %v1861 = vmul.f32 %v1859, 1.442695
    %v1862 = vpow.pop %v1861
    %v1863 = vmul.f32 %v1860, 1.442695
    %v1864 = vpow.pop %v1863
    %v1865 = vadd.f32 %v1862, 1.0
    %v1866 = vadd.f32 %v1864, 1.0
    %v1867 = vrcp.pop %v1865
    %v1868 = vmul.f32 1.0, %v1867
    %v1869 = vrcp.pop %v1866
    %v1870 = vmul.f32 1.0, %v1869
    %v1871 = vmul.f32 %v1868, %v1715
    %1872 = vmatprep.subr.mxu0 0.0
    %1873 = vmatpush1.msra.mxu0 %v242
    %1874 = vmatprep.subr.mxu0 0.0
    %1875 = vmatpush1.msra.mxu0 %v243
    %1876 = vmatprep.subr.mxu0 0.0
    %1877 = vmatpush1.msra.mxu0 %v244
    %1878 = vmatprep.subr.mxu0 0.0
    %1879 = vmatpush1.msra.mxu0 %v245
    %1880 = vmatprep.subr.mxu0 0.0
    %1881 = vmatpush1.msra.mxu0 %v246
    %1882 = vmatprep.subr.mxu0 0.0
    %1883 = vmatpush1.msra.mxu0 %v247
    %1884 = vmatprep.subr.mxu0 0.0
    %1885 = vmatpush1.msra.mxu0 %v248
    %1886 = vmatprep.subr.mxu0 0.0
    %1887 = vmatpush1.msra.mxu0 %v249
    %1888 = vmatprep.subr.mxu0 0.0
    %1889 = vmatpush1.msra.mxu0 %v250
    %1890 = vmatprep.subr.mxu0 0.0
    %1891 = vmatpush1.msra.mxu0 %v251
    %1892 = vmatprep.subr.mxu0 0.0
    %1893 = vmatpush1.msra.mxu0 %v252
    %1894 = vmatprep.subr.mxu0 0.0
    %1895 = vmatpush1.msra.mxu0 %v253
    %1896 = vmatprep.subr.mxu0 0.0
    %1897 = vmatpush1.msra.mxu0 %v254
    %1898 = vmatprep.subr.mxu0 0.0
    %1899 = vmatpush1.msra.mxu0 %v255
    %1900 = vmatprep.subr.mxu0 0.0
    %1901 = vmatpush1.msra.mxu0 %v256
    %1902 = vmatprep.subr.mxu0 0.0
    %1903 = vmatpush1.msra.mxu0 %v257
    %1904 = vmatprep.subr.mxu0 0.0
    %1905 = vmatpush1.msra.mxu0 0.0
    %1906 = vmatprep.subr.mxu0 0.0
    %1907 = vmatpush1.msra.mxu0 0.0
    %1908 = vmatprep.subr.mxu0 0.0
    %1909 = vmatpush1.msra.mxu0 0.0
    %1910 = vmatprep.subr.mxu0 0.0
    %1911 = vmatpush1.msra.mxu0 0.0
    %1912 = vmatprep.subr.mxu0 0.0
    %1913 = vmatpush1.msra.mxu0 0.0
    %1914 = vmatprep.subr.mxu0 0.0
    %1915 = vmatpush1.msra.mxu0 0.0
    %1916 = vmatprep.subr.mxu0 0.0
    %1917 = vmatpush1.msra.mxu0 0.0
    %1918 = vmatprep.subr.mxu0 0.0
    %1919 = vmatpush1.msra.mxu0 0.0
    %1920 = vmatprep.subr.mxu0 0.0
    %1921 = vmatpush1.msra.mxu0 0.0
    %1922 = vmatprep.subr.mxu0 0.0
    %1923 = vmatpush1.msra.mxu0 0.0
    %1924 = vmatprep.subr.mxu0 0.0
    %1925 = vmatpush1.msra.mxu0 0.0
    %1926 = vmatprep.subr.mxu0 0.0
    %1927 = vmatpush1.msra.mxu0 0.0
    %1928 = vmatprep.subr.mxu0 0.0
    %1929 = vmatpush1.msra.mxu0 0.0
    %1930 = vmatprep.subr.mxu0 0.0
    %1931 = vmatpush1.msra.mxu0 0.0
    %1932 = vmatprep.subr.mxu0 0.0
    %1933 = vmatpush1.msra.mxu0 0.0
    %1934 = vmatprep.subr.mxu0 0.0
    %1935 = vmatpush1.msra.mxu0 0.0
    %1936 = vmatprep.mubr.f32.mxu0 0.0
    %1937 = vmatmul.mubr.f32.gmra.mrb[0].mxu0 %v1710
    %v1938 = vpop.f32.mrb[0].mxu0
    %v1939 = vadd.f32 %v307, %v1938
    %v1940 = vpop.f32.mrb[0].mxu0
    %1941 = vdwg.mxu0
    %v1942 = vmul.f32 %v1870, %v1939
    %v1943 = vadd.f32 %v1871, %v1942
    %v1944 = vtanh.pop %v1943
    %s1945 = scalar_lea.vmem [#allocation4], 48
    %1946 = vst [vmem:[%s1945] sm:$0xff] %v1944
    %s1947 = scalar_lea.vmem [#allocation3], 112
    %v1948 = vld [vmem:[%s1947] sm:$0xff]
    %v1949 = vld [vmem:[%s1947 + $0x8] sm:$0xff]
    %1950 = vmatprep.subr.mxu0 0.0
    %1951 = vmatpush1.msra.mxu0 %v226
    %1952 = vmatprep.subr.mxu0 0.0
    %1953 = vmatpush1.msra.mxu0 %v227
    %1954 = vmatprep.subr.mxu0 0.0
    %1955 = vmatpush1.msra.mxu0 %v228
    %1956 = vmatprep.subr.mxu0 0.0
    %1957 = vmatpush1.msra.mxu0 %v229
    %1958 = vmatprep.subr.mxu0 0.0
    %1959 = vmatpush1.msra.mxu0 %v230
    %1960 = vmatprep.subr.mxu0 0.0
    %1961 = vmatpush1.msra.mxu0 %v231
    %1962 = vmatprep.subr.mxu0 0.0
    %1963 = vmatpush1.msra.mxu0 %v232
    %1964 = vmatprep.subr.mxu0 0.0
    %1965 = vmatpush1.msra.mxu0 %v233
    %1966 = vmatprep.subr.mxu0 0.0
    %1967 = vmatpush1.msra.mxu0 %v234
    %1968 = vmatprep.subr.mxu0 0.0
    %1969 = vmatpush1.msra.mxu0 %v235
    %1970 = vmatprep.subr.mxu0 0.0
    %1971 = vmatpush1.msra.mxu0 %v236
    %1972 = vmatprep.subr.mxu0 0.0
    %1973 = vmatpush1.msra.mxu0 %v237
    %1974 = vmatprep.subr.mxu0 0.0
    %1975 = vmatpush1.msra.mxu0 %v238
    %1976 = vmatprep.subr.mxu0 0.0
    %1977 = vmatpush1.msra.mxu0 %v239
    %1978 = vmatprep.subr.mxu0 0.0
    %1979 = vmatpush1.msra.mxu0 %v240
    %1980 = vmatprep.subr.mxu0 0.0
    %1981 = vmatpush1.msra.mxu0 %v241
    %1982 = vmatprep.subr.mxu0 0.0
    %1983 = vmatpush1.msra.mxu0 0.0
    %1984 = vmatprep.subr.mxu0 0.0
    %1985 = vmatpush1.msra.mxu0 0.0
    %1986 = vmatprep.subr.mxu0 0.0
    %1987 = vmatpush1.msra.mxu0 0.0
    %1988 = vmatprep.subr.mxu0 0.0
    %1989 = vmatpush1.msra.mxu0 0.0
    %1990 = vmatprep.subr.mxu0 0.0
    %1991 = vmatpush1.msra.mxu0 0.0
    %1992 = vmatprep.subr.mxu0 0.0
    %1993 = vmatpush1.msra.mxu0 0.0
    %1994 = vmatprep.subr.mxu0 0.0
    %1995 = vmatpush1.msra.mxu0 0.0
    %1996 = vmatprep.subr.mxu0 0.0
    %1997 = vmatpush1.msra.mxu0 0.0
    %1998 = vmatprep.subr.mxu0 0.0
    %1999 = vmatpush1.msra.mxu0 0.0
    %2000 = vmatprep.subr.mxu0 0.0
    %2001 = vmatpush1.msra.mxu0 0.0
    %2002 = vmatprep.subr.mxu0 0.0
    %2003 = vmatpush1.msra.mxu0 0.0
    %2004 = vmatprep.subr.mxu0 0.0
    %2005 = vmatpush1.msra.mxu0 0.0
    %2006 = vmatprep.subr.mxu0 0.0
    %2007 = vmatpush1.msra.mxu0 0.0
    %2008 = vmatprep.subr.mxu0 0.0
    %2009 = vmatpush1.msra.mxu0 0.0
    %2010 = vmatprep.subr.mxu0 0.0
    %2011 = vmatpush1.msra.mxu0 0.0
    %2012 = vmatprep.subr.mxu0 0.0
    %2013 = vmatpush1.msra.mxu0 0.0
    %2014 = vmatprep.mubr.f32.mxu0 0.0
    %2015 = vmatmul.mubr.f32.gmra.mrb[0].mxu0 %v1787
    %v2016 = vpop.f32.mrb[0].mxu0
    %v2017 = vadd.f32 0.0, %v2016
    %v2018 = vpop.f32.mrb[0].mxu0
    %2019 = vdwg.mxu0
    %v2020 = vadd.f32 %v1948, %v2017
    %v2021 = vtanh.pop %v2020
    %2022 = vmatprep.subr.mxu0 %v259
    %2023 = vmatpush1.msra.mxu0 %v258
    %2024 = vmatprep.subr.mxu0 %v261
    %2025 = vmatpush1.msra.mxu0 %v260
    %2026 = vmatprep.subr.mxu0 %v263
    %2027 = vmatpush1.msra.mxu0 %v262
    %2028 = vmatprep.subr.mxu0 %v265
    %2029 = vmatpush1.msra.mxu0 %v264
    %2030 = vmatprep.subr.mxu0 %v267
    %2031 = vmatpush1.msra.mxu0 %v266
    %2032 = vmatprep.subr.mxu0 %v269
    %2033 = vmatpush1.msra.mxu0 %v268
    %2034 = vmatprep.subr.mxu0 %v271
    %2035 = vmatpush1.msra.mxu0 %v270
    %2036 = vmatprep.subr.mxu0 %v273
    %2037 = vmatpush1.msra.mxu0 %v272
    %2038 = vmatprep.subr.mxu0 %v275
    %2039 = vmatpush1.msra.mxu0 %v274
    %2040 = vmatprep.subr.mxu0 %v277
    %2041 = vmatpush1.msra.mxu0 %v276
    %2042 = vmatprep.subr.mxu0 %v279
    %2043 = vmatpush1.msra.mxu0 %v278
    %2044 = vmatprep.subr.mxu0 %v281
    %2045 = vmatpush1.msra.mxu0 %v280
    %2046 = vmatprep.subr.mxu0 %v283
    %2047 = vmatpush1.msra.mxu0 %v282
    %2048 = vmatprep.subr.mxu0 %v285
    %2049 = vmatpush1.msra.mxu0 %v284
    %2050 = vmatprep.subr.mxu0 %v287
    %2051 = vmatpush1.msra.mxu0 %v286
    %2052 = vmatprep.subr.mxu0 %v289
    %2053 = vmatpush1.msra.mxu0 %v288
    %2054 = vmatprep.subr.mxu0 0.0
    %2055 = vmatpush1.msra.mxu0 0.0
    %2056 = vmatprep.subr.mxu0 0.0
    %2057 = vmatpush1.msra.mxu0 0.0
    %2058 = vmatprep.subr.mxu0 0.0
    %2059 = vmatpush1.msra.mxu0 0.0
    %2060 = vmatprep.subr.mxu0 0.0
    %2061 = vmatpush1.msra.mxu0 0.0
    %2062 = vmatprep.subr.mxu0 0.0
    %2063 = vmatpush1.msra.mxu0 0.0
    %2064 = vmatprep.subr.mxu0 0.0
    %2065 = vmatpush1.msra.mxu0 0.0
    %2066 = vmatprep.subr.mxu0 0.0
    %2067 = vmatpush1.msra.mxu0 0.0
    %2068 = vmatprep.subr.mxu0 0.0
    %2069 = vmatpush1.msra.mxu0 0.0
    %2070 = vmatprep.subr.mxu0 0.0
    %2071 = vmatpush1.msra.mxu0 0.0
    %2072 = vmatprep.subr.mxu0 0.0
    %2073 = vmatpush1.msra.mxu0 0.0
    %2074 = vmatprep.subr.mxu0 0.0
    %2075 = vmatpush1.msra.mxu0 0.0
    %2076 = vmatprep.subr.mxu0 0.0
    %2077 = vmatpush1.msra.mxu0 0.0
    %2078 = vmatprep.subr.mxu0 0.0
    %2079 = vmatpush1.msra.mxu0 0.0
    %2080 = vmatprep.subr.mxu0 0.0
    %2081 = vmatpush1.msra.mxu0 0.0
    %2082 = vmatprep.subr.mxu0 0.0
    %2083 = vmatpush1.msra.mxu0 0.0
    %2084 = vmatprep.subr.mxu0 0.0
    %2085 = vmatpush1.msra.mxu0 0.0
    %2086 = vmatprep.mubr.f32.mxu0 0.0
    %2087 = vmatmul.mubr.f32.gmra.mrb[0].mxu0 %v2021
    %v2088 = vpop.f32.mrb[0].mxu0
    %v2089 = vadd.f32 %v295, %v2088
    %v2090 = vpop.f32.mrb[0].mxu0
    %v2091 = vadd.f32 %v299, %v2090
    %2092 = vdwg.mxu0
    %v2093 = vxor.u32 %v2089, 2147483648
    %v2094 = vxor.u32 %v2091, 2147483648
    %v2095 = vmul.f32 %v2093, 1.442695
    %v2096 = vpow.pop %v2095
    %v2097 = vmul.f32 %v2094, 1.442695
    %v2098 = vpow.pop %v2097
    %v2099 = vadd.f32 %v2096, 1.0
    %v2100 = vadd.f32 %v2098, 1.0
    %v2101 = vrcp.pop %v2099
    %v2102 = vmul.f32 1.0, %v2101
    %v2103 = vrcp.pop %v2100
    %v2104 = vmul.f32 1.0, %v2103
    %v2105 = vmul.f32 %v2102, %v1949
    %2106 = vmatprep.subr.mxu0 0.0
    %2107 = vmatpush1.msra.mxu0 %v242
    %2108 = vmatprep.subr.mxu0 0.0
    %2109 = vmatpush1.msra.mxu0 %v243
    %2110 = vmatprep.subr.mxu0 0.0
    %2111 = vmatpush1.msra.mxu0 %v244
    %2112 = vmatprep.subr.mxu0 0.0
    %2113 = vmatpush1.msra.mxu0 %v245
    %2114 = vmatprep.subr.mxu0 0.0
    %2115 = vmatpush1.msra.mxu0 %v246
    %2116 = vmatprep.subr.mxu0 0.0
    %2117 = vmatpush1.msra.mxu0 %v247
    %2118 = vmatprep.subr.mxu0 0.0
    %2119 = vmatpush1.msra.mxu0 %v248
    %2120 = vmatprep.subr.mxu0 0.0
    %2121 = vmatpush1.msra.mxu0 %v249
    %2122 = vmatprep.subr.mxu0 0.0
    %2123 = vmatpush1.msra.mxu0 %v250
    %2124 = vmatprep.subr.mxu0 0.0
    %2125 = vmatpush1.msra.mxu0 %v251
    %2126 = vmatprep.subr.mxu0 0.0
    %2127 = vmatpush1.msra.mxu0 %v252
    %2128 = vmatprep.subr.mxu0 0.0
    %2129 = vmatpush1.msra.mxu0 %v253
    %2130 = vmatprep.subr.mxu0 0.0
    %2131 = vmatpush1.msra.mxu0 %v254
    %2132 = vmatprep.subr.mxu0 0.0
    %2133 = vmatpush1.msra.mxu0 %v255
    %2134 = vmatprep.subr.mxu0 0.0
    %2135 = vmatpush1.msra.mxu0 %v256
    %2136 = vmatprep.subr.mxu0 0.0
    %2137 = vmatpush1.msra.mxu0 %v257
    %2138 = vmatprep.subr.mxu0 0.0
    %2139 = vmatpush1.msra.mxu0 0.0
    %2140 = vmatprep.subr.mxu0 0.0
    %2141 = vmatpush1.msra.mxu0 0.0
    %2142 = vmatprep.subr.mxu0 0.0
    %2143 = vmatpush1.msra.mxu0 0.0
    %2144 = vmatprep.subr.mxu0 0.0
    %2145 = vmatpush1.msra.mxu0 0.0
    %2146 = vmatprep.subr.mxu0 0.0
    %2147 = vmatpush1.msra.mxu0 0.0
    %2148 = vmatprep.subr.mxu0 0.0
    %2149 = vmatpush1.msra.mxu0 0.0
    %2150 = vmatprep.subr.mxu0 0.0
    %2151 = vmatpush1.msra.mxu0 0.0
    %2152 = vmatprep.subr.mxu0 0.0
    %2153 = vmatpush1.msra.mxu0 0.0
    %2154 = vmatprep.subr.mxu0 0.0
    %2155 = vmatpush1.msra.mxu0 0.0
    %2156 = vmatprep.subr.mxu0 0.0
    %2157 = vmatpush1.msra.mxu0 0.0
    %2158 = vmatprep.subr.mxu0 0.0
    %2159 = vmatpush1.msra.mxu0 0.0
    %2160 = vmatprep.subr.mxu0 0.0
    %2161 = vmatpush1.msra.mxu0 0.0
    %2162 = vmatprep.subr.mxu0 0.0
    %2163 = vmatpush1.msra.mxu0 0.0
    %2164 = vmatprep.subr.mxu0 0.0
    %2165 = vmatpush1.msra.mxu0 0.0
    %2166 = vmatprep.subr.mxu0 0.0
    %2167 = vmatpush1.msra.mxu0 0.0
    %2168 = vmatprep.subr.mxu0 0.0
    %2169 = vmatpush1.msra.mxu0 0.0
    %2170 = vmatprep.mubr.f32.mxu0 0.0
    %2171 = vmatmul.mubr.f32.gmra.mrb[0].mxu0 %v1944
    %v2172 = vpop.f32.mrb[0].mxu0
    %v2173 = vadd.f32 %v307, %v2172
    %v2174 = vpop.f32.mrb[0].mxu0
    %2175 = vdwg.mxu0
    %v2176 = vmul.f32 %v2104, %v2173
    %v2177 = vadd.f32 %v2105, %v2176
    %v2178 = vtanh.pop %v2177
    %s2179 = scalar_lea.vmem [#allocation4], 56
    %2180 = vst [vmem:[%s2179] sm:$0xff] %v2178
    %2181 = vst [vmem:[#allocation2] sm:$0xff] %v2021
    %2182 = vst [vmem:[#allocation2 + $0x8] sm:$0xff] %v2178
    %v2183 = vld [vmem:[#allocation4] sm:$0xff]
    %v2184 = vld [vmem:[#allocation4 + $0x8] sm:$0xff]
    %v2185 = vld [vmem:[#allocation4 + $0x10] sm:$0xff]
    %v2186 = vld [vmem:[#allocation4 + $0x18] sm:$0xff]
    %v2187 = vld [vmem:[#allocation4 + $0x20] sm:$0xff]
    %v2188 = vld [vmem:[#allocation4 + $0x28] sm:$0xff]
    %v2189 = vld [vmem:[#allocation4 + $0x30] sm:$0xff]
    %v2190 = vld [vmem:[#allocation4 + $0x38] sm:$0xff]
    %v2191 = vld [vmem:[%s8] sm:$0xff]
    %v2192 = vld [vmem:[%s8 + $0x8] sm:$0xff]
    %v2193 = vld [vmem:[%s8 + $0x10] sm:$0xff]
    %v2194 = vld [vmem:[%s8 + $0x18] sm:$0xff]
    %v2195 = vld [vmem:[%s8 + $0x20] sm:$0xff]
    %v2196 = vld [vmem:[%s8 + $0x28] sm:$0xff]
    %v2197 = vld [vmem:[%s8 + $0x30] sm:$0xff]
    %v2198 = vld [vmem:[%s8 + $0x38] sm:$0xff]
    %v2199 = vld [vmem:[%s8 + $0x40] sm:$0xff]
    %v2200 = vld [vmem:[%s8 + $0x48] sm:$0xff]
    %v2201 = vld [vmem:[%s8 + $0x50] sm:$0xff]
    %v2202 = vld [vmem:[%s8 + $0x58] sm:$0xff]
    %v2203 = vld [vmem:[%s8 + $0x60] sm:$0xff]
    %v2204 = vld [vmem:[%s8 + $0x68] sm:$0xff]
    %v2205 = vld [vmem:[%s8 + $0x70] sm:$0xff]
    %v2206 = vld [vmem:[%s8 + $0x78] sm:$0xff]
    %v2207 = vld [vmem:[%s8 + $0x80] sm:$0xff]
    %v2208 = vld [vmem:[%s8 + $0x88] sm:$0xff]
    %v2209 = vld [vmem:[%s8 + $0x90] sm:$0xff]
    %v2210 = vld [vmem:[%s8 + $0x98] sm:$0xff]
    %v2211 = vld [vmem:[%s8 + $0xa0] sm:$0xff]
    %v2212 = vld [vmem:[%s8 + $0xa8] sm:$0xff]
    %v2213 = vld [vmem:[%s8 + $0xb0] sm:$0xff]
    %v2214 = vld [vmem:[%s8 + $0xb8] sm:$0xff]
    %v2215 = vld [vmem:[%s8 + $0xc0] sm:$0xff]
    %v2216 = vld [vmem:[%s8 + $0xc8] sm:$0xff]
    %v2217 = vld [vmem:[%s8 + $0xd0] sm:$0xff]
    %v2218 = vld [vmem:[%s8 + $0xd8] sm:$0xff]
    %v2219 = vld [vmem:[%s8 + $0xe0] sm:$0xff]
    %v2220 = vld [vmem:[%s8 + $0xe8] sm:$0xff]
    %v2221 = vld [vmem:[%s8 + $0xf0] sm:$0xff]
    %v2222 = vld [vmem:[%s8 + $0xf8] sm:$0xff]
    %v2223 = vld [vmem:[%s9] sm:$0x3]
    %v2225 = vlaneseq
    %v2226 = vshrl.u32 %v2225, 7
    %v2227 = vsub.s32 0, %v2226
    %v2228 = vrot.slane %v2223, %v2227
    %v2229 = vlaneseq
    %v2230 = vshrl.u32 %v2229, 7
    %v2231 = vsub.s32 1, %v2230
    %v2232 = vrot.slane %v2223, %v2231
    %2235 = vmatprep.subr.mxu0 %v2192
    %2236 = vmatpush1.msra.mxu0 %v2191
    %2237 = vmatprep.subr.mxu0 %v2194
    %2238 = vmatpush1.msra.mxu0 %v2193
    %2239 = vmatprep.subr.mxu0 %v2196
    %2240 = vmatpush1.msra.mxu0 %v2195
    %2241 = vmatprep.subr.mxu0 %v2198
    %2242 = vmatpush1.msra.mxu0 %v2197
    %2243 = vmatprep.subr.mxu0 %v2200
    %2244 = vmatpush1.msra.mxu0 %v2199
    %2245 = vmatprep.subr.mxu0 %v2202
    %2246 = vmatpush1.msra.mxu0 %v2201
    %2247 = vmatprep.subr.mxu0 %v2204
    %2248 = vmatpush1.msra.mxu0 %v2203
    %2249 = vmatprep.subr.mxu0 %v2206
    %2250 = vmatpush1.msra.mxu0 %v2205
    %2251 = vmatprep.subr.mxu0 %v2208
    %2252 = vmatpush1.msra.mxu0 %v2207
    %2253 = vmatprep.subr.mxu0 %v2210
    %2254 = vmatpush1.msra.mxu0 %v2209
    %2255 = vmatprep.subr.mxu0 %v2212
    %2256 = vmatpush1.msra.mxu0 %v2211
    %2257 = vmatprep.subr.mxu0 %v2214
    %2258 = vmatpush1.msra.mxu0 %v2213
    %2259 = vmatprep.subr.mxu0 %v2216
    %2260 = vmatpush1.msra.mxu0 %v2215
    %2261 = vmatprep.subr.mxu0 %v2218
    %2262 = vmatpush1.msra.mxu0 %v2217
    %2263 = vmatprep.subr.mxu0 %v2220
    %2264 = vmatpush1.msra.mxu0 %v2219
    %2265 = vmatprep.subr.mxu0 %v2222
    %2266 = vmatpush1.msra.mxu0 %v2221
    %2267 = vmatprep.subr.mxu0 0.0
    %2268 = vmatpush1.msra.mxu0 0.0
    %2269 = vmatprep.subr.mxu0 0.0
    %2270 = vmatpush1.msra.mxu0 0.0
    %2271 = vmatprep.subr.mxu0 0.0
    %2272 = vmatpush1.msra.mxu0 0.0
    %2273 = vmatprep.subr.mxu0 0.0
    %2274 = vmatpush1.msra.mxu0 0.0
    %2275 = vmatprep.subr.mxu0 0.0
    %2276 = vmatpush1.msra.mxu0 0.0
    %2277 = vmatprep.subr.mxu0 0.0
    %2278 = vmatpush1.msra.mxu0 0.0
    %2279 = vmatprep.subr.mxu0 0.0
    %2280 = vmatpush1.msra.mxu0 0.0
    %2281 = vmatprep.subr.mxu0 0.0
    %2282 = vmatpush1.msra.mxu0 0.0
    %2283 = vmatprep.subr.mxu0 0.0
    %2284 = vmatpush1.msra.mxu0 0.0
    %2285 = vmatprep.subr.mxu0 0.0
    %2286 = vmatpush1.msra.mxu0 0.0
    %2287 = vmatprep.subr.mxu0 0.0
    %2288 = vmatpush1.msra.mxu0 0.0
    %2289 = vmatprep.subr.mxu0 0.0
    %2290 = vmatpush1.msra.mxu0 0.0
    %2291 = vmatprep.subr.mxu0 0.0
    %2292 = vmatpush1.msra.mxu0 0.0
    %2293 = vmatprep.subr.mxu0 0.0
    %2294 = vmatpush1.msra.mxu0 0.0
    %2295 = vmatprep.subr.mxu0 0.0
    %2296 = vmatpush1.msra.mxu0 0.0
    %2297 = vmatprep.subr.mxu0 0.0
    %2298 = vmatpush1.msra.mxu0 0.0
    %2299 = vmatprep.mubr.f32.mxu0 0.0
    %2300 = vmatmul.mubr.f32.gmra.mrb[0].mxu0 %v2183
    %v2301 = vpop.f32.mrb[0].mxu0
    %v2302 = vadd.f32 %v2228, %v2301
    %v2303 = vpop.f32.mrb[0].mxu0
    %v2304 = vadd.f32 %v2232, %v2303
    %2305 = vmatprep.mubr.f32.mxu0 0.0
    %2306 = vmatmul.mubr.f32.gmra.mrb[0].mxu0 %v2184
    %v2307 = vpop.f32.mrb[0].mxu0
    %v2308 = vadd.f32 %v2228, %v2307
    %v2309 = vpop.f32.mrb[0].mxu0
    %v2310 = vadd.f32 %v2232, %v2309
    %2311 = vmatprep.mubr.f32.mxu0 0.0
    %2312 = vmatmul.mubr.f32.gmra.mrb[0].mxu0 %v2185
    %v2313 = vpop.f32.mrb[0].mxu0
    %v2314 = vadd.f32 %v2228, %v2313
    %v2315 = vpop.f32.mrb[0].mxu0
    %v2316 = vadd.f32 %v2232, %v2315
    %2317 = vmatprep.mubr.f32.mxu0 0.0
    %2318 = vmatmul.mubr.f32.gmra.mrb[0].mxu0 %v2186
    %v2319 = vpop.f32.mrb[0].mxu0
    %v2320 = vadd.f32 %v2228, %v2319
    %v2321 = vpop.f32.mrb[0].mxu0
    %v2322 = vadd.f32 %v2232, %v2321
    %2323 = vmatprep.mubr.f32.mxu0 0.0
    %2324 = vmatmul.mubr.f32.gmra.mrb[0].mxu0 %v2187
    %v2325 = vpop.f32.mrb[0].mxu0
    %v2326 = vadd.f32 %v2228, %v2325
    %v2327 = vpop.f32.mrb[0].mxu0
    %v2328 = vadd.f32 %v2232, %v2327
    %2329 = vmatprep.mubr.f32.mxu0 0.0
    %2330 = vmatmul.mubr.f32.gmra.mrb[0].mxu0 %v2188
    %v2331 = vpop.f32.mrb[0].mxu0
    %v2332 = vadd.f32 %v2228, %v2331
    %v2333 = vpop.f32.mrb[0].mxu0
    %v2334 = vadd.f32 %v2232, %v2333
    %2335 = vmatprep.mubr.f32.mxu0 0.0
    %2336 = vmatmul.mubr.f32.gmra.mrb[0].mxu0 %v2189
    %v2337 = vpop.f32.mrb[0].mxu0
    %v2338 = vadd.f32 %v2228, %v2337
    %v2339 = vpop.f32.mrb[0].mxu0
    %v2340 = vadd.f32 %v2232, %v2339
    %2341 = vmatprep.mubr.f32.mxu0 0.0
    %2342 = vmatmul.mubr.f32.gmra.mrb[0].mxu0 %v2190
    %v2343 = vpop.f32.mrb[0].mxu0
    %v2344 = vadd.f32 %v2228, %v2343
    %v2345 = vpop.f32.mrb[0].mxu0
    %v2346 = vadd.f32 %v2232, %v2345
    %2347 = vdwg.mxu0
    %2348 = vst [vmem:[#allocation5] sm:$0xff] %v2302
    %2349 = vst [vmem:[#allocation5 + $0x8] sm:$0xff] %v2304
    %2350 = vst [vmem:[#allocation5 + $0x10] sm:$0xff] %v2308
    %2351 = vst [vmem:[#allocation5 + $0x18] sm:$0xff] %v2310
    %2352 = vst [vmem:[#allocation5 + $0x20] sm:$0xff] %v2314
    %2353 = vst [vmem:[#allocation5 + $0x28] sm:$0xff] %v2316
    %2354 = vst [vmem:[#allocation5 + $0x30] sm:$0xff] %v2320
    %2355 = vst [vmem:[#allocation5 + $0x38] sm:$0xff] %v2322
    %2356 = vst [vmem:[#allocation5 + $0x40] sm:$0xff] %v2326
    %2357 = vst [vmem:[#allocation5 + $0x48] sm:$0xff] %v2328
    %2358 = vst [vmem:[#allocation5 + $0x50] sm:$0xff] %v2332
    %2359 = vst [vmem:[#allocation5 + $0x58] sm:$0xff] %v2334
    %2360 = vst [vmem:[#allocation5 + $0x60] sm:$0xff] %v2338
    %2361 = vst [vmem:[#allocation5 + $0x68] sm:$0xff] %v2340
    %2362 = vst [vmem:[#allocation5 + $0x70] sm:$0xff] %v2344
    %2363 = vst [vmem:[#allocation5 + $0x78] sm:$0xff] %v2346
    // Predicated region
    $region46: #{rnn_forward.1} parent=1 // pred_check
      %p2364 = pneg %p39
    $region47: #{rnn_forward.1} parent=1 // pred_check_branch
      %2366 = sbr.rel (%p2364) target = $region49
    $region48: #{rnn_forward.1} parent=1 // pred_region
      %2367 = vst [vmem:[#allocation7] sm:$0xff] %v2178
    $region49: #{rnn_forward.1} parent=1 // pred_fallthru
      _
    // Predicated region
    $region50: #{rnn_forward.1} parent=1 // pred_check
      _
    $region51: #{rnn_forward.1} parent=1 // pred_check_branch
      %2369 = sbr.rel (0) target = $region53
    $region52: #{rnn_forward.1} parent=1 // pred_region
      %s2371 = ssub.s32 2048, 2048
      %2372 = vsyncadd [#allocation6], %s2371
      %s2373 = sshll.u32 [#allocation5], 4
      %s2374 = int_to_ptr.vmem [resolvable:$true] %s2373
      %2379 = dma.vmem_to_hbm [thread:$0]  %s2374, 2048, %s10, [#allocation6], 256, 256, 16
    $region53: #{rnn_forward.1} parent=1 // pred_fallthru
      _
    // Predicated region
    $region54: #{rnn_forward.1} parent=1 // pred_check
      _
    $region55: #{rnn_forward.1} parent=1 // pred_check_branch
      %2381 = sbr.rel (0) target = $region57
    $region56: #{rnn_forward.1} parent=1 // pred_region
      %s2383 = ssub.s32 128, 128
      %2384 = vsyncadd [#allocation8], %s2383
      %s2386 = sshll.u32 [#allocation7], 4
      %s2387 = int_to_ptr.vmem [resolvable:$true] %s2386
      %2389 = dma.vmem_to_hbm [thread:$0]  %s2387, 128, %s11, [#allocation8]
    $region57: #{rnn_forward.1} parent=1 // pred_fallthru
      _
    // Predicated region
    $region58: #{rnn_forward.1} parent=1 // pred_check
      _
    $region59: #{rnn_forward.1} parent=1 // pred_check_branch
      %2391 = sbr.rel (0) target = $region61
    $region60: #{rnn_forward.1} parent=1 // pred_region
      %2392 = dma.done [#allocation6], 2048
    $region61: #{rnn_forward.1} parent=1 // pred_fallthru
      _
    // Predicated region
    $region62: #{rnn_forward.1} parent=1 // pred_check
      _
    $region63: #{rnn_forward.1} parent=1 // pred_check_branch
      %2394 = sbr.rel (0) target = $region65
    $region64: #{rnn_forward.1} parent=1 // pred_region
      %2395 = dma.done [#allocation8], 128
    $region65: #{rnn_forward.1} parent=1 // pred_fallthru
      _
    %2396 = vsyncpa [#allocation6], 1
    %2397 = vsyncpa [#allocation8], 1

</llo_original>
